<compile_context>
chip_gen: v7x
topology: tpu7x:2x2x1
jax: 0.10.0
libtpu: 0.0.40
codegen_flags: <defaults>
</compile_context>

<pallas_src>
import functools

import jax
import jax.numpy as jnp
from jax.experimental import pallas as pl
from jax.experimental.pallas import tpu as pltpu


def _hardswish(x):
    return x * jnp.clip(x + 3.0, 0.0, 6.0) * (1.0 / 6.0)


def _hardsigmoid(x):
    return jnp.clip(x + 3.0, 0.0, 6.0) * (1.0 / 6.0)


# ----------------------------------------------------------------------------
# The single fused kernel (one grid step == B images)
# ----------------------------------------------------------------------------
def _fused_mbn_kernel(
    col_ref,        # (1, K_stem, L) bf16  stem im2col in padded-output layout, L=B*SPP_AL
    mask_ref,       # (1, L)         f32   1 at valid interior lanes, 0 at pad/align lanes
    w_stem_ref,     # (C_stem, K_stem) bf16
    b_stem_ref,     # (C_stem, 1)      f32
    w_exp_ref,      # (C_exp, C_stem)  bf16
    b_exp_ref,      # (C_exp, 1)       f32
    w_dw_ref,       # (9, C_exp, 1)    f32   per-tap, per-channel depthwise weights
    b_dw_ref,       # (C_exp, 1)       f32
    w_se1_ref,      # (C_se, C_exp)    f32
    b_se1_ref,      # (C_se, 1)        f32
    w_se2_ref,      # (C_exp, C_se)    f32
    b_se2_ref,      # (C_exp, 1)       f32
    w_proj_ref,     # (C_exp, C_exp)   f32
    b_proj_ref,     # (C_exp, 1)       f32
    w_head_ref,     # (NC, C_exp)      f32
    b_head_ref,     # (NC, 1)          f32
    o_ref,          # (1, NC, B)       f32
    dw_pad_ref,     # VMEM scratch (C_exp, margin + L + margin) f32
    *, ow, spp_al, bsz, sp, margin,
):
    f32, bf16 = jnp.float32, jnp.bfloat16
    lanes = bsz * spp_al
    rw = ow + 2                                  # padded row width of one image

    mask = mask_ref[...]                         # (1, lanes)

    # --- stem 3x3/s2 conv (im2col matmul on the MXU) + hardswish ---
    y = jnp.dot(w_stem_ref[...], col_ref[0], preferred_element_type=f32)
    y = _hardswish(y + b_stem_ref[...])          # (C_stem, lanes)

    # --- expand 1x1 + ReLU; zero border/alignment lanes so depthwise taps read zeros ---
    y = jnp.dot(w_exp_ref[...], y.astype(bf16), preferred_element_type=f32)
    y = jnp.maximum(y + b_exp_ref[...], 0.0) * mask        # (C_exp, lanes)
    c_exp = y.shape[0]

    # --- depthwise 3x3/s1 + ReLU on the padded layout --------------------------------
    # Taps are constant lane-shifted slices of a zero-margined VMEM scratch; with the
    # (OH+2)x(OW+2) per-image layout no per-tap boundary masks are needed.  The narrow
    # margins are re-zeroed every step (cheap; safe under a megacore-split grid).
    dw_pad_ref[:, pl.ds(0, margin)] = jnp.zeros((c_exp, margin), f32)
    dw_pad_ref[:, pl.ds(margin + lanes, margin)] = jnp.zeros((c_exp, margin), f32)
    dw_pad_ref[:, pl.ds(margin, lanes)] = y

    acc = None
    t = 0
    for di in range(3):
        for dj in range(3):
            off = (di - 1) * rw + (dj - 1)
            tap = dw_pad_ref[:, pl.ds(margin + off, lanes)]         # (C_exp, lanes)
            term = tap * w_dw_ref[t]                                # (C_exp, 1) bcast
            # bias folded into the first tap (no explicit zero-init pass)
            acc = term + b_dw_ref[...] if acc is None else acc + term
            t += 1
    y = jnp.maximum(acc, 0.0) * mask             # mask kills garbage at border lanes

    # --- per-image global average pool (aligned static lane slices) ---
    pooled = jnp.concatenate(
        [jnp.sum(y[:, i * spp_al:(i + 1) * spp_al], axis=1, keepdims=True)
         for i in range(bsz)],
        axis=1) * (1.0 / sp)                     # (C_exp, B)

    # --- squeeze-and-excite on the pooled features ---
    h = jnp.maximum(
        jnp.dot(w_se1_ref[...], pooled, preferred_element_type=f32) + b_se1_ref[...],
        0.0)                                     # (C_se, B)
    s = _hardsigmoid(
        jnp.dot(w_se2_ref[...], h, preferred_element_type=f32) + b_se2_ref[...])
                                                 # (C_exp, B)

    # --- project 1x1 + AdaptiveAvgPool commute (both linear): pool first, project the
    #     tiny (C_exp, B) matrix instead of the full feature map ---
    feat = jnp.dot(w_proj_ref[...], pooled * s, preferred_element_type=f32) \
        + b_proj_ref[...]                        # (C_exp, B)

    # --- classifier head Linear(C_exp, num_classes) ---
    logits_t = jnp.dot(w_head_ref[...], feat, preferred_element_type=f32) \
        + b_head_ref[...]                        # (NC, B)
    o_ref[0] = logits_t.astype(o_ref.dtype)


# ----------------------------------------------------------------------------
# Plain-JAX glue (layout plumbing only, runs once in XLA)
# ----------------------------------------------------------------------------
def _im2col_stem(x, k=3, stride=2, pad=1):
    """x: (N, C, H, W) -> (N, C*k*k, OH, OW), feature order c-major / (di,dj)-minor."""
    N, C, H, W = x.shape
    xp = jnp.pad(x, ((0, 0), (0, 0), (pad, pad), (pad, pad)))
    OH = (H + 2 * pad - k) // stride + 1
    OW = (W + 2 * pad - k) // stride + 1
    taps = []
    for di in range(k):
        for dj in range(k):
            taps.append(xp[:, :, di:di + stride * OH:stride, dj:dj + stride * OW:stride])
    col = jnp.stack(taps, axis=2).reshape(N, C * k * k, OH, OW)
    return col, OH, OW


def _full_spec(*shape):
    nd = len(shape)
    return pl.BlockSpec(shape, lambda g, _nd=nd: (0,) * _nd)


# ----------------------------------------------------------------------------
# Model with deterministic synthetic parameters (shapes follow MobileNetV3 blocks)
# ----------------------------------------------------------------------------
class MobileNetV3LCPallas:
    C_IN, C_STEM, C_EXP, C_SE = 3, 16, 72, 24

    def __init__(self, key, num_classes=2, images_per_step=2):
        self.num_classes = num_classes
        self.images_per_step = images_per_step
        C_in, C_stem, C_exp, C_se = self.C_IN, self.C_STEM, self.C_EXP, self.C_SE
        nc = num_classes
        ks = jax.random.split(key, 16)
        bf16 = jnp.bfloat16

        def rnd(k, shape, scale=0.1, dtype=jnp.float32):
            return (scale * jax.random.normal(k, shape, jnp.float32)).astype(dtype)

        # stem: Conv2d(3, 16, 3, s=2, p=1), BN folded, hardswish
        self.w_stem = rnd(ks[0], (C_stem, C_in * 9), dtype=bf16)      # (16, 27)
        self.b_stem = rnd(ks[1], (C_stem, 1))
        # inverted residual: expand 1x1 (ReLU) -> dw 3x3 (ReLU) -> SE -> project 1x1
        self.w_exp = rnd(ks[2], (C_exp, C_stem), dtype=bf16)          # (72, 16)
        self.b_exp = rnd(ks[3], (C_exp, 1))
        self.w_dw = rnd(ks[4], (C_exp, 9)).T.reshape(9, C_exp, 1)     # (9, 72, 1)
        self.b_dw = rnd(ks[5], (C_exp, 1))
        self.w_se1 = rnd(ks[6], (C_se, C_exp))                        # (24, 72)
        self.b_se1 = rnd(ks[7], (C_se, 1))
        self.w_se2 = rnd(ks[8], (C_exp, C_se))                        # (72, 24)
        self.b_se2 = rnd(ks[9], (C_exp, 1))
        self.w_proj = rnd(ks[10], (C_exp, C_exp))                     # (72, 72) f32
        self.b_proj = rnd(ks[11], (C_exp, 1))
        # classifier head Linear(72, num_classes), natural (out, in) orientation
        self.w_head = rnd(ks[12], (nc, C_exp))                        # (nc, 72)
        self.b_head = rnd(ks[13], (nc, 1))

    def __call__(self, x):
        N = x.shape[0]
        C_stem, C_exp, C_se, nc = self.C_STEM, self.C_EXP, self.C_SE, self.num_classes

        col4, OH, OW = _im2col_stem(x, k=3, stride=2, pad=1)          # (N, 27, OH, OW)
        sp = OH * OW
        spp = (OH + 2) * (OW + 2)
        spp_al = ((spp + 127) // 128) * 128        # lane-aligned per-image chunk
        K = col4.shape[1]

        B = self.images_per_step
        if N % B != 0:
            B = 1                                  # TODO(synk): handle ragged batches
        G = N // B
        L = B * spp_al

        # Stem im2col in padded-output layout (border output positions = zero columns),
        # lane-padded per image and grouped B images wide; shipped as bf16.
        colp = jnp.pad(col4, ((0, 0), (0, 0), (1, 1), (1, 1))).reshape(N, K, spp)
        colp = jnp.pad(colp, ((0, 0), (0, 0), (0, spp_al - spp)))
        colp = colp.reshape(G, B, K, spp_al).transpose(0, 2, 1, 3).reshape(G, K, L)
        colp = colp.astype(jnp.bfloat16)

        # 1 at valid interior output lanes, 0 at padded-border / alignment lanes.
        mrow = jnp.zeros((OH + 2, OW + 2), jnp.float32).at[1:OH + 1, 1:OW + 1].set(1.0)
        mrow = jnp.pad(mrow.reshape(spp), (0, spp_al - spp))
        mask = jnp.tile(mrow, (B,)).reshape(1, L)

        margin = OW + 8                            # >= OW + 3: every tap slice in-bounds

        out = pl.pallas_call(
            functools.partial(_fused_mbn_kernel,
                              ow=OW, spp_al=spp_al, bsz=B, sp=sp, margin=margin),
            out_shape=jax.ShapeDtypeStruct((G, nc, B), jnp.float32),
            grid=(G,),
            in_specs=[
                pl.BlockSpec((1, K, L), lambda g: (g, 0, 0)),         # per-group col
                _full_spec(1, L),                                     # border mask
                _full_spec(C_stem, K), _full_spec(C_stem, 1),         # stem
                _full_spec(C_exp, C_stem), _full_spec(C_exp, 1),      # expand
                _full_spec(9, C_exp, 1),   _full_spec(C_exp, 1),      # depthwise
                _full_spec(C_se, C_exp),   _full_spec(C_se, 1),       # SE fc1
                _full_spec(C_exp, C_se),   _full_spec(C_exp, 1),      # SE fc2
                _full_spec(C_exp, C_exp),  _full_spec(C_exp, 1),      # project
                _full_spec(nc, C_exp),     _full_spec(nc, 1),         # head
            ],
            out_specs=pl.BlockSpec((1, nc, B), lambda g: (g, 0, 0)),
            scratch_shapes=[pltpu.VMEM((C_exp, 2 * margin + L), jnp.float32)],
            compiler_params=pltpu.CompilerParams(
                dimension_semantics=("parallel",),
                vmem_limit_bytes=32 * 1024 * 1024),
        )(colp, mask, self.w_stem, self.b_stem, self.w_exp, self.b_exp,
          self.w_dw, self.b_dw, self.w_se1, self.b_se1, self.w_se2, self.b_se2,
          self.w_proj, self.b_proj, self.w_head, self.b_head)

        return jnp.transpose(out, (0, 2, 1)).reshape(N, nc)            # (N, num_classes)


# ----------------------------------------------------------------------------
# Plain-JAX reference forward (numerical cross-check of the fused kernel)
# ----------------------------------------------------------------------------
def _reference_forward(m, x):
    f32 = jnp.float32
    N = x.shape[0]
    C_exp = m.C_EXP
    col4, OH, OW = _im2col_stem(x, k=3, stride=2, pad=1)
    sp = OH * OW
    col = col4.reshape(N, col4.shape[1], sp)
    col = col.astype(jnp.bfloat16).astype(f32)          # kernel ships col as bf16
    y = jnp.einsum("ok,nks->nos", m.w_stem.astype(f32), col) + m.b_stem[None]
    y = y * jnp.clip(y + 3.0, 0.0, 6.0) / 6.0
    y = y.astype(jnp.bfloat16).astype(f32)               # kernel feeds expand in bf16
    y = jnp.einsum("oc,ncs->nos", m.w_exp.astype(f32), y) + m.b_exp[None]
    y = jnp.maximum(y, 0.0)
    ysp = jnp.pad(y.reshape(N, C_exp, OH, OW), ((0, 0), (0, 0), (1, 1), (1, 1)))
    acc = m.b_dw.reshape(1, C_exp, 1, 1)
    t = 0
    for di in range(3):
        for dj in range(3):
            acc = acc + ysp[:, :, di:di + OH, dj:dj + OW] * m.w_dw[t].reshape(1, C_exp, 1, 1)
            t += 1
    y = jnp.maximum(acc, 0.0).reshape(N, C_exp, sp)
    pooled = jnp.mean(y, axis=2)                                        # (N, C_exp)
    h = jnp.maximum(pooled @ m.w_se1.T + m.b_se1[:, 0][None], 0.0)      # (N, C_se)
    s = jnp.clip(h @ m.w_se2.T + m.b_se2[:, 0][None] + 3.0, 0.0, 6.0) / 6.0
    y = y * s[:, :, None]
    y = jnp.einsum("oc,ncs->nos", m.w_proj, y) + m.b_proj[None]         # project THEN pool
    pooled = jnp.mean(y, axis=2)                                        # (N, C_exp)
    return pooled @ m.w_head.T + m.b_head[:, 0][None]                   # (N, nc)


if __name__ == "__main__":
    key = jax.random.PRNGKey(0)
    k_param, k_x = jax.random.split(key)
    model = MobileNetV3LCPallas(k_param, num_classes=2, images_per_step=2)

    x = jax.random.normal(k_x, (4, 3, 16, 16), jnp.float32)     # NCHW, like PyTorch
    logits = jax.block_until_ready(jax.jit(model.__call__)(x))

    assert logits.shape == (4, 2), logits.shape
    assert bool(jnp.all(jnp.isfinite(logits))), "non-finite output"

    ref = _reference_forward(model, x)
    max_err = float(jnp.max(jnp.abs(logits - ref)))
    assert bool(jnp.allclose(logits, ref, rtol=5e-2, atol=5e-2)), max_err

    print("KERNEL_OK")
</pallas_src>

<mosaic_0001>
module attributes {stable_mosaic.version = 11 : i64} {
  func.func @_fused_mbn_kernel(%arg0: i32, %arg1: memref<1x27x256xbf16, #tpu.memory_space<vmem>>, %arg2: memref<1x256xf32, #tpu.memory_space<vmem>>, %arg3: memref<16x27xbf16, #tpu.memory_space<vmem>>, %arg4: memref<16x1xf32, #tpu.memory_space<vmem>>, %arg5: memref<72x16xbf16, #tpu.memory_space<vmem>>, %arg6: memref<72x1xf32, #tpu.memory_space<vmem>>, %arg7: memref<9x72x1xf32, #tpu.memory_space<vmem>>, %arg8: memref<72x1xf32, #tpu.memory_space<vmem>>, %arg9: memref<24x72xf32, #tpu.memory_space<vmem>>, %arg10: memref<24x1xf32, #tpu.memory_space<vmem>>, %arg11: memref<72x24xf32, #tpu.memory_space<vmem>>, %arg12: memref<72x1xf32, #tpu.memory_space<vmem>>, %arg13: memref<72x72xf32, #tpu.memory_space<vmem>>, %arg14: memref<72x1xf32, #tpu.memory_space<vmem>>, %arg15: memref<2x72xf32, #tpu.memory_space<vmem>>, %arg16: memref<2x1xf32, #tpu.memory_space<vmem>>, %arg17: memref<1x2x2xf32, #tpu.memory_space<vmem>>, %arg18: memref<72x288xf32, #tpu.memory_space<vmem>>) attributes {dimension_semantics = [#tpu.dimension_semantics<parallel>], iteration_bounds = array<i64: 2>, scalar_prefetch = 0 : i64, scratch_operands = 1 : i64, tpu.core_type = #tpu.core_type<tc>, window_params = [{transform_indices = @transform_0, window_bounds = array<i64: 1, 27, 256>}, {pipeline_mode = #tpu.pipeline_mode<synchronous>, transform_indices = @transform_1, window_bounds = array<i64: 1, 256>}, {pipeline_mode = #tpu.pipeline_mode<synchronous>, transform_indices = @transform_2, window_bounds = array<i64: 16, 27>}, {pipeline_mode = #tpu.pipeline_mode<synchronous>, transform_indices = @transform_3, window_bounds = array<i64: 16, 1>}, {pipeline_mode = #tpu.pipeline_mode<synchronous>, transform_indices = @transform_4, window_bounds = array<i64: 72, 16>}, {pipeline_mode = #tpu.pipeline_mode<synchronous>, transform_indices = @transform_5, window_bounds = array<i64: 72, 1>}, {pipeline_mode = #tpu.pipeline_mode<synchronous>, transform_indices = @transform_6, window_bounds = array<i64: 9, 72, 1>}, {pipeline_mode = #tpu.pipeline_mode<synchronous>, transform_indices = @transform_7, window_bounds = array<i64: 72, 1>}, {pipeline_mode = #tpu.pipeline_mode<synchronous>, transform_indices = @transform_8, window_bounds = array<i64: 24, 72>}, {pipeline_mode = #tpu.pipeline_mode<synchronous>, transform_indices = @transform_9, window_bounds = array<i64: 24, 1>}, {pipeline_mode = #tpu.pipeline_mode<synchronous>, transform_indices = @transform_10, window_bounds = array<i64: 72, 24>}, {pipeline_mode = #tpu.pipeline_mode<synchronous>, transform_indices = @transform_11, window_bounds = array<i64: 72, 1>}, {pipeline_mode = #tpu.pipeline_mode<synchronous>, transform_indices = @transform_12, window_bounds = array<i64: 72, 72>}, {pipeline_mode = #tpu.pipeline_mode<synchronous>, transform_indices = @transform_13, window_bounds = array<i64: 72, 1>}, {pipeline_mode = #tpu.pipeline_mode<synchronous>, transform_indices = @transform_14, window_bounds = array<i64: 2, 72>}, {pipeline_mode = #tpu.pipeline_mode<synchronous>, transform_indices = @transform_15, window_bounds = array<i64: 2, 1>}, {transform_indices = @transform_16, window_bounds = array<i64: 1, 2, 2>}]} {
    %c0 = arith.constant 0 : index
    %c0_0 = arith.constant 0 : index
    %0 = vector.load %arg2[%c0, %c0_0] : memref<1x256xf32, #tpu.memory_space<vmem>>, vector<1x256xf32>
    %c0_1 = arith.constant 0 : index
    %c0_2 = arith.constant 0 : index
    %1 = vector.load %arg3[%c0_1, %c0_2] : memref<16x27xbf16, #tpu.memory_space<vmem>>, vector<16x27xbf16>
    %c0_3 = arith.constant 0 : index
    %c0_4 = arith.constant 0 : index
    %c0_5 = arith.constant 0 : index
    %2 = vector.load %arg1[%c0_3, %c0_4, %c0_5] : memref<1x27x256xbf16, #tpu.memory_space<vmem>>, vector<1x27x256xbf16>
    %3 = vector.shape_cast %2 : vector<1x27x256xbf16> to vector<27x256xbf16>
    %cst = arith.constant dense<0.000000e+00> : vector<16x256xf32>
    %4 = tpu.matmul %1, %3, %cst {dimension_numbers = #tpu.dot_dimension_numbers<[1], [0], [0], [1], [0, 0, 1, 1], [], []>} : vector<16x27xbf16>, vector<27x256xbf16>, vector<16x256xf32> -> vector<16x256xf32>
    %c0_6 = arith.constant 0 : index
    %c0_7 = arith.constant 0 : index
    %5 = vector.load %arg4[%c0_6, %c0_7] : memref<16x1xf32, #tpu.memory_space<vmem>>, vector<16x1xf32>
    %6 = vector.broadcast %5 : vector<16x1xf32> to vector<16x256xf32>
    %7 = arith.addf %4, %6 : vector<16x256xf32>
    %cst_8 = arith.constant 3.000000e+00 : f32
    %8 = vector.broadcast %cst_8 : f32 to vector<16x256xf32>
    %9 = arith.addf %7, %8 : vector<16x256xf32>
    %cst_9 = arith.constant 0.000000e+00 : f32
    %cst_10 = arith.constant 6.000000e+00 : f32
    %10 = vector.broadcast %cst_9 : f32 to vector<16x256xf32>
    %11 = arith.maximumf %10, %9 : vector<16x256xf32>
    %12 = vector.broadcast %cst_10 : f32 to vector<16x256xf32>
    %13 = arith.minimumf %12, %11 : vector<16x256xf32>
    %14 = arith.mulf %7, %13 : vector<16x256xf32>
    %cst_11 = arith.constant 0.166666672 : f32
    %15 = vector.broadcast %cst_11 : f32 to vector<16x256xf32>
    %16 = arith.mulf %14, %15 : vector<16x256xf32>
    %c0_12 = arith.constant 0 : index
    %c0_13 = arith.constant 0 : index
    %17 = vector.load %arg5[%c0_12, %c0_13] : memref<72x16xbf16, #tpu.memory_space<vmem>>, vector<72x16xbf16>
    %18 = arith.truncf %16 : vector<16x256xf32> to vector<16x256xbf16>
    %cst_14 = arith.constant dense<0.000000e+00> : vector<72x256xf32>
    %19 = tpu.matmul %17, %18, %cst_14 {dimension_numbers = #tpu.dot_dimension_numbers<[1], [0], [0], [1], [0, 0, 1, 1], [], []>} : vector<72x16xbf16>, vector<16x256xbf16>, vector<72x256xf32> -> vector<72x256xf32>
    %c0_15 = arith.constant 0 : index
    %c0_16 = arith.constant 0 : index
    %20 = vector.load %arg6[%c0_15, %c0_16] : memref<72x1xf32, #tpu.memory_space<vmem>>, vector<72x1xf32>
    %21 = vector.broadcast %20 : vector<72x1xf32> to vector<72x256xf32>
    %22 = arith.addf %19, %21 : vector<72x256xf32>
    %cst_17 = arith.constant 0.000000e+00 : f32
    %23 = vector.broadcast %cst_17 : f32 to vector<72x256xf32>
    %24 = arith.maximumf %22, %23 : vector<72x256xf32>
    %25 = vector.broadcast %0 : vector<1x256xf32> to vector<72x256xf32>
    %26 = arith.mulf %24, %25 : vector<72x256xf32>
    %cst_18 = arith.constant 0.000000e+00 : f32
    %27 = vector.broadcast %cst_18 : f32 to vector<72x16xf32>
    %c0_19 = arith.constant 0 : index
    %c0_20 = arith.constant 0 : index
    %28 = vector.load %arg18[%c0_19, %c0_20] : memref<72x288xf32, #tpu.memory_space<vmem>>, vector<72x16xf32>
    tpu.vector_store %arg18[%c0_19, %c0_20], %27 {strides = array<i32>} : memref<72x288xf32, #tpu.memory_space<vmem>>, vector<72x16xf32>,
    %cst_21 = arith.constant 0.000000e+00 : f32
    %29 = vector.broadcast %cst_21 : f32 to vector<72x16xf32>
    %c0_22 = arith.constant 0 : index
    %c272 = arith.constant 272 : index
    %30 = vector.load %arg18[%c0_22, %c272] : memref<72x288xf32, #tpu.memory_space<vmem>>, vector<72x16xf32>
    tpu.vector_store %arg18[%c0_22, %c272], %29 {strides = array<i32>} : memref<72x288xf32, #tpu.memory_space<vmem>>, vector<72x16xf32>,
    %c0_23 = arith.constant 0 : index
    %c16 = arith.constant 16 : index
    %31 = vector.load %arg18[%c0_23, %c16] : memref<72x288xf32, #tpu.memory_space<vmem>>, vector<72x256xf32>
    tpu.vector_store %arg18[%c0_23, %c16], %26 {strides = array<i32>} : memref<72x288xf32, #tpu.memory_space<vmem>>, vector<72x256xf32>,
    %c0_24 = arith.constant 0 : index
    %c5 = arith.constant 5 : index
    %32 = vector.load %arg18[%c0_24, %c5] : memref<72x288xf32, #tpu.memory_space<vmem>>, vector<72x256xf32>
    %c0_25 = arith.constant 0 : index
    %c0_26 = arith.constant 0 : index
    %c0_27 = arith.constant 0 : index
    %33 = vector.load %arg7[%c0_25, %c0_26, %c0_27] : memref<9x72x1xf32, #tpu.memory_space<vmem>>, vector<1x72x1xf32>
    %34 = vector.shape_cast %33 : vector<1x72x1xf32> to vector<72x1xf32>
    %35 = vector.broadcast %34 : vector<72x1xf32> to vector<72x256xf32>
    %36 = arith.mulf %32, %35 : vector<72x256xf32>
    %c0_28 = arith.constant 0 : index
    %c0_29 = arith.constant 0 : index
    %37 = vector.load %arg8[%c0_28, %c0_29] : memref<72x1xf32, #tpu.memory_space<vmem>>, vector<72x1xf32>
    %38 = vector.broadcast %37 : vector<72x1xf32> to vector<72x256xf32>
    %39 = arith.addf %36, %38 : vector<72x256xf32>
    %c0_30 = arith.constant 0 : index
    %c6 = arith.constant 6 : index
    %40 = vector.load %arg18[%c0_30, %c6] : memref<72x288xf32, #tpu.memory_space<vmem>>, vector<72x256xf32>
    %c1 = arith.constant 1 : index
    %c0_31 = arith.constant 0 : index
    %c0_32 = arith.constant 0 : index
    %41 = vector.load %arg7[%c1, %c0_31, %c0_32] : memref<9x72x1xf32, #tpu.memory_space<vmem>>, vector<1x72x1xf32>
    %42 = vector.shape_cast %41 : vector<1x72x1xf32> to vector<72x1xf32>
    %43 = vector.broadcast %42 : vector<72x1xf32> to vector<72x256xf32>
    %44 = arith.mulf %40, %43 : vector<72x256xf32>
    %45 = arith.addf %39, %44 : vector<72x256xf32>
    %c0_33 = arith.constant 0 : index
    %c7 = arith.constant 7 : index
    %46 = vector.load %arg18[%c0_33, %c7] : memref<72x288xf32, #tpu.memory_space<vmem>>, vector<72x256xf32>
    %c2 = arith.constant 2 : index
    %c0_34 = arith.constant 0 : index
    %c0_35 = arith.constant 0 : index
    %47 = vector.load %arg7[%c2, %c0_34, %c0_35] : memref<9x72x1xf32, #tpu.memory_space<vmem>>, vector<1x72x1xf32>
    %48 = vector.shape_cast %47 : vector<1x72x1xf32> to vector<72x1xf32>
    %49 = vector.broadcast %48 : vector<72x1xf32> to vector<72x256xf32>
    %50 = arith.mulf %46, %49 : vector<72x256xf32>
    %51 = arith.addf %45, %50 : vector<72x256xf32>
    %c0_36 = arith.constant 0 : index
    %c15 = arith.constant 15 : index
    %52 = vector.load %arg18[%c0_36, %c15] : memref<72x288xf32, #tpu.memory_space<vmem>>, vector<72x256xf32>
    %c3 = arith.constant 3 : index
    %c0_37 = arith.constant 0 : index
    %c0_38 = arith.constant 0 : index
    %53 = vector.load %arg7[%c3, %c0_37, %c0_38] : memref<9x72x1xf32, #tpu.memory_space<vmem>>, vector<1x72x1xf32>
    %54 = vector.shape_cast %53 : vector<1x72x1xf32> to vector<72x1xf32>
    %55 = vector.broadcast %54 : vector<72x1xf32> to vector<72x256xf32>
    %56 = arith.mulf %52, %55 : vector<72x256xf32>
    %57 = arith.addf %51, %56 : vector<72x256xf32>
    %c0_39 = arith.constant 0 : index
    %c16_40 = arith.constant 16 : index
    %58 = vector.load %arg18[%c0_39, %c16_40] : memref<72x288xf32, #tpu.memory_space<vmem>>, vector<72x256xf32>
    %c4 = arith.constant 4 : index
    %c0_41 = arith.constant 0 : index
    %c0_42 = arith.constant 0 : index
    %59 = vector.load %arg7[%c4, %c0_41, %c0_42] : memref<9x72x1xf32, #tpu.memory_space<vmem>>, vector<1x72x1xf32>
    %60 = vector.shape_cast %59 : vector<1x72x1xf32> to vector<72x1xf32>
    %61 = vector.broadcast %60 : vector<72x1xf32> to vector<72x256xf32>
    %62 = arith.mulf %58, %61 : vector<72x256xf32>
    %63 = arith.addf %57, %62 : vector<72x256xf32>
    %c0_43 = arith.constant 0 : index
    %c17 = arith.constant 17 : index
    %64 = vector.load %arg18[%c0_43, %c17] : memref<72x288xf32, #tpu.memory_space<vmem>>, vector<72x256xf32>
    %c5_44 = arith.constant 5 : index
    %c0_45 = arith.constant 0 : index
    %c0_46 = arith.constant 0 : index
    %65 = vector.load %arg7[%c5_44, %c0_45, %c0_46] : memref<9x72x1xf32, #tpu.memory_space<vmem>>, vector<1x72x1xf32>
    %66 = vector.shape_cast %65 : vector<1x72x1xf32> to vector<72x1xf32>
    %67 = vector.broadcast %66 : vector<72x1xf32> to vector<72x256xf32>
    %68 = arith.mulf %64, %67 : vector<72x256xf32>
    %69 = arith.addf %63, %68 : vector<72x256xf32>
    %c0_47 = arith.constant 0 : index
    %c25 = arith.constant 25 : index
    %70 = vector.load %arg18[%c0_47, %c25] : memref<72x288xf32, #tpu.memory_space<vmem>>, vector<72x256xf32>
    %c6_48 = arith.constant 6 : index
    %c0_49 = arith.constant 0 : index
    %c0_50 = arith.constant 0 : index
    %71 = vector.load %arg7[%c6_48, %c0_49, %c0_50] : memref<9x72x1xf32, #tpu.memory_space<vmem>>, vector<1x72x1xf32>
    %72 = vector.shape_cast %71 : vector<1x72x1xf32> to vector<72x1xf32>
    %73 = vector.broadcast %72 : vector<72x1xf32> to vector<72x256xf32>
    %74 = arith.mulf %70, %73 : vector<72x256xf32>
    %75 = arith.addf %69, %74 : vector<72x256xf32>
    %c0_51 = arith.constant 0 : index
    %c26 = arith.constant 26 : index
    %76 = vector.load %arg18[%c0_51, %c26] : memref<72x288xf32, #tpu.memory_space<vmem>>, vector<72x256xf32>
    %c7_52 = arith.constant 7 : index
    %c0_53 = arith.constant 0 : index
    %c0_54 = arith.constant 0 : index
    %77 = vector.load %arg7[%c7_52, %c0_53, %c0_54] : memref<9x72x1xf32, #tpu.memory_space<vmem>>, vector<1x72x1xf32>
    %78 = vector.shape_cast %77 : vector<1x72x1xf32> to vector<72x1xf32>
    %79 = vector.broadcast %78 : vector<72x1xf32> to vector<72x256xf32>
    %80 = arith.mulf %76, %79 : vector<72x256xf32>
    %81 = arith.addf %75, %80 : vector<72x256xf32>
    %c0_55 = arith.constant 0 : index
    %c27 = arith.constant 27 : index
    %82 = vector.load %arg18[%c0_55, %c27] : memref<72x288xf32, #tpu.memory_space<vmem>>, vector<72x256xf32>
    %c8 = arith.constant 8 : index
    %c0_56 = arith.constant 0 : index
    %c0_57 = arith.constant 0 : index
    %83 = vector.load %arg7[%c8, %c0_56, %c0_57] : memref<9x72x1xf32, #tpu.memory_space<vmem>>, vector<1x72x1xf32>
    %84 = vector.shape_cast %83 : vector<1x72x1xf32> to vector<72x1xf32>
    %85 = vector.broadcast %84 : vector<72x1xf32> to vector<72x256xf32>
    %86 = arith.mulf %82, %85 : vector<72x256xf32>
    %87 = arith.addf %81, %86 : vector<72x256xf32>
    %cst_58 = arith.constant 0.000000e+00 : f32
    %88 = vector.broadcast %cst_58 : f32 to vector<72x256xf32>
    %89 = arith.maximumf %87, %88 : vector<72x256xf32>
    %90 = vector.broadcast %0 : vector<1x256xf32> to vector<72x256xf32>
    %91 = arith.mulf %89, %90 : vector<72x256xf32>
    %92 = vector.extract_strided_slice %91 {offsets = [0, 0], sizes = [72, 128], strides = [1, 1]} : vector<72x256xf32> to vector<72x128xf32>
    %cst_59 = arith.constant dense<0.000000e+00> : vector<72xf32>
    %93 = vector.multi_reduction <add>, %92, %cst_59 [1] : vector<72x128xf32> to vector<72xf32>
    %94 = vector.shape_cast %93 : vector<72xf32> to vector<72x1xf32>
    %95 = vector.extract_strided_slice %91 {offsets = [0, 128], sizes = [72, 128], strides = [1, 1]} : vector<72x256xf32> to vector<72x128xf32>
    %cst_60 = arith.constant dense<0.000000e+00> : vector<72xf32>
    %96 = vector.multi_reduction <add>, %95, %cst_60 [1] : vector<72x128xf32> to vector<72xf32>
    %97 = vector.shape_cast %96 : vector<72xf32> to vector<72x1xf32>
    %98 = tpu.concatenate %94, %97 in 1 : vector<72x1xf32>, vector<72x1xf32> -> vector<72x2xf32>
    %cst_61 = arith.constant 1.562500e-02 : f32
    %99 = vector.broadcast %cst_61 : f32 to vector<72x2xf32>
    %100 = arith.mulf %98, %99 : vector<72x2xf32>
    %c0_62 = arith.constant 0 : index
    %c0_63 = arith.constant 0 : index
    %101 = vector.load %arg9[%c0_62, %c0_63] : memref<24x72xf32, #tpu.memory_space<vmem>>, vector<24x72xf32>
    %cst_64 = arith.constant dense<0.000000e+00> : vector<24x2xf32>
    %102 = tpu.matmul %101, %100, %cst_64 {dimension_numbers = #tpu.dot_dimension_numbers<[1], [0], [0], [1], [0, 0, 1, 1], [], []>} : vector<24x72xf32>, vector<72x2xf32>, vector<24x2xf32> -> vector<24x2xf32>
    %c0_65 = arith.constant 0 : index
    %c0_66 = arith.constant 0 : index
    %103 = vector.load %arg10[%c0_65, %c0_66] : memref<24x1xf32, #tpu.memory_space<vmem>>, vector<24x1xf32>
    %104 = vector.broadcast %103 : vector<24x1xf32> to vector<24x2xf32>
    %105 = arith.addf %102, %104 : vector<24x2xf32>
    %cst_67 = arith.constant 0.000000e+00 : f32
    %106 = vector.broadcast %cst_67 : f32 to vector<24x2xf32>
    %107 = arith.maximumf %105, %106 : vector<24x2xf32>
    %c0_68 = arith.constant 0 : index
    %c0_69 = arith.constant 0 : index
    %108 = vector.load %arg11[%c0_68, %c0_69] : memref<72x24xf32, #tpu.memory_space<vmem>>, vector<72x24xf32>
    %cst_70 = arith.constant dense<0.000000e+00> : vector<72x2xf32>
    %109 = tpu.matmul %108, %107, %cst_70 {dimension_numbers = #tpu.dot_dimension_numbers<[1], [0], [0], [1], [0, 0, 1, 1], [], []>} : vector<72x24xf32>, vector<24x2xf32>, vector<72x2xf32> -> vector<72x2xf32>
    %c0_71 = arith.constant 0 : index
    %c0_72 = arith.constant 0 : index
    %110 = vector.load %arg12[%c0_71, %c0_72] : memref<72x1xf32, #tpu.memory_space<vmem>>, vector<72x1xf32>
    %111 = vector.broadcast %110 : vector<72x1xf32> to vector<72x2xf32>
    %112 = arith.addf %109, %111 : vector<72x2xf32>
    %cst_73 = arith.constant 3.000000e+00 : f32
    %113 = vector.broadcast %cst_73 : f32 to vector<72x2xf32>
    %114 = arith.addf %112, %113 : vector<72x2xf32>
    %cst_74 = arith.constant 0.000000e+00 : f32
    %cst_75 = arith.constant 6.000000e+00 : f32
    %115 = vector.broadcast %cst_74 : f32 to vector<72x2xf32>
    %116 = arith.maximumf %115, %114 : vector<72x2xf32>
    %117 = vector.broadcast %cst_75 : f32 to vector<72x2xf32>
    %118 = arith.minimumf %117, %116 : vector<72x2xf32>
    %cst_76 = arith.constant 0.166666672 : f32
    %119 = vector.broadcast %cst_76 : f32 to vector<72x2xf32>
    %120 = arith.mulf %118, %119 : vector<72x2xf32>
    %c0_77 = arith.constant 0 : index
    %c0_78 = arith.constant 0 : index
    %121 = vector.load %arg13[%c0_77, %c0_78] : memref<72x72xf32, #tpu.memory_space<vmem>>, vector<72x72xf32>
    %122 = arith.mulf %100, %120 : vector<72x2xf32>
    %cst_79 = arith.constant dense<0.000000e+00> : vector<72x2xf32>
    %123 = tpu.matmul %121, %122, %cst_79 {dimension_numbers = #tpu.dot_dimension_numbers<[1], [0], [0], [1], [0, 0, 1, 1], [], []>} : vector<72x72xf32>, vector<72x2xf32>, vector<72x2xf32> -> vector<72x2xf32>
    %c0_80 = arith.constant 0 : index
    %c0_81 = arith.constant 0 : index
    %124 = vector.load %arg14[%c0_80, %c0_81] : memref<72x1xf32, #tpu.memory_space<vmem>>, vector<72x1xf32>
    %125 = vector.broadcast %124 : vector<72x1xf32> to vector<72x2xf32>
    %126 = arith.addf %123, %125 : vector<72x2xf32>
    %c0_82 = arith.constant 0 : index
    %c0_83 = arith.constant 0 : index
    %127 = vector.load %arg15[%c0_82, %c0_83] : memref<2x72xf32, #tpu.memory_space<vmem>>, vector<2x72xf32>
    %cst_84 = arith.constant dense<0.000000e+00> : vector<2x2xf32>
    %128 = tpu.matmul %127, %126, %cst_84 {dimension_numbers = #tpu.dot_dimension_numbers<[1], [0], [0], [1], [0, 0, 1, 1], [], []>} : vector<2x72xf32>, vector<72x2xf32>, vector<2x2xf32> -> vector<2x2xf32>
    %c0_85 = arith.constant 0 : index
    %c0_86 = arith.constant 0 : index
    %129 = vector.load %arg16[%c0_85, %c0_86] : memref<2x1xf32, #tpu.memory_space<vmem>>, vector<2x1xf32>
    %130 = vector.broadcast %129 : vector<2x1xf32> to vector<2x2xf32>
    %131 = arith.addf %128, %130 : vector<2x2xf32>
    %c0_87 = arith.constant 0 : index
    %c0_88 = arith.constant 0 : index
    %c0_89 = arith.constant 0 : index
    %132 = vector.load %arg17[%c0_87, %c0_88, %c0_89] : memref<1x2x2xf32, #tpu.memory_space<vmem>>, vector<1x2x2xf32>
    %133 = vector.shape_cast %132 : vector<1x2x2xf32> to vector<2x2xf32>
    %134 = vector.shape_cast %131 : vector<2x2xf32> to vector<1x2x2xf32>
    tpu.vector_store %arg17[%c0_87, %c0_88, %c0_89], %134 {strides = array<i32>} : memref<1x2x2xf32, #tpu.memory_space<vmem>>, vector<1x2x2xf32>,
    return
  }
  func.func @transform_0(%arg0: i32) -> (i32, i32, i32) {
    %c0_i32 = arith.constant 0 : i32
    %c0_i32_0 = arith.constant 0 : i32
    %c0_i32_1 = arith.constant 0 : i32
    return %arg0, %c0_i32, %c0_i32_0 : i32, i32, i32
  }
  func.func @transform_1(%arg0: i32) -> (i32, i32) {
    %c0_i32 = arith.constant 0 : i32
    %c0_i32_0 = arith.constant 0 : i32
    %c0_i32_1 = arith.constant 0 : i32
    return %c0_i32, %c0_i32_0 : i32, i32
  }
  func.func @transform_2(%arg0: i32) -> (i32, i32) {
    %c0_i32 = arith.constant 0 : i32
    %c0_i32_0 = arith.constant 0 : i32
    %c0_i32_1 = arith.constant 0 : i32
    return %c0_i32, %c0_i32_0 : i32, i32
  }
  func.func @transform_3(%arg0: i32) -> (i32, i32) {
    %c0_i32 = arith.constant 0 : i32
    %c0_i32_0 = arith.constant 0 : i32
    %c0_i32_1 = arith.constant 0 : i32
    return %c0_i32, %c0_i32_0 : i32, i32
  }
  func.func @transform_4(%arg0: i32) -> (i32, i32) {
    %c0_i32 = arith.constant 0 : i32
    %c0_i32_0 = arith.constant 0 : i32
    %c0_i32_1 = arith.constant 0 : i32
    return %c0_i32, %c0_i32_0 : i32, i32
  }
  func.func @transform_5(%arg0: i32) -> (i32, i32) {
    %c0_i32 = arith.constant 0 : i32
    %c0_i32_0 = arith.constant 0 : i32
    %c0_i32_1 = arith.constant 0 : i32
    return %c0_i32, %c0_i32_0 : i32, i32
  }
  func.func @transform_6(%arg0: i32) -> (i32, i32, i32) {
    %c0_i32 = arith.constant 0 : i32
    %c0_i32_0 = arith.constant 0 : i32
    %c0_i32_1 = arith.constant 0 : i32
    %c0_i32_2 = arith.constant 0 : i32
    return %c0_i32, %c0_i32_0, %c0_i32_1 : i32, i32, i32
  }
  func.func @transform_7(%arg0: i32) -> (i32, i32) {
    %c0_i32 = arith.constant 0 : i32
    %c0_i32_0 = arith.constant 0 : i32
    %c0_i32_1 = arith.constant 0 : i32
    return %c0_i32, %c0_i32_0 : i32, i32
  }
  func.func @transform_8(%arg0: i32) -> (i32, i32) {
    %c0_i32 = arith.constant 0 : i32
    %c0_i32_0 = arith.constant 0 : i32
    %c0_i32_1 = arith.constant 0 : i32
    return %c0_i32, %c0_i32_0 : i32, i32
  }
  func.func @transform_9(%arg0: i32) -> (i32, i32) {
    %c0_i32 = arith.constant 0 : i32
    %c0_i32_0 = arith.constant 0 : i32
    %c0_i32_1 = arith.constant 0 : i32
    return %c0_i32, %c0_i32_0 : i32, i32
  }
  func.func @transform_10(%arg0: i32) -> (i32, i32) {
    %c0_i32 = arith.constant 0 : i32
    %c0_i32_0 = arith.constant 0 : i32
    %c0_i32_1 = arith.constant 0 : i32
    return %c0_i32, %c0_i32_0 : i32, i32
  }
  func.func @transform_11(%arg0: i32) -> (i32, i32) {
    %c0_i32 = arith.constant 0 : i32
    %c0_i32_0 = arith.constant 0 : i32
    %c0_i32_1 = arith.constant 0 : i32
    return %c0_i32, %c0_i32_0 : i32, i32
  }
  func.func @transform_12(%arg0: i32) -> (i32, i32) {
    %c0_i32 = arith.constant 0 : i32
    %c0_i32_0 = arith.constant 0 : i32
    %c0_i32_1 = arith.constant 0 : i32
    return %c0_i32, %c0_i32_0 : i32, i32
  }
  func.func @transform_13(%arg0: i32) -> (i32, i32) {
    %c0_i32 = arith.constant 0 : i32
    %c0_i32_0 = arith.constant 0 : i32
    %c0_i32_1 = arith.constant 0 : i32
    return %c0_i32, %c0_i32_0 : i32, i32
  }
  func.func @transform_14(%arg0: i32) -> (i32, i32) {
    %c0_i32 = arith.constant 0 : i32
    %c0_i32_0 = arith.constant 0 : i32
    %c0_i32_1 = arith.constant 0 : i32
    return %c0_i32, %c0_i32_0 : i32, i32
  }
  func.func @transform_15(%arg0: i32) -> (i32, i32) {
    %c0_i32 = arith.constant 0 : i32
    %c0_i32_0 = arith.constant 0 : i32
    %c0_i32_1 = arith.constant 0 : i32
    return %c0_i32, %c0_i32_0 : i32, i32
  }
  func.func @transform_16(%arg0: i32) -> (i32, i32, i32) {
    %c0_i32 = arith.constant 0 : i32
    %c0_i32_0 = arith.constant 0 : i32
    %c0_i32_1 = arith.constant 0 : i32
    return %arg0, %c0_i32, %c0_i32_0 : i32, i32, i32
  }
}

</mosaic_0001>

<llo_original>
// kernel: tile.8
$region0: #{tile.8}
  #allocation0 [shape = 's32[1]{0}', space=sflag, size = 0x4, scoped, tag = 'scoped memory for tile.8']
  %s0 = inlined_call_operand.vmem [shape: f32[128], index: 0, kind: input, shape index: {}]
  %s1 = inlined_call_operand.vmem [shape: f32[2,128], index: 1, kind: output, shape index: {}]
  // Predicated region
  $region2: #{tile.8} parent=0 // pred_check
    _
  $region3: #{tile.8} parent=0 // pred_check_branch
    %3 = sbr.rel (0) target = $region5
  $region4: #{tile.8} parent=0 // pred_region
    _
  $region5: #{tile.8} parent=0 // pred_fallthru
    _
  %v4 = vld [vmem:[%s0] ss:$0 sm:$0xff]
  %5 = vst [vmem:[%s1] sm:$0x3] %v4

// kernel: a_call__.1
$region0: #{a_call__.1}
  #allocation0 [shape = 'u32[]', space=smem, size = 0x4, offset = 0x4, fixed_abs, tag = 'smem constant byte address 0x4 - core index']
  #allocation1 [shape = 'u32[144,128]{1,0:T(1,128)}', space=vmem, size = 0x12000, scoped, tag = 'internal scratch']
  #allocation2 [shape = 'f32[72,288]{1,0:T(8,128)}', space=vmem, size = 0x1b000, scoped, tag = 'scratch operand']
  %s0 = inlined_call_operand.vmem [shape: bf16[2,27,256], index: 0, kind: input, shape index: {}]
  %s1 = inlined_call_operand.vmem [shape: f32[1,256], index: 1, kind: input, shape index: {}]
  %s2 = inlined_call_operand.vmem [shape: bf16[16,27], index: 2, kind: input, shape index: {}]
  %s3 = inlined_call_operand.vmem [shape: f32[16,1], index: 3, kind: input, shape index: {}]
  %s4 = inlined_call_operand.vmem [shape: bf16[72,16], index: 4, kind: input, shape index: {}]
  %s5 = inlined_call_operand.vmem [shape: f32[72,1], index: 5, kind: input, shape index: {}]
  %s6 = inlined_call_operand.vmem [shape: f32[9,72,1], index: 6, kind: input, shape index: {}]
  %s7 = inlined_call_operand.vmem [shape: f32[72,1], index: 7, kind: input, shape index: {}]
  %s8 = inlined_call_operand.vmem [shape: f32[24,72], index: 8, kind: input, shape index: {}]
  %s9 = inlined_call_operand.vmem [shape: f32[24,1], index: 9, kind: input, shape index: {}]
  %s10 = inlined_call_operand.vmem [shape: f32[72,24], index: 10, kind: input, shape index: {}]
  %s11 = inlined_call_operand.vmem [shape: f32[72,1], index: 11, kind: input, shape index: {}]
  %s12 = inlined_call_operand.vmem [shape: f32[72,72], index: 12, kind: input, shape index: {}]
  %s13 = inlined_call_operand.vmem [shape: f32[72,1], index: 13, kind: input, shape index: {}]
  %s14 = inlined_call_operand.vmem [shape: f32[2,72], index: 14, kind: input, shape index: {}]
  %s15 = inlined_call_operand.vmem [shape: f32[2,1], index: 15, kind: input, shape index: {}]
  %s16 = inlined_call_operand.vmem [shape: f32[2,2,2], index: 16, kind: output, shape index: {}]
  %s17 = sld [smem:[#allocation0]]
  $region97: #{a_call__.1} parent=0
    _
  %s19 = ssub.s32 1, %s17
  %s20 = scalar_select 0, %s19, %s17
  loop: start=0, step=1, limit=4
  $region2: #{a_call__.1} parent=0 // loop_pre_header
    _
  $region3: #{a_call__.1} parent=0 // loop_header
    %s22 = sphi 0, %s26
    %p23 = scmp.ge.s32.totalorder %s22, 4
    %s32 = sphi 0, %s34
    %s35 = sphi 0, %s32
    %s36 = sphi 0, %s35
    %s52 = sphi 0, %s36
    %s56 = sphi 0, %s56
    %s58 = sphi 0, %s56
    %s59 = sphi 0, %s58
    %s73 = sphi 0, %s59
    %s77 = sphi 0, %s77
    %s79 = sphi 0, %s77
    %s80 = sphi 0, %s79
    %s94 = sphi 0, %s80
    %s98 = sphi 0, %s98
    %s100 = sphi 0, %s98
    %s101 = sphi 0, %s100
    %s115 = sphi 0, %s101
    %s119 = sphi 0, %s119
    %s121 = sphi 0, %s119
    %s122 = sphi 0, %s121
    %s136 = sphi 0, %s122
    %s140 = sphi 0, %s140
    %s142 = sphi 0, %s140
    %s143 = sphi 0, %s142
    %s157 = sphi 0, %s143
    %s161 = sphi 0, %s161
    %s163 = sphi 0, %s161
    %s164 = sphi 0, %s163
    %s178 = sphi 0, %s164
    %s182 = sphi 0, %s182
    %s184 = sphi 0, %s182
    %s185 = sphi 0, %s184
    %s199 = sphi 0, %s185
    %s203 = sphi 0, %s203
    %s205 = sphi 0, %s203
    %s206 = sphi 0, %s205
    %s220 = sphi 0, %s206
    %s224 = sphi 0, %s224
    %s226 = sphi 0, %s224
    %s227 = sphi 0, %s226
    %s241 = sphi 0, %s227
    %s245 = sphi 0, %s245
    %s247 = sphi 0, %s245
    %s248 = sphi 0, %s247
    %s262 = sphi 0, %s248
    %s266 = sphi 0, %s266
    %s268 = sphi 0, %s266
    %s269 = sphi 0, %s268
    %s283 = sphi 0, %s269
    %s287 = sphi 0, %s287
    %s289 = sphi 0, %s287
    %s290 = sphi 0, %s289
    %s304 = sphi 0, %s290
    %s308 = sphi 0, %s308
    %s310 = sphi 0, %s308
    %s311 = sphi 0, %s310
    %s325 = sphi 0, %s311
    %s329 = sphi 0, %s329
    %s331 = sphi 0, %s329
    %s332 = sphi 0, %s331
    %s346 = sphi 0, %s332
    %s350 = sphi 0, %s350
    %s352 = sphi 0, %s350
    %s353 = sphi 0, %s352
    %s367 = sphi 0, %s353
    %s373 = sphi 0, %s375
    %s376 = sphi 0, %s373
    %s377 = sphi 0, %s376
    %s393 = sphi 0, %s377
  $region4: #{a_call__.1} parent=0 // loop_header_branch
    %25 = sbr.rel (%p23) target = $region8
  $region5: #{a_call__.1} parent=0 // loop_body
    %s27 = ssub.s32 %s22, 1
    %s28 = ssub.s32 %s22, 2
    %s29 = sadd.s32 %s22, 1
    %s30 = ssub.s32 %s22, %s29
    %p31 = scmp.eq.s32.totalorder %s30, 0
    %s33 = sadd.s32 %s32, 1
    %s34 = scalar_select %p31, %s32, %s33
    %p37 = pneg %p31
    %p38 = scmp.eq.s32.totalorder %s22, 1
    %p39 = por %p37, %p38
    %p40 = scmp.ne.s32.totalorder %s32, %s35
    %p41 = scmp.eq.s32.totalorder %s22, 0
    %p42 = por %p40, %p41
    %p43 = scmp.ne.s32.totalorder %s32, %s35
    %p44 = scmp.eq.s32.totalorder %s27, 1
    %p45 = por %p43, %p44
    %p46 = scmp.ne.s32.totalorder %s35, %s36
    %p47 = scmp.eq.s32.totalorder %s27, 0
    %p48 = por %p46, %p47
    %p49 = scmp.ne.s32.totalorder %s35, %s36
    %p50 = scmp.eq.s32.totalorder %s28, 1
    %p51 = por %p49, %p50
    %p53 = scmp.ne.s32.totalorder %s36, %s52
    %p54 = scmp.eq.s32.totalorder %s28, 0
    %p55 = por %p53, %p54
    %s57 = sadd.s32 %s56, 1
    %p60 = scmp.eq.s32.totalorder %s22, 1
    %p61 = scmp.ne.s32.totalorder %s56, %s58
    %p62 = scmp.eq.s32.totalorder %s22, 0
    %p63 = por %p61, %p62
    %p64 = scmp.ne.s32.totalorder %s56, %s58
    %p65 = scmp.eq.s32.totalorder %s27, 1
    %p66 = por %p64, %p65
    %p67 = scmp.ne.s32.totalorder %s58, %s59
    %p68 = scmp.eq.s32.totalorder %s27, 0
    %p69 = por %p67, %p68
    %p70 = scmp.ne.s32.totalorder %s58, %s59
    %p71 = scmp.eq.s32.totalorder %s28, 1
    %p72 = por %p70, %p71
    %p74 = scmp.ne.s32.totalorder %s59, %s73
    %p75 = scmp.eq.s32.totalorder %s28, 0
    %p76 = por %p74, %p75
    %s78 = sadd.s32 %s77, 1
    %p81 = scmp.eq.s32.totalorder %s22, 1
    %p82 = scmp.ne.s32.totalorder %s77, %s79
    %p83 = scmp.eq.s32.totalorder %s22, 0
    %p84 = por %p82, %p83
    %p85 = scmp.ne.s32.totalorder %s77, %s79
    %p86 = scmp.eq.s32.totalorder %s27, 1
    %p87 = por %p85, %p86
    %p88 = scmp.ne.s32.totalorder %s79, %s80
    %p89 = scmp.eq.s32.totalorder %s27, 0
    %p90 = por %p88, %p89
    %p91 = scmp.ne.s32.totalorder %s79, %s80
    %p92 = scmp.eq.s32.totalorder %s28, 1
    %p93 = por %p91, %p92
    %p95 = scmp.ne.s32.totalorder %s80, %s94
    %p96 = scmp.eq.s32.totalorder %s28, 0
    %p97 = por %p95, %p96
    %s99 = sadd.s32 %s98, 1
    %p102 = scmp.eq.s32.totalorder %s22, 1
    %p103 = scmp.ne.s32.totalorder %s98, %s100
    %p104 = scmp.eq.s32.totalorder %s22, 0
    %p105 = por %p103, %p104
    %p106 = scmp.ne.s32.totalorder %s98, %s100
    %p107 = scmp.eq.s32.totalorder %s27, 1
    %p108 = por %p106, %p107
    %p109 = scmp.ne.s32.totalorder %s100, %s101
    %p110 = scmp.eq.s32.totalorder %s27, 0
    %p111 = por %p109, %p110
    %p112 = scmp.ne.s32.totalorder %s100, %s101
    %p113 = scmp.eq.s32.totalorder %s28, 1
    %p114 = por %p112, %p113
    %p116 = scmp.ne.s32.totalorder %s101, %s115
    %p117 = scmp.eq.s32.totalorder %s28, 0
    %p118 = por %p116, %p117
    %s120 = sadd.s32 %s119, 1
    %p123 = scmp.eq.s32.totalorder %s22, 1
    %p124 = scmp.ne.s32.totalorder %s119, %s121
    %p125 = scmp.eq.s32.totalorder %s22, 0
    %p126 = por %p124, %p125
    %p127 = scmp.ne.s32.totalorder %s119, %s121
    %p128 = scmp.eq.s32.totalorder %s27, 1
    %p129 = por %p127, %p128
    %p130 = scmp.ne.s32.totalorder %s121, %s122
    %p131 = scmp.eq.s32.totalorder %s27, 0
    %p132 = por %p130, %p131
    %p133 = scmp.ne.s32.totalorder %s121, %s122
    %p134 = scmp.eq.s32.totalorder %s28, 1
    %p135 = por %p133, %p134
    %p137 = scmp.ne.s32.totalorder %s122, %s136
    %p138 = scmp.eq.s32.totalorder %s28, 0
    %p139 = por %p137, %p138
    %s141 = sadd.s32 %s140, 1
    %p144 = scmp.eq.s32.totalorder %s22, 1
    %p145 = scmp.ne.s32.totalorder %s140, %s142
    %p146 = scmp.eq.s32.totalorder %s22, 0
    %p147 = por %p145, %p146
    %p148 = scmp.ne.s32.totalorder %s140, %s142
    %p149 = scmp.eq.s32.totalorder %s27, 1
    %p150 = por %p148, %p149
    %p151 = scmp.ne.s32.totalorder %s142, %s143
    %p152 = scmp.eq.s32.totalorder %s27, 0
    %p153 = por %p151, %p152
    %p154 = scmp.ne.s32.totalorder %s142, %s143
    %p155 = scmp.eq.s32.totalorder %s28, 1
    %p156 = por %p154, %p155
    %p158 = scmp.ne.s32.totalorder %s143, %s157
    %p159 = scmp.eq.s32.totalorder %s28, 0
    %p160 = por %p158, %p159
    %s162 = sadd.s32 %s161, 1
    %p165 = scmp.eq.s32.totalorder %s22, 1
    %p166 = scmp.ne.s32.totalorder %s161, %s163
    %p167 = scmp.eq.s32.totalorder %s22, 0
    %p168 = por %p166, %p167
    %p169 = scmp.ne.s32.totalorder %s161, %s163
    %p170 = scmp.eq.s32.totalorder %s27, 1
    %p171 = por %p169, %p170
    %p172 = scmp.ne.s32.totalorder %s163, %s164
    %p173 = scmp.eq.s32.totalorder %s27, 0
    %p174 = por %p172, %p173
    %p175 = scmp.ne.s32.totalorder %s163, %s164
    %p176 = scmp.eq.s32.totalorder %s28, 1
    %p177 = por %p175, %p176
    %p179 = scmp.ne.s32.totalorder %s164, %s178
    %p180 = scmp.eq.s32.totalorder %s28, 0
    %p181 = por %p179, %p180
    %s183 = sadd.s32 %s182, 1
    %p186 = scmp.eq.s32.totalorder %s22, 1
    %p187 = scmp.ne.s32.totalorder %s182, %s184
    %p188 = scmp.eq.s32.totalorder %s22, 0
    %p189 = por %p187, %p188
    %p190 = scmp.ne.s32.totalorder %s182, %s184
    %p191 = scmp.eq.s32.totalorder %s27, 1
    %p192 = por %p190, %p191
    %p193 = scmp.ne.s32.totalorder %s184, %s185
    %p194 = scmp.eq.s32.totalorder %s27, 0
    %p195 = por %p193, %p194
    %p196 = scmp.ne.s32.totalorder %s184, %s185
    %p197 = scmp.eq.s32.totalorder %s28, 1
    %p198 = por %p196, %p197
    %p200 = scmp.ne.s32.totalorder %s185, %s199
    %p201 = scmp.eq.s32.totalorder %s28, 0
    %p202 = por %p200, %p201
    %s204 = sadd.s32 %s203, 1
    %p207 = scmp.eq.s32.totalorder %s22, 1
    %p208 = scmp.ne.s32.totalorder %s203, %s205
    %p209 = scmp.eq.s32.totalorder %s22, 0
    %p210 = por %p208, %p209
    %p211 = scmp.ne.s32.totalorder %s203, %s205
    %p212 = scmp.eq.s32.totalorder %s27, 1
    %p213 = por %p211, %p212
    %p214 = scmp.ne.s32.totalorder %s205, %s206
    %p215 = scmp.eq.s32.totalorder %s27, 0
    %p216 = por %p214, %p215
    %p217 = scmp.ne.s32.totalorder %s205, %s206
    %p218 = scmp.eq.s32.totalorder %s28, 1
    %p219 = por %p217, %p218
    %p221 = scmp.ne.s32.totalorder %s206, %s220
    %p222 = scmp.eq.s32.totalorder %s28, 0
    %p223 = por %p221, %p222
    %s225 = sadd.s32 %s224, 1
    %p228 = scmp.eq.s32.totalorder %s22, 1
    %p229 = scmp.ne.s32.totalorder %s224, %s226
    %p230 = scmp.eq.s32.totalorder %s22, 0
    %p231 = por %p229, %p230
    %p232 = scmp.ne.s32.totalorder %s224, %s226
    %p233 = scmp.eq.s32.totalorder %s27, 1
    %p234 = por %p232, %p233
    %p235 = scmp.ne.s32.totalorder %s226, %s227
    %p236 = scmp.eq.s32.totalorder %s27, 0
    %p237 = por %p235, %p236
    %p238 = scmp.ne.s32.totalorder %s226, %s227
    %p239 = scmp.eq.s32.totalorder %s28, 1
    %p240 = por %p238, %p239
    %p242 = scmp.ne.s32.totalorder %s227, %s241
    %p243 = scmp.eq.s32.totalorder %s28, 0
    %p244 = por %p242, %p243
    %s246 = sadd.s32 %s245, 1
    %p249 = scmp.eq.s32.totalorder %s22, 1
    %p250 = scmp.ne.s32.totalorder %s245, %s247
    %p251 = scmp.eq.s32.totalorder %s22, 0
    %p252 = por %p250, %p251
    %p253 = scmp.ne.s32.totalorder %s245, %s247
    %p254 = scmp.eq.s32.totalorder %s27, 1
    %p255 = por %p253, %p254
    %p256 = scmp.ne.s32.totalorder %s247, %s248
    %p257 = scmp.eq.s32.totalorder %s27, 0
    %p258 = por %p256, %p257
    %p259 = scmp.ne.s32.totalorder %s247, %s248
    %p260 = scmp.eq.s32.totalorder %s28, 1
    %p261 = por %p259, %p260
    %p263 = scmp.ne.s32.totalorder %s248, %s262
    %p264 = scmp.eq.s32.totalorder %s28, 0
    %p265 = por %p263, %p264
    %s267 = sadd.s32 %s266, 1
    %p270 = scmp.eq.s32.totalorder %s22, 1
    %p271 = scmp.ne.s32.totalorder %s266, %s268
    %p272 = scmp.eq.s32.totalorder %s22, 0
    %p273 = por %p271, %p272
    %p274 = scmp.ne.s32.totalorder %s266, %s268
    %p275 = scmp.eq.s32.totalorder %s27, 1
    %p276 = por %p274, %p275
    %p277 = scmp.ne.s32.totalorder %s268, %s269
    %p278 = scmp.eq.s32.totalorder %s27, 0
    %p279 = por %p277, %p278
    %p280 = scmp.ne.s32.totalorder %s268, %s269
    %p281 = scmp.eq.s32.totalorder %s28, 1
    %p282 = por %p280, %p281
    %p284 = scmp.ne.s32.totalorder %s269, %s283
    %p285 = scmp.eq.s32.totalorder %s28, 0
    %p286 = por %p284, %p285
    %s288 = sadd.s32 %s287, 1
    %p291 = scmp.eq.s32.totalorder %s22, 1
    %p292 = scmp.ne.s32.totalorder %s287, %s289
    %p293 = scmp.eq.s32.totalorder %s22, 0
    %p294 = por %p292, %p293
    %p295 = scmp.ne.s32.totalorder %s287, %s289
    %p296 = scmp.eq.s32.totalorder %s27, 1
    %p297 = por %p295, %p296
    %p298 = scmp.ne.s32.totalorder %s289, %s290
    %p299 = scmp.eq.s32.totalorder %s27, 0
    %p300 = por %p298, %p299
    %p301 = scmp.ne.s32.totalorder %s289, %s290
    %p302 = scmp.eq.s32.totalorder %s28, 1
    %p303 = por %p301, %p302
    %p305 = scmp.ne.s32.totalorder %s290, %s304
    %p306 = scmp.eq.s32.totalorder %s28, 0
    %p307 = por %p305, %p306
    %s309 = sadd.s32 %s308, 1
    %p312 = scmp.eq.s32.totalorder %s22, 1
    %p313 = scmp.ne.s32.totalorder %s308, %s310
    %p314 = scmp.eq.s32.totalorder %s22, 0
    %p315 = por %p313, %p314
    %p316 = scmp.ne.s32.totalorder %s308, %s310
    %p317 = scmp.eq.s32.totalorder %s27, 1
    %p318 = por %p316, %p317
    %p319 = scmp.ne.s32.totalorder %s310, %s311
    %p320 = scmp.eq.s32.totalorder %s27, 0
    %p321 = por %p319, %p320
    %p322 = scmp.ne.s32.totalorder %s310, %s311
    %p323 = scmp.eq.s32.totalorder %s28, 1
    %p324 = por %p322, %p323
    %p326 = scmp.ne.s32.totalorder %s311, %s325
    %p327 = scmp.eq.s32.totalorder %s28, 0
    %p328 = por %p326, %p327
    %s330 = sadd.s32 %s329, 1
    %p333 = scmp.eq.s32.totalorder %s22, 1
    %p334 = scmp.ne.s32.totalorder %s329, %s331
    %p335 = scmp.eq.s32.totalorder %s22, 0
    %p336 = por %p334, %p335
    %p337 = scmp.ne.s32.totalorder %s329, %s331
    %p338 = scmp.eq.s32.totalorder %s27, 1
    %p339 = por %p337, %p338
    %p340 = scmp.ne.s32.totalorder %s331, %s332
    %p341 = scmp.eq.s32.totalorder %s27, 0
    %p342 = por %p340, %p341
    %p343 = scmp.ne.s32.totalorder %s331, %s332
    %p344 = scmp.eq.s32.totalorder %s28, 1
    %p345 = por %p343, %p344
    %p347 = scmp.ne.s32.totalorder %s332, %s346
    %p348 = scmp.eq.s32.totalorder %s28, 0
    %p349 = por %p347, %p348
    %s351 = sadd.s32 %s350, 1
    %p354 = scmp.eq.s32.totalorder %s22, 1
    %p355 = scmp.ne.s32.totalorder %s350, %s352
    %p356 = scmp.eq.s32.totalorder %s22, 0
    %p357 = por %p355, %p356
    %p358 = scmp.ne.s32.totalorder %s350, %s352
    %p359 = scmp.eq.s32.totalorder %s27, 1
    %p360 = por %p358, %p359
    %p361 = scmp.ne.s32.totalorder %s352, %s353
    %p362 = scmp.eq.s32.totalorder %s27, 0
    %p363 = por %p361, %p362
    %p364 = scmp.ne.s32.totalorder %s352, %s353
    %p365 = scmp.eq.s32.totalorder %s28, 1
    %p366 = por %p364, %p365
    %p368 = scmp.ne.s32.totalorder %s353, %s367
    %p369 = scmp.eq.s32.totalorder %s28, 0
    %p370 = por %p368, %p369
    %s371 = ssub.s32 %s22, %s29
    %p372 = scmp.eq.s32.totalorder %s371, 0
    %s374 = sadd.s32 %s373, 1
    %s375 = scalar_select %p372, %s373, %s374
    %p378 = pneg %p372
    %p379 = scmp.eq.s32.totalorder %s22, 1
    %p380 = por %p378, %p379
    %p381 = scmp.ne.s32.totalorder %s373, %s376
    %p382 = scmp.eq.s32.totalorder %s22, 0
    %p383 = por %p381, %p382
    %p384 = scmp.ne.s32.totalorder %s373, %s376
    %p385 = scmp.eq.s32.totalorder %s27, 1
    %p386 = por %p384, %p385
    %p387 = scmp.ne.s32.totalorder %s376, %s377
    %p388 = scmp.eq.s32.totalorder %s27, 0
    %p389 = por %p387, %p388
    %p390 = scmp.ne.s32.totalorder %s376, %s377
    %p391 = scmp.eq.s32.totalorder %s28, 1
    %p392 = por %p390, %p391
    %p394 = scmp.ne.s32.totalorder %s377, %s393
    %p395 = scmp.eq.s32.totalorder %s28, 0
    %p396 = por %p394, %p395
    %p397 = scmp.le.s32.totalorder 1, %s22
    %p398 = scmp.lt.s32.totalorder %s22, 3
    %p399 = pnand %p397, %p398
    %p400 = pneg %p399
    // Predicated region
    $region9: #{a_call__.1} parent=5 // pred_check
      _
    $region10: #{a_call__.1} parent=5 // pred_check_branch
      %402 = sbr.rel (%p399) target = $region12
    $region11: #{a_call__.1} parent=5 // pred_region
      %s403 = ssub.s32 %s22, 1
      // Predicated region
      $region13: #{a_call__.1} parent=11 // pred_check
        %p404 = pneg %p69
      $region14: #{a_call__.1} parent=11 // pred_check_branch
        %406 = sbr.rel (%p404) target = $region16
      $region15: #{a_call__.1} parent=11 // pred_region
        _
      $region16: #{a_call__.1} parent=11 // pred_fallthru
        _
      // Predicated region
      $region17: #{a_call__.1} parent=11 // pred_check
        %p407 = pneg %p90
      $region18: #{a_call__.1} parent=11 // pred_check_branch
        %409 = sbr.rel (%p407) target = $region20
      $region19: #{a_call__.1} parent=11 // pred_region
        _
      $region20: #{a_call__.1} parent=11 // pred_fallthru
        _
      // Predicated region
      $region21: #{a_call__.1} parent=11 // pred_check
        %p410 = pneg %p111
      $region22: #{a_call__.1} parent=11 // pred_check_branch
        %412 = sbr.rel (%p410) target = $region24
      $region23: #{a_call__.1} parent=11 // pred_region
        _
      $region24: #{a_call__.1} parent=11 // pred_fallthru
        _
      // Predicated region
      $region25: #{a_call__.1} parent=11 // pred_check
        %p413 = pneg %p132
      $region26: #{a_call__.1} parent=11 // pred_check_branch
        %415 = sbr.rel (%p413) target = $region28
      $region27: #{a_call__.1} parent=11 // pred_region
        _
      $region28: #{a_call__.1} parent=11 // pred_fallthru
        _
      // Predicated region
      $region29: #{a_call__.1} parent=11 // pred_check
        %p416 = pneg %p153
      $region30: #{a_call__.1} parent=11 // pred_check_branch
        %418 = sbr.rel (%p416) target = $region32
      $region31: #{a_call__.1} parent=11 // pred_region
        _
      $region32: #{a_call__.1} parent=11 // pred_fallthru
        _
      // Predicated region
      $region33: #{a_call__.1} parent=11 // pred_check
        %p419 = pneg %p174
      $region34: #{a_call__.1} parent=11 // pred_check_branch
        %421 = sbr.rel (%p419) target = $region36
      $region35: #{a_call__.1} parent=11 // pred_region
        _
      $region36: #{a_call__.1} parent=11 // pred_fallthru
        _
      // Predicated region
      $region37: #{a_call__.1} parent=11 // pred_check
        %p422 = pneg %p195
      $region38: #{a_call__.1} parent=11 // pred_check_branch
        %424 = sbr.rel (%p422) target = $region40
      $region39: #{a_call__.1} parent=11 // pred_region
        _
      $region40: #{a_call__.1} parent=11 // pred_fallthru
        _
      // Predicated region
      $region41: #{a_call__.1} parent=11 // pred_check
        %p425 = pneg %p216
      $region42: #{a_call__.1} parent=11 // pred_check_branch
        %427 = sbr.rel (%p425) target = $region44
      $region43: #{a_call__.1} parent=11 // pred_region
        _
      $region44: #{a_call__.1} parent=11 // pred_fallthru
        _
      // Predicated region
      $region45: #{a_call__.1} parent=11 // pred_check
        %p428 = pneg %p237
      $region46: #{a_call__.1} parent=11 // pred_check_branch
        %430 = sbr.rel (%p428) target = $region48
      $region47: #{a_call__.1} parent=11 // pred_region
        _
      $region48: #{a_call__.1} parent=11 // pred_fallthru
        _
      // Predicated region
      $region49: #{a_call__.1} parent=11 // pred_check
        %p431 = pneg %p258
      $region50: #{a_call__.1} parent=11 // pred_check_branch
        %433 = sbr.rel (%p431) target = $region52
      $region51: #{a_call__.1} parent=11 // pred_region
        _
      $region52: #{a_call__.1} parent=11 // pred_fallthru
        _
      // Predicated region
      $region53: #{a_call__.1} parent=11 // pred_check
        %p434 = pneg %p279
      $region54: #{a_call__.1} parent=11 // pred_check_branch
        %436 = sbr.rel (%p434) target = $region56
      $region55: #{a_call__.1} parent=11 // pred_region
        _
      $region56: #{a_call__.1} parent=11 // pred_fallthru
        _
      // Predicated region
      $region57: #{a_call__.1} parent=11 // pred_check
        %p437 = pneg %p300
      $region58: #{a_call__.1} parent=11 // pred_check_branch
        %439 = sbr.rel (%p437) target = $region60
      $region59: #{a_call__.1} parent=11 // pred_region
        _
      $region60: #{a_call__.1} parent=11 // pred_fallthru
        _
      // Predicated region
      $region61: #{a_call__.1} parent=11 // pred_check
        %p440 = pneg %p321
      $region62: #{a_call__.1} parent=11 // pred_check_branch
        %442 = sbr.rel (%p440) target = $region64
      $region63: #{a_call__.1} parent=11 // pred_region
        _
      $region64: #{a_call__.1} parent=11 // pred_fallthru
        _
      // Predicated region
      $region65: #{a_call__.1} parent=11 // pred_check
        %p443 = pneg %p342
      $region66: #{a_call__.1} parent=11 // pred_check_branch
        %445 = sbr.rel (%p443) target = $region68
      $region67: #{a_call__.1} parent=11 // pred_region
        _
      $region68: #{a_call__.1} parent=11 // pred_fallthru
        _
      // Predicated region
      $region69: #{a_call__.1} parent=11 // pred_check
        %p446 = pneg %p363
      $region70: #{a_call__.1} parent=11 // pred_check_branch
        %448 = sbr.rel (%p446) target = $region72
      $region71: #{a_call__.1} parent=11 // pred_region
        _
      $region72: #{a_call__.1} parent=11 // pred_fallthru
        _
    $region12: #{a_call__.1} parent=5 // pred_fallthru
      _
    %p449 = scmp.lt.s32.totalorder %s22, 2
    // Predicated region
    $region73: #{a_call__.1} parent=5 // pred_check
      %p450 = pneg %p449
    $region74: #{a_call__.1} parent=5 // pred_check_branch
      %452 = sbr.rel (%p450) target = $region76
    $region75: #{a_call__.1} parent=5 // pred_region
      // Predicated region
      $region77: #{a_call__.1} parent=75 // pred_check
        %p453 = pneg %p42
      $region78: #{a_call__.1} parent=75 // pred_check_branch
        %455 = sbr.rel (%p453) target = $region80
      $region79: #{a_call__.1} parent=75 // pred_region
        %p456 = scmp.lt.s32.totalorder %s22, 1
        %s457 = scalar_select %p456, %s22, 1
        %s458 = smul.addr %s457, 8
        %s459 = smul.addr %s458, 4
        %s460 = scalar_lea.vmem %s0, %s459
      $region80: #{a_call__.1} parent=75 // pred_fallthru
        _
    $region76: #{a_call__.1} parent=5 // pred_fallthru
      _
    %p461 = scmp.le.s32.totalorder 1, %s22
    %p462 = scmp.lt.s32.totalorder %s22, 3
    %p463 = pnand %p461, %p462
    %p464 = pneg %p463
    // Predicated region
    $region81: #{a_call__.1} parent=5 // pred_check
      _
    $region82: #{a_call__.1} parent=5 // pred_check_branch
      %466 = sbr.rel (%p463) target = $region84
    $region83: #{a_call__.1} parent=5 // pred_region
      %s467 = ssub.s32 %s22, 1
      %p468 = scmp.lt.s32.totalorder %s27, 1
      %s469 = scalar_select %p468, %s27, 1
      %s470 = smul.addr %s469, 8
      %s471 = smul.addr %s470, 4
      %s472 = scalar_lea.vmem %s0, %s471
      %p473 = pneg %p48
      %p474 = pneg %p45
      %p475 = pneg %p69
      %p476 = pneg %p66
      %p477 = pneg %p90
      %p478 = pneg %p87
      %p479 = pneg %p111
      %p480 = pneg %p108
      %p481 = pneg %p132
      %p482 = pneg %p129
      %p483 = pneg %p153
      %p484 = pneg %p150
      %p485 = pneg %p174
      %p486 = pneg %p171
      %p487 = pneg %p195
      %p488 = pneg %p192
      %p489 = pneg %p216
      %p490 = pneg %p213
      %p491 = pneg %p237
      %p492 = pneg %p234
      %p493 = pneg %p258
      %p494 = pneg %p255
      %p495 = pneg %p279
      %p496 = pneg %p276
      %p497 = pneg %p300
      %p498 = pneg %p297
      %p499 = pneg %p321
      %p500 = pneg %p318
      %p501 = pneg %p342
      %p502 = pneg %p339
      %p503 = pneg %p363
      %p504 = pneg %p360
      %p505 = pneg %p389
      %p506 = pneg %p386
      %p507 = scmp.lt.s32.totalorder %s27, 1
      %s508 = scalar_select %p507, %s27, 1
      %s509 = smul.addr %s508, 2
      %s510 = scalar_lea.vmem %s16, %s509
      %p511 = scmp.lt.s32.totalorder %s27, 1
      %s512 = scalar_select %p511, %s27, 1
      %s513 = smul.addr %s512, 8
      %s514 = smul.addr %s513, 4
      %s515 = scalar_lea.vmem %s0, %s514
      %p516 = scmp.lt.s32.totalorder %s27, 1
      %s517 = scalar_select %p516, %s27, 1
      %s518 = smul.addr %s517, 2
      %s519 = scalar_lea.vmem %s16, %s518
      %v521 = vld [vmem:[%s1] sm:$0x3]
      %v522 = vld [vmem:[%s2] sm:$0xf]
      %v523 = vld [vmem:[%s2 + $0x4] sm:$0xf]
      %v524 = vld [vmem:[%s515] sm:$0xff]
      %v525 = vld [vmem:[%s515 + $0x8] sm:$0xff]
      %v526 = vld [vmem:[%s515 + $0x10] sm:$0xff]
      %v527 = vld [vmem:[%s515 + $0x18] sm:$0x33]
      %v528 = vld [vmem:[%s3] sm:$0xff]
      %v529 = vld [vmem:[%s3 + $0x8] sm:$0xff]
      %531 = vset.pattern.permute.xlu0 0
      %532 = vperm.xlu0 %531, %v528
      %v533 = vpop.permute.xlu0 %532
      %536 = vset.pattern.permute.xlu0 0
      %537 = vperm.xlu0 %536, %v529
      %v538 = vpop.permute.xlu0 %537
      %v542 = vunpack.c.l.b16 %v522
      %v543 = vunpack.c.l.b16 %v523
      %v544 = vpack.c.b16 %v543, %v542
      %v549 = vunpack.c.l.b16 %v524
      %v550 = vunpack.c.h.b16 %v524
      %v551 = vunpack.c.l.b16 %v525
      %v552 = vunpack.c.h.b16 %v525
      %v553 = vunpack.c.l.b16 %v526
      %v554 = vunpack.c.h.b16 %v526
      %v555 = vunpack.c.l.b16 %v527
      %v556 = vunpack.c.h.b16 %v527
      %v557 = vpack.c.b16 %v551, %v549
      %v558 = vpack.c.b16 %v552, %v550
      %v559 = vpack.c.b16 %v555, %v553
      %v560 = vpack.c.b16 %v556, %v554
      %vm563 = vcmask 220160
      %v565 = vsel %vm563, %v544, 0
      %vm567 = vcmask 1044480
      %vm568 = vcmask 1045504
      %v569 = vsel %vm567, 4294967295, 65535
      %v570 = vsel %vm568, %v569, 0
      %v572 = vand.u32 %v559, %v570
      %v575 = vand.u32 %v560, %v570
      %577 = vmatprep.subr.bf16.mxu0 %v558
      %578 = vmatpush1.bf16.msra.mxu0 %v557
      %579 = vmatprep.subr.bf16.mxu0 %v575
      %580 = vmatpush1.bf16.msra.mxu0 %v572
      %581 = vmatprep.subr.bf16.mxu0 0
      %582 = vmatpush1.bf16.msra.mxu0 0
      %583 = vmatprep.subr.bf16.mxu0 0
      %584 = vmatpush1.bf16.msra.mxu0 0
      %585 = vmatprep.subr.bf16.mxu0 0
      %586 = vmatpush1.bf16.msra.mxu0 0
      %587 = vmatprep.subr.bf16.mxu0 0
      %588 = vmatpush1.bf16.msra.mxu0 0
      %589 = vmatprep.subr.bf16.mxu0 0
      %590 = vmatpush1.bf16.msra.mxu0 0
      %591 = vmatprep.subr.bf16.mxu0 0
      %592 = vmatpush1.bf16.msra.mxu0 0
      %593 = vmatprep.subr.bf16.mxu0 0
      %594 = vmatpush1.bf16.msra.mxu0 0
      %595 = vmatprep.subr.bf16.mxu0 0
      %596 = vmatpush1.bf16.msra.mxu0 0
      %597 = vmatprep.subr.bf16.mxu0 0
      %598 = vmatpush1.bf16.msra.mxu0 0
      %599 = vmatprep.subr.bf16.mxu0 0
      %600 = vmatpush1.bf16.msra.mxu0 0
      %601 = vmatprep.subr.bf16.mxu0 0
      %602 = vmatpush1.bf16.msra.mxu0 0
      %603 = vmatprep.subr.bf16.mxu0 0
      %604 = vmatpush1.bf16.msra.mxu0 0
      %605 = vmatprep.subr.bf16.mxu0 0
      %606 = vmatpush1.bf16.msra.mxu0 0
      %607 = vmatprep.subr.bf16.mxu0 0
      %608 = vmatpush1.bf16.msra.mxu0 0
      %609 = vmatprep.mubr.bf16.mxu0 0
      %610 = vmatmul.mubr.bf16.gmra.mrb[0].mxu0 %v565
      %v611 = vpop.f32.mrb[0].mxu0
      %v612 = vadd.f32 %v533, %v611
      %v613 = vpop.f32.mrb[0].mxu0
      %v614 = vadd.f32 %v533, %v613
      %v615 = vpop.f32.mrb[0].mxu0
      %v616 = vadd.f32 %v538, %v615
      %v617 = vpop.f32.mrb[0].mxu0
      %v618 = vadd.f32 %v538, %v617
      %619 = vdwg.mxu0
      %v620 = vadd.f32 %v612, 3.0
      %v621 = vadd.f32 %v614, 3.0
      %v622 = vadd.f32 %v616, 3.0
      %v623 = vadd.f32 %v618, 3.0
      %v624 = vmax.f32 %v620, 0.0
      %v625 = vmax.f32 %v621, 0.0
      %v626 = vmax.f32 %v622, 0.0
      %v627 = vmax.f32 %v623, 0.0
      %v628 = vmin.f32 %v624, 6.0
      %v629 = vmin.f32 %v625, 6.0
      %v630 = vmin.f32 %v626, 6.0
      %v631 = vmin.f32 %v627, 6.0
      %v632 = vmul.f32 %v612, %v628
      %v633 = vmul.f32 %v614, %v629
      %v634 = vmul.f32 %v616, %v630
      %v635 = vmul.f32 %v618, %v631
      %v636 = vmul.f32 %v632, 0.16666667
      %v637 = vmul.f32 %v633, 0.16666667
      %v638 = vmul.f32 %v634, 0.16666667
      %v639 = vmul.f32 %v635, 0.16666667
      %v640 = vld [vmem:[%s4] sm:$0xf]
      %v641 = vld [vmem:[%s4 + $0x4] sm:$0xf]
      %v642 = vld [vmem:[%s4 + $0x8] sm:$0xf]
      %v643 = vld [vmem:[%s4 + $0xc] sm:$0xf]
      %v644 = vld [vmem:[%s4 + $0x10] sm:$0xf]
      %v645 = vld [vmem:[%s4 + $0x14] sm:$0xf]
      %v646 = vld [vmem:[%s4 + $0x18] sm:$0xf]
      %v647 = vld [vmem:[%s4 + $0x1c] sm:$0xf]
      %v648 = vld [vmem:[%s4 + $0x20] sm:$0xf]
      %v649 = vpack.c.bf16 %v638, %v636
      %v650 = vpack.c.bf16 %v639, %v637
      %v651 = vld [vmem:[%s5] sm:$0xff]
      %v652 = vld [vmem:[%s5 + $0x8] sm:$0xff]
      %v653 = vld [vmem:[%s5 + $0x10] sm:$0xff]
      %v654 = vld [vmem:[%s5 + $0x18] sm:$0xff]
      %v655 = vld [vmem:[%s5 + $0x20] sm:$0xff]
      %v656 = vld [vmem:[%s5 + $0x28] sm:$0xff]
      %v657 = vld [vmem:[%s5 + $0x30] sm:$0xff]
      %v658 = vld [vmem:[%s5 + $0x38] sm:$0xff]
      %v659 = vld [vmem:[%s5 + $0x40] sm:$0xff]
      %661 = vset.pattern.permute.xlu0 0
      %662 = vperm.xlu0 %661, %v651
      %v663 = vpop.permute.xlu0 %662
      %666 = vset.pattern.permute.xlu0 0
      %667 = vperm.xlu0 %666, %v652
      %v668 = vpop.permute.xlu0 %667
      %671 = vset.pattern.permute.xlu0 0
      %672 = vperm.xlu0 %671, %v653
      %v673 = vpop.permute.xlu0 %672
      %676 = vset.pattern.permute.xlu0 0
      %677 = vperm.xlu0 %676, %v654
      %v678 = vpop.permute.xlu0 %677
      %681 = vset.pattern.permute.xlu0 0
      %682 = vperm.xlu0 %681, %v655
      %v683 = vpop.permute.xlu0 %682
      %686 = vset.pattern.permute.xlu0 0
      %687 = vperm.xlu0 %686, %v656
      %v688 = vpop.permute.xlu0 %687
      %691 = vset.pattern.permute.xlu0 0
      %692 = vperm.xlu0 %691, %v657
      %v693 = vpop.permute.xlu0 %692
      %696 = vset.pattern.permute.xlu0 0
      %697 = vperm.xlu0 %696, %v658
      %v698 = vpop.permute.xlu0 %697
      %701 = vset.pattern.permute.xlu0 0
      %702 = vperm.xlu0 %701, %v659
      %v703 = vpop.permute.xlu0 %702
      %v714 = vunpack.c.l.b16 %v640
      %v715 = vunpack.c.l.b16 %v641
      %v716 = vunpack.c.l.b16 %v642
      %v717 = vunpack.c.l.b16 %v643
      %v718 = vunpack.c.l.b16 %v644
      %v719 = vunpack.c.l.b16 %v645
      %v720 = vunpack.c.l.b16 %v646
      %v721 = vunpack.c.l.b16 %v647
      %v722 = vunpack.c.l.b16 %v648
      %v723 = vpack.c.b16 %v715, %v714
      %v724 = vpack.c.b16 %v717, %v716
      %v725 = vpack.c.b16 %v719, %v718
      %v726 = vpack.c.b16 %v721, %v720
      %v727 = vpack.c.b16 %v722, %v722
      %vm728 = vcmask 130048
      %v730 = vsel %vm728, %v723, 0
      %v733 = vsel %vm728, %v724, 0
      %v736 = vsel %vm728, %v725, 0
      %v739 = vsel %vm728, %v726, 0
      %v742 = vsel %vm728, %v727, 0
      %744 = vmatprep.subr.bf16.mxu0 %v650
      %745 = vmatpush1.bf16.msra.mxu0 %v649
      %746 = vmatprep.subr.bf16.mxu0 0
      %747 = vmatpush1.bf16.msra.mxu0 0
      %748 = vmatprep.subr.bf16.mxu0 0
      %749 = vmatpush1.bf16.msra.mxu0 0
      %750 = vmatprep.subr.bf16.mxu0 0
      %751 = vmatpush1.bf16.msra.mxu0 0
      %752 = vmatprep.subr.bf16.mxu0 0
      %753 = vmatpush1.bf16.msra.mxu0 0
      %754 = vmatprep.subr.bf16.mxu0 0
      %755 = vmatpush1.bf16.msra.mxu0 0
      %756 = vmatprep.subr.bf16.mxu0 0
      %757 = vmatpush1.bf16.msra.mxu0 0
      %758 = vmatprep.subr.bf16.mxu0 0
      %759 = vmatpush1.bf16.msra.mxu0 0
      %760 = vmatprep.subr.bf16.mxu0 0
      %761 = vmatpush1.bf16.msra.mxu0 0
      %762 = vmatprep.subr.bf16.mxu0 0
      %763 = vmatpush1.bf16.msra.mxu0 0
      %764 = vmatprep.subr.bf16.mxu0 0
      %765 = vmatpush1.bf16.msra.mxu0 0
      %766 = vmatprep.subr.bf16.mxu0 0
      %767 = vmatpush1.bf16.msra.mxu0 0
      %768 = vmatprep.subr.bf16.mxu0 0
      %769 = vmatpush1.bf16.msra.mxu0 0
      %770 = vmatprep.subr.bf16.mxu0 0
      %771 = vmatpush1.bf16.msra.mxu0 0
      %772 = vmatprep.subr.bf16.mxu0 0
      %773 = vmatpush1.bf16.msra.mxu0 0
      %774 = vmatprep.subr.bf16.mxu0 0
      %775 = vmatpush1.bf16.msra.mxu0 0
      %776 = vmatprep.mubr.bf16.mxu0 0
      %777 = vmatmul.mubr.bf16.gmra.mrb[0].mxu0 %v730
      %v778 = vpop.f32.mrb[0].mxu0
      %v779 = vadd.f32 %v663, %v778
      %v780 = vpop.f32.mrb[0].mxu0
      %v781 = vadd.f32 %v663, %v780
      %v782 = vpop.f32.mrb[0].mxu0
      %v783 = vadd.f32 %v668, %v782
      %v784 = vpop.f32.mrb[0].mxu0
      %v785 = vadd.f32 %v668, %v784
      %786 = vmatprep.mubr.bf16.mxu0 0
      %787 = vmatmul.mubr.bf16.gmra.mrb[0].mxu0 %v733
      %v788 = vpop.f32.mrb[0].mxu0
      %v789 = vadd.f32 %v673, %v788
      %v790 = vpop.f32.mrb[0].mxu0
      %v791 = vadd.f32 %v673, %v790
      %v792 = vpop.f32.mrb[0].mxu0
      %v793 = vadd.f32 %v678, %v792
      %v794 = vpop.f32.mrb[0].mxu0
      %v795 = vadd.f32 %v678, %v794
      %796 = vmatprep.mubr.bf16.mxu0 0
      %797 = vmatmul.mubr.bf16.gmra.mrb[0].mxu0 %v736
      %v798 = vpop.f32.mrb[0].mxu0
      %v799 = vadd.f32 %v683, %v798
      %v800 = vpop.f32.mrb[0].mxu0
      %v801 = vadd.f32 %v683, %v800
      %v802 = vpop.f32.mrb[0].mxu0
      %v803 = vadd.f32 %v688, %v802
      %v804 = vpop.f32.mrb[0].mxu0
      %v805 = vadd.f32 %v688, %v804
      %806 = vmatprep.mubr.bf16.mxu0 0
      %807 = vmatmul.mubr.bf16.gmra.mrb[0].mxu0 %v739
      %v808 = vpop.f32.mrb[0].mxu0
      %v809 = vadd.f32 %v693, %v808
      %v810 = vpop.f32.mrb[0].mxu0
      %v811 = vadd.f32 %v693, %v810
      %v812 = vpop.f32.mrb[0].mxu0
      %v813 = vadd.f32 %v698, %v812
      %v814 = vpop.f32.mrb[0].mxu0
      %v815 = vadd.f32 %v698, %v814
      %816 = vmatprep.mubr.bf16.mxu0 0
      %817 = vmatmul.mubr.bf16.gmra.mrb[0].mxu0 %v742
      %v818 = vpop.f32.mrb[0].mxu0
      %v819 = vadd.f32 %v703, %v818
      %v820 = vpop.f32.mrb[0].mxu0
      %v821 = vadd.f32 %v703, %v820
      %v822 = vpop.f32.mrb[0].mxu0
      %v823 = vpop.f32.mrb[0].mxu0
      %824 = vdwg.mxu0
      %v825 = vmax.f32 %v779, 0.0
      %v826 = vmax.f32 %v781, 0.0
      %v827 = vmax.f32 %v783, 0.0
      %v828 = vmax.f32 %v785, 0.0
      %v829 = vmax.f32 %v789, 0.0
      %v830 = vmax.f32 %v791, 0.0
      %v831 = vmax.f32 %v793, 0.0
      %v832 = vmax.f32 %v795, 0.0
      %v833 = vmax.f32 %v799, 0.0
      %v834 = vmax.f32 %v801, 0.0
      %v835 = vmax.f32 %v803, 0.0
      %v836 = vmax.f32 %v805, 0.0
      %v837 = vmax.f32 %v809, 0.0
      %v838 = vmax.f32 %v811, 0.0
      %v839 = vmax.f32 %v813, 0.0
      %v840 = vmax.f32 %v815, 0.0
      %v841 = vmax.f32 %v819, 0.0
      %v842 = vmax.f32 %v821, 0.0
      %v844 = vlaneseq
      %v845 = vshrl.u32 %v844, 7
      %v846 = vsub.s32 0, %v845
      %v847 = vrot.slane %v521, %v846
      %v848 = vlaneseq
      %v849 = vshrl.u32 %v848, 7
      %v850 = vsub.s32 1, %v849
      %v851 = vrot.slane %v521, %v850
      %v854 = vmul.f32 %v825, %v847
      %v855 = vmul.f32 %v826, %v851
      %v856 = vmul.f32 %v827, %v847
      %v857 = vmul.f32 %v828, %v851
      %v858 = vmul.f32 %v829, %v847
      %v859 = vmul.f32 %v830, %v851
      %v860 = vmul.f32 %v831, %v847
      %v861 = vmul.f32 %v832, %v851
      %v862 = vmul.f32 %v833, %v847
      %v863 = vmul.f32 %v834, %v851
      %v864 = vmul.f32 %v835, %v847
      %v865 = vmul.f32 %v836, %v851
      %v866 = vmul.f32 %v837, %v847
      %v867 = vmul.f32 %v838, %v851
      %v868 = vmul.f32 %v839, %v847
      %v869 = vmul.f32 %v840, %v851
      %v870 = vmul.f32 %v841, %v847
      %v871 = vmul.f32 %v842, %v851
      %872 = vst.msk [vmem:[#allocation2] sm:$0xff] %vm728, 0.0
      %873 = vst.msk [vmem:[#allocation2 + $0x18] sm:$0xff] %vm728, 0.0
      %874 = vst.msk [vmem:[#allocation2 + $0x30] sm:$0xff] %vm728, 0.0
      %875 = vst.msk [vmem:[#allocation2 + $0x48] sm:$0xff] %vm728, 0.0
      %876 = vst.msk [vmem:[#allocation2 + $0x60] sm:$0xff] %vm728, 0.0
      %877 = vst.msk [vmem:[#allocation2 + $0x78] sm:$0xff] %vm728, 0.0
      %878 = vst.msk [vmem:[#allocation2 + $0x90] sm:$0xff] %vm728, 0.0
      %879 = vst.msk [vmem:[#allocation2 + $0xa8] sm:$0xff] %vm728, 0.0
      %880 = vst.msk [vmem:[#allocation2 + $0xc0] sm:$0xff] %vm728, 0.0
      %vm881 = vcmask 261248
      %882 = vst.msk [vmem:[#allocation2 + $0x10] sm:$0xff] %vm881, 0.0
      %883 = vst.msk [vmem:[#allocation2 + $0x28] sm:$0xff] %vm881, 0.0
      %884 = vst.msk [vmem:[#allocation2 + $0x40] sm:$0xff] %vm881, 0.0
      %885 = vst.msk [vmem:[#allocation2 + $0x58] sm:$0xff] %vm881, 0.0
      %886 = vst.msk [vmem:[#allocation2 + $0x70] sm:$0xff] %vm881, 0.0
      %887 = vst.msk [vmem:[#allocation2 + $0x88] sm:$0xff] %vm881, 0.0
      %888 = vst.msk [vmem:[#allocation2 + $0xa0] sm:$0xff] %vm881, 0.0
      %889 = vst.msk [vmem:[#allocation2 + $0xb8] sm:$0xff] %vm881, 0.0
      %890 = vst.msk [vmem:[#allocation2 + $0xd0] sm:$0xff] %vm881, 0.0
      %909 = vrot.lane.b32.xlu0 %v854, 16
      %v910 = vpop.permute.xlu0 %909
      %911 = vrot.lane.b32.xlu0 %v855, 16
      %v912 = vpop.permute.xlu0 %911
      %913 = vrot.lane.b32.xlu0 %v856, 16
      %v914 = vpop.permute.xlu0 %913
      %915 = vrot.lane.b32.xlu0 %v857, 16
      %v916 = vpop.permute.xlu0 %915
      %917 = vrot.lane.b32.xlu0 %v858, 16
      %v918 = vpop.permute.xlu0 %917
      %919 = vrot.lane.b32.xlu0 %v859, 16
      %v920 = vpop.permute.xlu0 %919
      %921 = vrot.lane.b32.xlu0 %v860, 16
      %v922 = vpop.permute.xlu0 %921
      %923 = vrot.lane.b32.xlu0 %v861, 16
      %v924 = vpop.permute.xlu0 %923
      %925 = vrot.lane.b32.xlu0 %v862, 16
      %v926 = vpop.permute.xlu0 %925
      %927 = vrot.lane.b32.xlu0 %v863, 16
      %v928 = vpop.permute.xlu0 %927
      %929 = vrot.lane.b32.xlu0 %v864, 16
      %v930 = vpop.permute.xlu0 %929
      %931 = vrot.lane.b32.xlu0 %v865, 16
      %v932 = vpop.permute.xlu0 %931
      %933 = vrot.lane.b32.xlu0 %v866, 16
      %v934 = vpop.permute.xlu0 %933
      %935 = vrot.lane.b32.xlu0 %v867, 16
      %v936 = vpop.permute.xlu0 %935
      %937 = vrot.lane.b32.xlu0 %v868, 16
      %v938 = vpop.permute.xlu0 %937
      %939 = vrot.lane.b32.xlu0 %v869, 16
      %v940 = vpop.permute.xlu0 %939
      %941 = vrot.lane.b32.xlu0 %v870, 16
      %v942 = vpop.permute.xlu0 %941
      %943 = vrot.lane.b32.xlu0 %v871, 16
      %v944 = vpop.permute.xlu0 %943
      %v945 = vsel %vm728, %v910, %v912
      %v946 = vsel %vm728, %v914, %v916
      %v947 = vsel %vm728, %v918, %v920
      %v948 = vsel %vm728, %v922, %v924
      %v949 = vsel %vm728, %v926, %v928
      %v950 = vsel %vm728, %v930, %v932
      %v951 = vsel %vm728, %v934, %v936
      %v952 = vsel %vm728, %v938, %v940
      %v953 = vsel %vm728, %v942, %v944
      %vm981 = vcmask 1047680
      %982 = vst.msk [vmem:[#allocation2] sm:$0xff] %vm981, %v910
      %983 = vst [vmem:[#allocation2 + $0x8] sm:$0xff] %v945
      %984 = vst.msk [vmem:[#allocation2 + $0x10] sm:$0xff] %vm728, %v912
      %985 = vst.msk [vmem:[#allocation2 + $0x18] sm:$0xff] %vm981, %v914
      %986 = vst [vmem:[#allocation2 + $0x20] sm:$0xff] %v946
      %987 = vst.msk [vmem:[#allocation2 + $0x28] sm:$0xff] %vm728, %v916
      %988 = vst.msk [vmem:[#allocation2 + $0x30] sm:$0xff] %vm981, %v918
      %989 = vst [vmem:[#allocation2 + $0x38] sm:$0xff] %v947
      %990 = vst.msk [vmem:[#allocation2 + $0x40] sm:$0xff] %vm728, %v920
      %991 = vst.msk [vmem:[#allocation2 + $0x48] sm:$0xff] %vm981, %v922
      %992 = vst [vmem:[#allocation2 + $0x50] sm:$0xff] %v948
      %993 = vst.msk [vmem:[#allocation2 + $0x58] sm:$0xff] %vm728, %v924
      %994 = vst.msk [vmem:[#allocation2 + $0x60] sm:$0xff] %vm981, %v926
      %995 = vst [vmem:[#allocation2 + $0x68] sm:$0xff] %v949
      %996 = vst.msk [vmem:[#allocation2 + $0x70] sm:$0xff] %vm728, %v928
      %997 = vst.msk [vmem:[#allocation2 + $0x78] sm:$0xff] %vm981, %v930
      %998 = vst [vmem:[#allocation2 + $0x80] sm:$0xff] %v950
      %999 = vst.msk [vmem:[#allocation2 + $0x88] sm:$0xff] %vm728, %v932
      %1000 = vst.msk [vmem:[#allocation2 + $0x90] sm:$0xff] %vm981, %v934
      %1001 = vst [vmem:[#allocation2 + $0x98] sm:$0xff] %v951
      %1002 = vst.msk [vmem:[#allocation2 + $0xa0] sm:$0xff] %vm728, %v936
      %1003 = vst.msk [vmem:[#allocation2 + $0xa8] sm:$0xff] %vm981, %v938
      %1004 = vst [vmem:[#allocation2 + $0xb0] sm:$0xff] %v952
      %1005 = vst.msk [vmem:[#allocation2 + $0xb8] sm:$0xff] %vm728, %v940
      %1006 = vst.msk [vmem:[#allocation2 + $0xc0] sm:$0xff] %vm981, %v942
      %1007 = vst [vmem:[#allocation2 + $0xc8] sm:$0xff] %v953
      %1008 = vst.msk [vmem:[#allocation2 + $0xd0] sm:$0xff] %vm728, %v944
      %v1009 = vld [vmem:[#allocation2] sm:$0xff]
      %v1010 = vld [vmem:[#allocation2 + $0x8] sm:$0xff]
      %v1011 = vld [vmem:[#allocation2 + $0x10] sm:$0xff]
      %v1012 = vld [vmem:[#allocation2 + $0x18] sm:$0xff]
      %v1013 = vld [vmem:[#allocation2 + $0x20] sm:$0xff]
      %v1014 = vld [vmem:[#allocation2 + $0x28] sm:$0xff]
      %v1015 = vld [vmem:[#allocation2 + $0x30] sm:$0xff]
      %v1016 = vld [vmem:[#allocation2 + $0x38] sm:$0xff]
      %v1017 = vld [vmem:[#allocation2 + $0x40] sm:$0xff]
      %v1018 = vld [vmem:[#allocation2 + $0x48] sm:$0xff]
      %v1019 = vld [vmem:[#allocation2 + $0x50] sm:$0xff]
      %v1020 = vld [vmem:[#allocation2 + $0x58] sm:$0xff]
      %v1021 = vld [vmem:[#allocation2 + $0x60] sm:$0xff]
      %v1022 = vld [vmem:[#allocation2 + $0x68] sm:$0xff]
      %v1023 = vld [vmem:[#allocation2 + $0x70] sm:$0xff]
      %v1024 = vld [vmem:[#allocation2 + $0x78] sm:$0xff]
      %v1025 = vld [vmem:[#allocation2 + $0x80] sm:$0xff]
      %v1026 = vld [vmem:[#allocation2 + $0x88] sm:$0xff]
      %v1027 = vld [vmem:[#allocation2 + $0x90] sm:$0xff]
      %v1028 = vld [vmem:[#allocation2 + $0x98] sm:$0xff]
      %v1029 = vld [vmem:[#allocation2 + $0xa0] sm:$0xff]
      %v1030 = vld [vmem:[#allocation2 + $0xa8] sm:$0xff]
      %v1031 = vld [vmem:[#allocation2 + $0xb0] sm:$0xff]
      %v1032 = vld [vmem:[#allocation2 + $0xb8] sm:$0xff]
      %v1033 = vld [vmem:[#allocation2 + $0xc0] sm:$0xff]
      %v1034 = vld [vmem:[#allocation2 + $0xc8] sm:$0xff]
      %v1035 = vld [vmem:[#allocation2 + $0xd0] sm:$0xff]
      %v1036 = vld [vmem:[%s6] sm:$0xff]
      %v1037 = vld [vmem:[%s6 + $0x8] sm:$0xff]
      %v1038 = vld [vmem:[%s6 + $0x10] sm:$0xff]
      %v1039 = vld [vmem:[%s6 + $0x18] sm:$0xff]
      %v1040 = vld [vmem:[%s6 + $0x20] sm:$0xff]
      %v1041 = vld [vmem:[%s6 + $0x28] sm:$0xff]
      %v1042 = vld [vmem:[%s6 + $0x30] sm:$0xff]
      %v1043 = vld [vmem:[%s6 + $0x38] sm:$0xff]
      %v1044 = vld [vmem:[%s6 + $0x40] sm:$0xff]
      %1046 = vset.pattern.permute.xlu0 0
      %1047 = vperm.xlu0 %1046, %v1036
      %v1048 = vpop.permute.xlu0 %1047
      %1051 = vset.pattern.permute.xlu0 0
      %1052 = vperm.xlu0 %1051, %v1037
      %v1053 = vpop.permute.xlu0 %1052
      %1056 = vset.pattern.permute.xlu0 0
      %1057 = vperm.xlu0 %1056, %v1038
      %v1058 = vpop.permute.xlu0 %1057
      %1061 = vset.pattern.permute.xlu0 0
      %1062 = vperm.xlu0 %1061, %v1039
      %v1063 = vpop.permute.xlu0 %1062
      %1066 = vset.pattern.permute.xlu0 0
      %1067 = vperm.xlu0 %1066, %v1040
      %v1068 = vpop.permute.xlu0 %1067
      %1071 = vset.pattern.permute.xlu0 0
      %1072 = vperm.xlu0 %1071, %v1041
      %v1073 = vpop.permute.xlu0 %1072
      %1076 = vset.pattern.permute.xlu0 0
      %1077 = vperm.xlu0 %1076, %v1042
      %v1078 = vpop.permute.xlu0 %1077
      %1081 = vset.pattern.permute.xlu0 0
      %1082 = vperm.xlu0 %1081, %v1043
      %v1083 = vpop.permute.xlu0 %1082
      %1086 = vset.pattern.permute.xlu0 0
      %1087 = vperm.xlu0 %1086, %v1044
      %v1088 = vpop.permute.xlu0 %1087
      %v1090 = vmul.f32 %v1009, %v1048
      %v1091 = vmul.f32 %v1010, %v1048
      %v1092 = vmul.f32 %v1011, %v1048
      %v1093 = vmul.f32 %v1012, %v1053
      %v1094 = vmul.f32 %v1013, %v1053
      %v1095 = vmul.f32 %v1014, %v1053
      %v1096 = vmul.f32 %v1015, %v1058
      %v1097 = vmul.f32 %v1016, %v1058
      %v1098 = vmul.f32 %v1017, %v1058
      %v1099 = vmul.f32 %v1018, %v1063
      %v1100 = vmul.f32 %v1019, %v1063
      %v1101 = vmul.f32 %v1020, %v1063
      %v1102 = vmul.f32 %v1021, %v1068
      %v1103 = vmul.f32 %v1022, %v1068
      %v1104 = vmul.f32 %v1023, %v1068
      %v1105 = vmul.f32 %v1024, %v1073
      %v1106 = vmul.f32 %v1025, %v1073
      %v1107 = vmul.f32 %v1026, %v1073
      %v1108 = vmul.f32 %v1027, %v1078
      %v1109 = vmul.f32 %v1028, %v1078
      %v1110 = vmul.f32 %v1029, %v1078
      %v1111 = vmul.f32 %v1030, %v1083
      %v1112 = vmul.f32 %v1031, %v1083
      %v1113 = vmul.f32 %v1032, %v1083
      %v1114 = vmul.f32 %v1033, %v1088
      %v1115 = vmul.f32 %v1034, %v1088
      %v1116 = vmul.f32 %v1035, %v1088
      %v1117 = vld [vmem:[%s7] sm:$0xff]
      %v1118 = vld [vmem:[%s7 + $0x8] sm:$0xff]
      %v1119 = vld [vmem:[%s7 + $0x10] sm:$0xff]
      %v1120 = vld [vmem:[%s7 + $0x18] sm:$0xff]
      %v1121 = vld [vmem:[%s7 + $0x20] sm:$0xff]
      %v1122 = vld [vmem:[%s7 + $0x28] sm:$0xff]
      %v1123 = vld [vmem:[%s7 + $0x30] sm:$0xff]
      %v1124 = vld [vmem:[%s7 + $0x38] sm:$0xff]
      %v1125 = vld [vmem:[%s7 + $0x40] sm:$0xff]
      %1127 = vset.pattern.permute.xlu0 0
      %1128 = vperm.xlu0 %1127, %v1117
      %v1129 = vpop.permute.xlu0 %1128
      %1132 = vset.pattern.permute.xlu0 0
      %1133 = vperm.xlu0 %1132, %v1118
      %v1134 = vpop.permute.xlu0 %1133
      %1137 = vset.pattern.permute.xlu0 0
      %1138 = vperm.xlu0 %1137, %v1119
      %v1139 = vpop.permute.xlu0 %1138
      %1142 = vset.pattern.permute.xlu0 0
      %1143 = vperm.xlu0 %1142, %v1120
      %v1144 = vpop.permute.xlu0 %1143
      %1147 = vset.pattern.permute.xlu0 0
      %1148 = vperm.xlu0 %1147, %v1121
      %v1149 = vpop.permute.xlu0 %1148
      %1152 = vset.pattern.permute.xlu0 0
      %1153 = vperm.xlu0 %1152, %v1122
      %v1154 = vpop.permute.xlu0 %1153
      %1157 = vset.pattern.permute.xlu0 0
      %1158 = vperm.xlu0 %1157, %v1123
      %v1159 = vpop.permute.xlu0 %1158
      %1162 = vset.pattern.permute.xlu0 0
      %1163 = vperm.xlu0 %1162, %v1124
      %v1164 = vpop.permute.xlu0 %1163
      %1167 = vset.pattern.permute.xlu0 0
      %1168 = vperm.xlu0 %1167, %v1125
      %v1169 = vpop.permute.xlu0 %1168
      %v1171 = vadd.f32 %v1090, %v1129
      %v1172 = vadd.f32 %v1091, %v1129
      %v1173 = vadd.f32 %v1092, %v1129
      %v1174 = vadd.f32 %v1093, %v1134
      %v1175 = vadd.f32 %v1094, %v1134
      %v1176 = vadd.f32 %v1095, %v1134
      %v1177 = vadd.f32 %v1096, %v1139
      %v1178 = vadd.f32 %v1097, %v1139
      %v1179 = vadd.f32 %v1098, %v1139
      %v1180 = vadd.f32 %v1099, %v1144
      %v1181 = vadd.f32 %v1100, %v1144
      %v1182 = vadd.f32 %v1101, %v1144
      %v1183 = vadd.f32 %v1102, %v1149
      %v1184 = vadd.f32 %v1103, %v1149
      %v1185 = vadd.f32 %v1104, %v1149
      %v1186 = vadd.f32 %v1105, %v1154
      %v1187 = vadd.f32 %v1106, %v1154
      %v1188 = vadd.f32 %v1107, %v1154
      %v1189 = vadd.f32 %v1108, %v1159
      %v1190 = vadd.f32 %v1109, %v1159
      %v1191 = vadd.f32 %v1110, %v1159
      %v1192 = vadd.f32 %v1111, %v1164
      %v1193 = vadd.f32 %v1112, %v1164
      %v1194 = vadd.f32 %v1113, %v1164
      %v1195 = vadd.f32 %v1114, %v1169
      %v1196 = vadd.f32 %v1115, %v1169
      %v1197 = vadd.f32 %v1116, %v1169
      %s1198 = scalar_lea.vmem %s6, 72
      %v1199 = vld [vmem:[%s1198] sm:$0xff]
      %v1200 = vld [vmem:[%s1198 + $0x8] sm:$0xff]
      %v1201 = vld [vmem:[%s1198 + $0x10] sm:$0xff]
      %v1202 = vld [vmem:[%s1198 + $0x18] sm:$0xff]
      %v1203 = vld [vmem:[%s1198 + $0x20] sm:$0xff]
      %v1204 = vld [vmem:[%s1198 + $0x28] sm:$0xff]
      %v1205 = vld [vmem:[%s1198 + $0x30] sm:$0xff]
      %v1206 = vld [vmem:[%s1198 + $0x38] sm:$0xff]
      %v1207 = vld [vmem:[%s1198 + $0x40] sm:$0xff]
      %1209 = vset.pattern.permute.xlu0 0
      %1210 = vperm.xlu0 %1209, %v1199
      %v1211 = vpop.permute.xlu0 %1210
      %1214 = vset.pattern.permute.xlu0 0
      %1215 = vperm.xlu0 %1214, %v1200
      %v1216 = vpop.permute.xlu0 %1215
      %1219 = vset.pattern.permute.xlu0 0
      %1220 = vperm.xlu0 %1219, %v1201
      %v1221 = vpop.permute.xlu0 %1220
      %1224 = vset.pattern.permute.xlu0 0
      %1225 = vperm.xlu0 %1224, %v1202
      %v1226 = vpop.permute.xlu0 %1225
      %1229 = vset.pattern.permute.xlu0 0
      %1230 = vperm.xlu0 %1229, %v1203
      %v1231 = vpop.permute.xlu0 %1230
      %1234 = vset.pattern.permute.xlu0 0
      %1235 = vperm.xlu0 %1234, %v1204
      %v1236 = vpop.permute.xlu0 %1235
      %1239 = vset.pattern.permute.xlu0 0
      %1240 = vperm.xlu0 %1239, %v1205
      %v1241 = vpop.permute.xlu0 %1240
      %1244 = vset.pattern.permute.xlu0 0
      %1245 = vperm.xlu0 %1244, %v1206
      %v1246 = vpop.permute.xlu0 %1245
      %1249 = vset.pattern.permute.xlu0 0
      %1250 = vperm.xlu0 %1249, %v1207
      %v1251 = vpop.permute.xlu0 %1250
      %v1253 = vmul.f32 %v1009, %v1211
      %v1254 = vmul.f32 %v1010, %v1211
      %v1255 = vmul.f32 %v1011, %v1211
      %v1256 = vmul.f32 %v1012, %v1216
      %v1257 = vmul.f32 %v1013, %v1216
      %v1258 = vmul.f32 %v1014, %v1216
      %v1259 = vmul.f32 %v1015, %v1221
      %v1260 = vmul.f32 %v1016, %v1221
      %v1261 = vmul.f32 %v1017, %v1221
      %v1262 = vmul.f32 %v1018, %v1226
      %v1263 = vmul.f32 %v1019, %v1226
      %v1264 = vmul.f32 %v1020, %v1226
      %v1265 = vmul.f32 %v1021, %v1231
      %v1266 = vmul.f32 %v1022, %v1231
      %v1267 = vmul.f32 %v1023, %v1231
      %v1268 = vmul.f32 %v1024, %v1236
      %v1269 = vmul.f32 %v1025, %v1236
      %v1270 = vmul.f32 %v1026, %v1236
      %v1271 = vmul.f32 %v1027, %v1241
      %v1272 = vmul.f32 %v1028, %v1241
      %v1273 = vmul.f32 %v1029, %v1241
      %v1274 = vmul.f32 %v1030, %v1246
      %v1275 = vmul.f32 %v1031, %v1246
      %v1276 = vmul.f32 %v1032, %v1246
      %v1277 = vmul.f32 %v1033, %v1251
      %v1278 = vmul.f32 %v1034, %v1251
      %v1279 = vmul.f32 %v1035, %v1251
      %1307 = vrot.lane.b32.xlu0 %v1253, 127
      %v1308 = vpop.permute.xlu0 %1307
      %1309 = vrot.lane.b32.xlu0 %v1254, 127
      %v1310 = vpop.permute.xlu0 %1309
      %1311 = vrot.lane.b32.xlu0 %v1255, 127
      %v1312 = vpop.permute.xlu0 %1311
      %1313 = vrot.lane.b32.xlu0 %v1256, 127
      %v1314 = vpop.permute.xlu0 %1313
      %1315 = vrot.lane.b32.xlu0 %v1257, 127
      %v1316 = vpop.permute.xlu0 %1315
      %1317 = vrot.lane.b32.xlu0 %v1258, 127
      %v1318 = vpop.permute.xlu0 %1317
      %1319 = vrot.lane.b32.xlu0 %v1259, 127
      %v1320 = vpop.permute.xlu0 %1319
      %1321 = vrot.lane.b32.xlu0 %v1260, 127
      %v1322 = vpop.permute.xlu0 %1321
      %1323 = vrot.lane.b32.xlu0 %v1261, 127
      %v1324 = vpop.permute.xlu0 %1323
      %1325 = vrot.lane.b32.xlu0 %v1262, 127
      %v1326 = vpop.permute.xlu0 %1325
      %1327 = vrot.lane.b32.xlu0 %v1263, 127
      %v1328 = vpop.permute.xlu0 %1327
      %1329 = vrot.lane.b32.xlu0 %v1264, 127
      %v1330 = vpop.permute.xlu0 %1329
      %1331 = vrot.lane.b32.xlu0 %v1265, 127
      %v1332 = vpop.permute.xlu0 %1331
      %1333 = vrot.lane.b32.xlu0 %v1266, 127
      %v1334 = vpop.permute.xlu0 %1333
      %1335 = vrot.lane.b32.xlu0 %v1267, 127
      %v1336 = vpop.permute.xlu0 %1335
      %1337 = vrot.lane.b32.xlu0 %v1268, 127
      %v1338 = vpop.permute.xlu0 %1337
      %1339 = vrot.lane.b32.xlu0 %v1269, 127
      %v1340 = vpop.permute.xlu0 %1339
      %1341 = vrot.lane.b32.xlu0 %v1270, 127
      %v1342 = vpop.permute.xlu0 %1341
      %1343 = vrot.lane.b32.xlu0 %v1271, 127
      %v1344 = vpop.permute.xlu0 %1343
      %1345 = vrot.lane.b32.xlu0 %v1272, 127
      %v1346 = vpop.permute.xlu0 %1345
      %1347 = vrot.lane.b32.xlu0 %v1273, 127
      %v1348 = vpop.permute.xlu0 %1347
      %1349 = vrot.lane.b32.xlu0 %v1274, 127
      %v1350 = vpop.permute.xlu0 %1349
      %1351 = vrot.lane.b32.xlu0 %v1275, 127
      %v1352 = vpop.permute.xlu0 %1351
      %1353 = vrot.lane.b32.xlu0 %v1276, 127
      %v1354 = vpop.permute.xlu0 %1353
      %1355 = vrot.lane.b32.xlu0 %v1277, 127
      %v1356 = vpop.permute.xlu0 %1355
      %1357 = vrot.lane.b32.xlu0 %v1278, 127
      %v1358 = vpop.permute.xlu0 %1357
      %1359 = vrot.lane.b32.xlu0 %v1279, 127
      %v1360 = vpop.permute.xlu0 %1359
      %vm1361 = vcmask 1039360
      %v1362 = vsel %vm1361, %v1308, %v1310
      %v1363 = vsel %vm1361, %v1310, %v1312
      %v1364 = vsel %vm1361, %v1314, %v1316
      %v1365 = vsel %vm1361, %v1316, %v1318
      %v1366 = vsel %vm1361, %v1320, %v1322
      %v1367 = vsel %vm1361, %v1322, %v1324
      %v1368 = vsel %vm1361, %v1326, %v1328
      %v1369 = vsel %vm1361, %v1328, %v1330
      %v1370 = vsel %vm1361, %v1332, %v1334
      %v1371 = vsel %vm1361, %v1334, %v1336
      %v1372 = vsel %vm1361, %v1338, %v1340
      %v1373 = vsel %vm1361, %v1340, %v1342
      %v1374 = vsel %vm1361, %v1344, %v1346
      %v1375 = vsel %vm1361, %v1346, %v1348
      %v1376 = vsel %vm1361, %v1350, %v1352
      %v1377 = vsel %vm1361, %v1352, %v1354
      %v1378 = vsel %vm1361, %v1356, %v1358
      %v1379 = vsel %vm1361, %v1358, %v1360
      %v1407 = vadd.f32 %v1171, %v1362
      %v1408 = vadd.f32 %v1172, %v1363
      %v1409 = vadd.f32 %v1173, %v1312
      %v1410 = vadd.f32 %v1174, %v1364
      %v1411 = vadd.f32 %v1175, %v1365
      %v1412 = vadd.f32 %v1176, %v1318
      %v1413 = vadd.f32 %v1177, %v1366
      %v1414 = vadd.f32 %v1178, %v1367
      %v1415 = vadd.f32 %v1179, %v1324
      %v1416 = vadd.f32 %v1180, %v1368
      %v1417 = vadd.f32 %v1181, %v1369
      %v1418 = vadd.f32 %v1182, %v1330
      %v1419 = vadd.f32 %v1183, %v1370
      %v1420 = vadd.f32 %v1184, %v1371
      %v1421 = vadd.f32 %v1185, %v1336
      %v1422 = vadd.f32 %v1186, %v1372
      %v1423 = vadd.f32 %v1187, %v1373
      %v1424 = vadd.f32 %v1188, %v1342
      %v1425 = vadd.f32 %v1189, %v1374
      %v1426 = vadd.f32 %v1190, %v1375
      %v1427 = vadd.f32 %v1191, %v1348
      %v1428 = vadd.f32 %v1192, %v1376
      %v1429 = vadd.f32 %v1193, %v1377
      %v1430 = vadd.f32 %v1194, %v1354
      %v1431 = vadd.f32 %v1195, %v1378
      %v1432 = vadd.f32 %v1196, %v1379
      %v1433 = vadd.f32 %v1197, %v1360
      %s1434 = scalar_lea.vmem %s6, 144
      %v1435 = vld [vmem:[%s1434] sm:$0xff]
      %v1436 = vld [vmem:[%s1434 + $0x8] sm:$0xff]
      %v1437 = vld [vmem:[%s1434 + $0x10] sm:$0xff]
      %v1438 = vld [vmem:[%s1434 + $0x18] sm:$0xff]
      %v1439 = vld [vmem:[%s1434 + $0x20] sm:$0xff]
      %v1440 = vld [vmem:[%s1434 + $0x28] sm:$0xff]
      %v1441 = vld [vmem:[%s1434 + $0x30] sm:$0xff]
      %v1442 = vld [vmem:[%s1434 + $0x38] sm:$0xff]
      %v1443 = vld [vmem:[%s1434 + $0x40] sm:$0xff]
      %1445 = vset.pattern.permute.xlu0 0
      %1446 = vperm.xlu0 %1445, %v1435
      %v1447 = vpop.permute.xlu0 %1446
      %1450 = vset.pattern.permute.xlu0 0
      %1451 = vperm.xlu0 %1450, %v1436
      %v1452 = vpop.permute.xlu0 %1451
      %1455 = vset.pattern.permute.xlu0 0
      %1456 = vperm.xlu0 %1455, %v1437
      %v1457 = vpop.permute.xlu0 %1456
      %1460 = vset.pattern.permute.xlu0 0
      %1461 = vperm.xlu0 %1460, %v1438
      %v1462 = vpop.permute.xlu0 %1461
      %1465 = vset.pattern.permute.xlu0 0
      %1466 = vperm.xlu0 %1465, %v1439
      %v1467 = vpop.permute.xlu0 %1466
      %1470 = vset.pattern.permute.xlu0 0
      %1471 = vperm.xlu0 %1470, %v1440
      %v1472 = vpop.permute.xlu0 %1471
      %1475 = vset.pattern.permute.xlu0 0
      %1476 = vperm.xlu0 %1475, %v1441
      %v1477 = vpop.permute.xlu0 %1476
      %1480 = vset.pattern.permute.xlu0 0
      %1481 = vperm.xlu0 %1480, %v1442
      %v1482 = vpop.permute.xlu0 %1481
      %1485 = vset.pattern.permute.xlu0 0
      %1486 = vperm.xlu0 %1485, %v1443
      %v1487 = vpop.permute.xlu0 %1486
      %v1489 = vmul.f32 %v1009, %v1447
      %v1490 = vmul.f32 %v1010, %v1447
      %v1491 = vmul.f32 %v1011, %v1447
      %v1492 = vmul.f32 %v1012, %v1452
      %v1493 = vmul.f32 %v1013, %v1452
      %v1494 = vmul.f32 %v1014, %v1452
      %v1495 = vmul.f32 %v1015, %v1457
      %v1496 = vmul.f32 %v1016, %v1457
      %v1497 = vmul.f32 %v1017, %v1457
      %v1498 = vmul.f32 %v1018, %v1462
      %v1499 = vmul.f32 %v1019, %v1462
      %v1500 = vmul.f32 %v1020, %v1462
      %v1501 = vmul.f32 %v1021, %v1467
      %v1502 = vmul.f32 %v1022, %v1467
      %v1503 = vmul.f32 %v1023, %v1467
      %v1504 = vmul.f32 %v1024, %v1472
      %v1505 = vmul.f32 %v1025, %v1472
      %v1506 = vmul.f32 %v1026, %v1472
      %v1507 = vmul.f32 %v1027, %v1477
      %v1508 = vmul.f32 %v1028, %v1477
      %v1509 = vmul.f32 %v1029, %v1477
      %v1510 = vmul.f32 %v1030, %v1482
      %v1511 = vmul.f32 %v1031, %v1482
      %v1512 = vmul.f32 %v1032, %v1482
      %v1513 = vmul.f32 %v1033, %v1487
      %v1514 = vmul.f32 %v1034, %v1487
      %v1515 = vmul.f32 %v1035, %v1487
      %1543 = vrot.lane.b32.xlu0 %v1489, 126
      %v1544 = vpop.permute.xlu0 %1543
      %1545 = vrot.lane.b32.xlu0 %v1490, 126
      %v1546 = vpop.permute.xlu0 %1545
      %1547 = vrot.lane.b32.xlu0 %v1491, 126
      %v1548 = vpop.permute.xlu0 %1547
      %1549 = vrot.lane.b32.xlu0 %v1492, 126
      %v1550 = vpop.permute.xlu0 %1549
      %1551 = vrot.lane.b32.xlu0 %v1493, 126
      %v1552 = vpop.permute.xlu0 %1551
      %1553 = vrot.lane.b32.xlu0 %v1494, 126
      %v1554 = vpop.permute.xlu0 %1553
      %1555 = vrot.lane.b32.xlu0 %v1495, 126
      %v1556 = vpop.permute.xlu0 %1555
      %1557 = vrot.lane.b32.xlu0 %v1496, 126
      %v1558 = vpop.permute.xlu0 %1557
      %1559 = vrot.lane.b32.xlu0 %v1497, 126
      %v1560 = vpop.permute.xlu0 %1559
      %1561 = vrot.lane.b32.xlu0 %v1498, 126
      %v1562 = vpop.permute.xlu0 %1561
      %1563 = vrot.lane.b32.xlu0 %v1499, 126
      %v1564 = vpop.permute.xlu0 %1563
      %1565 = vrot.lane.b32.xlu0 %v1500, 126
      %v1566 = vpop.permute.xlu0 %1565
      %1567 = vrot.lane.b32.xlu0 %v1501, 126
      %v1568 = vpop.permute.xlu0 %1567
      %1569 = vrot.lane.b32.xlu0 %v1502, 126
      %v1570 = vpop.permute.xlu0 %1569
      %1571 = vrot.lane.b32.xlu0 %v1503, 126
      %v1572 = vpop.permute.xlu0 %1571
      %1573 = vrot.lane.b32.xlu0 %v1504, 126
      %v1574 = vpop.permute.xlu0 %1573
      %1575 = vrot.lane.b32.xlu0 %v1505, 126
      %v1576 = vpop.permute.xlu0 %1575
      %1577 = vrot.lane.b32.xlu0 %v1506, 126
      %v1578 = vpop.permute.xlu0 %1577
      %1579 = vrot.lane.b32.xlu0 %v1507, 126
      %v1580 = vpop.permute.xlu0 %1579
      %1581 = vrot.lane.b32.xlu0 %v1508, 126
      %v1582 = vpop.permute.xlu0 %1581
      %1583 = vrot.lane.b32.xlu0 %v1509, 126
      %v1584 = vpop.permute.xlu0 %1583
      %1585 = vrot.lane.b32.xlu0 %v1510, 126
      %v1586 = vpop.permute.xlu0 %1585
      %1587 = vrot.lane.b32.xlu0 %v1511, 126
      %v1588 = vpop.permute.xlu0 %1587
      %1589 = vrot.lane.b32.xlu0 %v1512, 126
      %v1590 = vpop.permute.xlu0 %1589
      %1591 = vrot.lane.b32.xlu0 %v1513, 126
      %v1592 = vpop.permute.xlu0 %1591
      %1593 = vrot.lane.b32.xlu0 %v1514, 126
      %v1594 = vpop.permute.xlu0 %1593
      %1595 = vrot.lane.b32.xlu0 %v1515, 126
      %v1596 = vpop.permute.xlu0 %1595
      %vm1597 = vcmask 1031168
      %v1598 = vsel %vm1597, %v1544, %v1546
      %v1599 = vsel %vm1597, %v1546, %v1548
      %v1600 = vsel %vm1597, %v1550, %v1552
      %v1601 = vsel %vm1597, %v1552, %v1554
      %v1602 = vsel %vm1597, %v1556, %v1558
      %v1603 = vsel %vm1597, %v1558, %v1560
      %v1604 = vsel %vm1597, %v1562, %v1564
      %v1605 = vsel %vm1597, %v1564, %v1566
      %v1606 = vsel %vm1597, %v1568, %v1570
      %v1607 = vsel %vm1597, %v1570, %v1572
      %v1608 = vsel %vm1597, %v1574, %v1576
      %v1609 = vsel %vm1597, %v1576, %v1578
      %v1610 = vsel %vm1597, %v1580, %v1582
      %v1611 = vsel %vm1597, %v1582, %v1584
      %v1612 = vsel %vm1597, %v1586, %v1588
      %v1613 = vsel %vm1597, %v1588, %v1590
      %v1614 = vsel %vm1597, %v1592, %v1594
      %v1615 = vsel %vm1597, %v1594, %v1596
      %v1643 = vadd.f32 %v1407, %v1598
      %v1644 = vadd.f32 %v1408, %v1599
      %v1645 = vadd.f32 %v1409, %v1548
      %v1646 = vadd.f32 %v1410, %v1600
      %v1647 = vadd.f32 %v1411, %v1601
      %v1648 = vadd.f32 %v1412, %v1554
      %v1649 = vadd.f32 %v1413, %v1602
      %v1650 = vadd.f32 %v1414, %v1603
      %v1651 = vadd.f32 %v1415, %v1560
      %v1652 = vadd.f32 %v1416, %v1604
      %v1653 = vadd.f32 %v1417, %v1605
      %v1654 = vadd.f32 %v1418, %v1566
      %v1655 = vadd.f32 %v1419, %v1606
      %v1656 = vadd.f32 %v1420, %v1607
      %v1657 = vadd.f32 %v1421, %v1572
      %v1658 = vadd.f32 %v1422, %v1608
      %v1659 = vadd.f32 %v1423, %v1609
      %v1660 = vadd.f32 %v1424, %v1578
      %v1661 = vadd.f32 %v1425, %v1610
      %v1662 = vadd.f32 %v1426, %v1611
      %v1663 = vadd.f32 %v1427, %v1584
      %v1664 = vadd.f32 %v1428, %v1612
      %v1665 = vadd.f32 %v1429, %v1613
      %v1666 = vadd.f32 %v1430, %v1590
      %v1667 = vadd.f32 %v1431, %v1614
      %v1668 = vadd.f32 %v1432, %v1615
      %v1669 = vadd.f32 %v1433, %v1596
      %s1670 = scalar_lea.vmem %s6, 216
      %v1671 = vld [vmem:[%s1670] sm:$0xff]
      %v1672 = vld [vmem:[%s1670 + $0x8] sm:$0xff]
      %v1673 = vld [vmem:[%s1670 + $0x10] sm:$0xff]
      %v1674 = vld [vmem:[%s1670 + $0x18] sm:$0xff]
      %v1675 = vld [vmem:[%s1670 + $0x20] sm:$0xff]
      %v1676 = vld [vmem:[%s1670 + $0x28] sm:$0xff]
      %v1677 = vld [vmem:[%s1670 + $0x30] sm:$0xff]
      %v1678 = vld [vmem:[%s1670 + $0x38] sm:$0xff]
      %v1679 = vld [vmem:[%s1670 + $0x40] sm:$0xff]
      %1681 = vset.pattern.permute.xlu0 0
      %1682 = vperm.xlu0 %1681, %v1671
      %v1683 = vpop.permute.xlu0 %1682
      %1686 = vset.pattern.permute.xlu0 0
      %1687 = vperm.xlu0 %1686, %v1672
      %v1688 = vpop.permute.xlu0 %1687
      %1691 = vset.pattern.permute.xlu0 0
      %1692 = vperm.xlu0 %1691, %v1673
      %v1693 = vpop.permute.xlu0 %1692
      %1696 = vset.pattern.permute.xlu0 0
      %1697 = vperm.xlu0 %1696, %v1674
      %v1698 = vpop.permute.xlu0 %1697
      %1701 = vset.pattern.permute.xlu0 0
      %1702 = vperm.xlu0 %1701, %v1675
      %v1703 = vpop.permute.xlu0 %1702
      %1706 = vset.pattern.permute.xlu0 0
      %1707 = vperm.xlu0 %1706, %v1676
      %v1708 = vpop.permute.xlu0 %1707
      %1711 = vset.pattern.permute.xlu0 0
      %1712 = vperm.xlu0 %1711, %v1677
      %v1713 = vpop.permute.xlu0 %1712
      %1716 = vset.pattern.permute.xlu0 0
      %1717 = vperm.xlu0 %1716, %v1678
      %v1718 = vpop.permute.xlu0 %1717
      %1721 = vset.pattern.permute.xlu0 0
      %1722 = vperm.xlu0 %1721, %v1679
      %v1723 = vpop.permute.xlu0 %1722
      %v1725 = vmul.f32 %v1009, %v1683
      %v1726 = vmul.f32 %v1010, %v1683
      %v1727 = vmul.f32 %v1011, %v1683
      %v1728 = vmul.f32 %v1012, %v1688
      %v1729 = vmul.f32 %v1013, %v1688
      %v1730 = vmul.f32 %v1014, %v1688
      %v1731 = vmul.f32 %v1015, %v1693
      %v1732 = vmul.f32 %v1016, %v1693
      %v1733 = vmul.f32 %v1017, %v1693
      %v1734 = vmul.f32 %v1018, %v1698
      %v1735 = vmul.f32 %v1019, %v1698
      %v1736 = vmul.f32 %v1020, %v1698
      %v1737 = vmul.f32 %v1021, %v1703
      %v1738 = vmul.f32 %v1022, %v1703
      %v1739 = vmul.f32 %v1023, %v1703
      %v1740 = vmul.f32 %v1024, %v1708
      %v1741 = vmul.f32 %v1025, %v1708
      %v1742 = vmul.f32 %v1026, %v1708
      %v1743 = vmul.f32 %v1027, %v1713
      %v1744 = vmul.f32 %v1028, %v1713
      %v1745 = vmul.f32 %v1029, %v1713
      %v1746 = vmul.f32 %v1030, %v1718
      %v1747 = vmul.f32 %v1031, %v1718
      %v1748 = vmul.f32 %v1032, %v1718
      %v1749 = vmul.f32 %v1033, %v1723
      %v1750 = vmul.f32 %v1034, %v1723
      %v1751 = vmul.f32 %v1035, %v1723
      %1779 = vrot.lane.b32.xlu0 %v1725, 118
      %v1780 = vpop.permute.xlu0 %1779
      %1781 = vrot.lane.b32.xlu0 %v1726, 118
      %v1782 = vpop.permute.xlu0 %1781
      %1783 = vrot.lane.b32.xlu0 %v1727, 118
      %v1784 = vpop.permute.xlu0 %1783
      %1785 = vrot.lane.b32.xlu0 %v1728, 118
      %v1786 = vpop.permute.xlu0 %1785
      %1787 = vrot.lane.b32.xlu0 %v1729, 118
      %v1788 = vpop.permute.xlu0 %1787
      %1789 = vrot.lane.b32.xlu0 %v1730, 118
      %v1790 = vpop.permute.xlu0 %1789
      %1791 = vrot.lane.b32.xlu0 %v1731, 118
      %v1792 = vpop.permute.xlu0 %1791
      %1793 = vrot.lane.b32.xlu0 %v1732, 118
      %v1794 = vpop.permute.xlu0 %1793
      %1795 = vrot.lane.b32.xlu0 %v1733, 118
      %v1796 = vpop.permute.xlu0 %1795
      %1797 = vrot.lane.b32.xlu0 %v1734, 118
      %v1798 = vpop.permute.xlu0 %1797
      %1799 = vrot.lane.b32.xlu0 %v1735, 118
      %v1800 = vpop.permute.xlu0 %1799
      %1801 = vrot.lane.b32.xlu0 %v1736, 118
      %v1802 = vpop.permute.xlu0 %1801
      %1803 = vrot.lane.b32.xlu0 %v1737, 118
      %v1804 = vpop.permute.xlu0 %1803
      %1805 = vrot.lane.b32.xlu0 %v1738, 118
      %v1806 = vpop.permute.xlu0 %1805
      %1807 = vrot.lane.b32.xlu0 %v1739, 118
      %v1808 = vpop.permute.xlu0 %1807
      %1809 = vrot.lane.b32.xlu0 %v1740, 118
      %v1810 = vpop.permute.xlu0 %1809
      %1811 = vrot.lane.b32.xlu0 %v1741, 118
      %v1812 = vpop.permute.xlu0 %1811
      %1813 = vrot.lane.b32.xlu0 %v1742, 118
      %v1814 = vpop.permute.xlu0 %1813
      %1815 = vrot.lane.b32.xlu0 %v1743, 118
      %v1816 = vpop.permute.xlu0 %1815
      %1817 = vrot.lane.b32.xlu0 %v1744, 118
      %v1818 = vpop.permute.xlu0 %1817
      %1819 = vrot.lane.b32.xlu0 %v1745, 118
      %v1820 = vpop.permute.xlu0 %1819
      %1821 = vrot.lane.b32.xlu0 %v1746, 118
      %v1822 = vpop.permute.xlu0 %1821
      %1823 = vrot.lane.b32.xlu0 %v1747, 118
      %v1824 = vpop.permute.xlu0 %1823
      %1825 = vrot.lane.b32.xlu0 %v1748, 118
      %v1826 = vpop.permute.xlu0 %1825
      %1827 = vrot.lane.b32.xlu0 %v1749, 118
      %v1828 = vpop.permute.xlu0 %1827
      %1829 = vrot.lane.b32.xlu0 %v1750, 118
      %v1830 = vpop.permute.xlu0 %1829
      %1831 = vrot.lane.b32.xlu0 %v1751, 118
      %v1832 = vpop.permute.xlu0 %1831
      %vm1833 = vcmask 965632
      %v1834 = vsel %vm1833, %v1780, %v1782
      %v1835 = vsel %vm1833, %v1782, %v1784
      %v1836 = vsel %vm1833, %v1786, %v1788
      %v1837 = vsel %vm1833, %v1788, %v1790
      %v1838 = vsel %vm1833, %v1792, %v1794
      %v1839 = vsel %vm1833, %v1794, %v1796
      %v1840 = vsel %vm1833, %v1798, %v1800
      %v1841 = vsel %vm1833, %v1800, %v1802
      %v1842 = vsel %vm1833, %v1804, %v1806
      %v1843 = vsel %vm1833, %v1806, %v1808
      %v1844 = vsel %vm1833, %v1810, %v1812
      %v1845 = vsel %vm1833, %v1812, %v1814
      %v1846 = vsel %vm1833, %v1816, %v1818
      %v1847 = vsel %vm1833, %v1818, %v1820
      %v1848 = vsel %vm1833, %v1822, %v1824
      %v1849 = vsel %vm1833, %v1824, %v1826
      %v1850 = vsel %vm1833, %v1828, %v1830
      %v1851 = vsel %vm1833, %v1830, %v1832
      %v1879 = vadd.f32 %v1643, %v1834
      %v1880 = vadd.f32 %v1644, %v1835
      %v1881 = vadd.f32 %v1645, %v1784
      %v1882 = vadd.f32 %v1646, %v1836
      %v1883 = vadd.f32 %v1647, %v1837
      %v1884 = vadd.f32 %v1648, %v1790
      %v1885 = vadd.f32 %v1649, %v1838
      %v1886 = vadd.f32 %v1650, %v1839
      %v1887 = vadd.f32 %v1651, %v1796
      %v1888 = vadd.f32 %v1652, %v1840
      %v1889 = vadd.f32 %v1653, %v1841
      %v1890 = vadd.f32 %v1654, %v1802
      %v1891 = vadd.f32 %v1655, %v1842
      %v1892 = vadd.f32 %v1656, %v1843
      %v1893 = vadd.f32 %v1657, %v1808
      %v1894 = vadd.f32 %v1658, %v1844
      %v1895 = vadd.f32 %v1659, %v1845
      %v1896 = vadd.f32 %v1660, %v1814
      %v1897 = vadd.f32 %v1661, %v1846
      %v1898 = vadd.f32 %v1662, %v1847
      %v1899 = vadd.f32 %v1663, %v1820
      %v1900 = vadd.f32 %v1664, %v1848
      %v1901 = vadd.f32 %v1665, %v1849
      %v1902 = vadd.f32 %v1666, %v1826
      %v1903 = vadd.f32 %v1667, %v1850
      %v1904 = vadd.f32 %v1668, %v1851
      %v1905 = vadd.f32 %v1669, %v1832
      %s1906 = scalar_lea.vmem %s6, 288
      %v1907 = vld [vmem:[%s1906] sm:$0xff]
      %v1908 = vld [vmem:[%s1906 + $0x8] sm:$0xff]
      %v1909 = vld [vmem:[%s1906 + $0x10] sm:$0xff]
      %v1910 = vld [vmem:[%s1906 + $0x18] sm:$0xff]
      %v1911 = vld [vmem:[%s1906 + $0x20] sm:$0xff]
      %v1912 = vld [vmem:[%s1906 + $0x28] sm:$0xff]
      %v1913 = vld [vmem:[%s1906 + $0x30] sm:$0xff]
      %v1914 = vld [vmem:[%s1906 + $0x38] sm:$0xff]
      %v1915 = vld [vmem:[%s1906 + $0x40] sm:$0xff]
      %1917 = vset.pattern.permute.xlu0 0
      %1918 = vperm.xlu0 %1917, %v1907
      %v1919 = vpop.permute.xlu0 %1918
      %1922 = vset.pattern.permute.xlu0 0
      %1923 = vperm.xlu0 %1922, %v1908
      %v1924 = vpop.permute.xlu0 %1923
      %1927 = vset.pattern.permute.xlu0 0
      %1928 = vperm.xlu0 %1927, %v1909
      %v1929 = vpop.permute.xlu0 %1928
      %1932 = vset.pattern.permute.xlu0 0
      %1933 = vperm.xlu0 %1932, %v1910
      %v1934 = vpop.permute.xlu0 %1933
      %1937 = vset.pattern.permute.xlu0 0
      %1938 = vperm.xlu0 %1937, %v1911
      %v1939 = vpop.permute.xlu0 %1938
      %1942 = vset.pattern.permute.xlu0 0
      %1943 = vperm.xlu0 %1942, %v1912
      %v1944 = vpop.permute.xlu0 %1943
      %1947 = vset.pattern.permute.xlu0 0
      %1948 = vperm.xlu0 %1947, %v1913
      %v1949 = vpop.permute.xlu0 %1948
      %1952 = vset.pattern.permute.xlu0 0
      %1953 = vperm.xlu0 %1952, %v1914
      %v1954 = vpop.permute.xlu0 %1953
      %1957 = vset.pattern.permute.xlu0 0
      %1958 = vperm.xlu0 %1957, %v1915
      %v1959 = vpop.permute.xlu0 %1958
      %v1961 = vmul.f32 %v1009, %v1919
      %v1962 = vmul.f32 %v1010, %v1919
      %v1963 = vmul.f32 %v1011, %v1919
      %v1964 = vmul.f32 %v1012, %v1924
      %v1965 = vmul.f32 %v1013, %v1924
      %v1966 = vmul.f32 %v1014, %v1924
      %v1967 = vmul.f32 %v1015, %v1929
      %v1968 = vmul.f32 %v1016, %v1929
      %v1969 = vmul.f32 %v1017, %v1929
      %v1970 = vmul.f32 %v1018, %v1934
      %v1971 = vmul.f32 %v1019, %v1934
      %v1972 = vmul.f32 %v1020, %v1934
      %v1973 = vmul.f32 %v1021, %v1939
      %v1974 = vmul.f32 %v1022, %v1939
      %v1975 = vmul.f32 %v1023, %v1939
      %v1976 = vmul.f32 %v1024, %v1944
      %v1977 = vmul.f32 %v1025, %v1944
      %v1978 = vmul.f32 %v1026, %v1944
      %v1979 = vmul.f32 %v1027, %v1949
      %v1980 = vmul.f32 %v1028, %v1949
      %v1981 = vmul.f32 %v1029, %v1949
      %v1982 = vmul.f32 %v1030, %v1954
      %v1983 = vmul.f32 %v1031, %v1954
      %v1984 = vmul.f32 %v1032, %v1954
      %v1985 = vmul.f32 %v1033, %v1959
      %v1986 = vmul.f32 %v1034, %v1959
      %v1987 = vmul.f32 %v1035, %v1959
      %2015 = vrot.lane.b32.xlu0 %v1961, 117
      %v2016 = vpop.permute.xlu0 %2015
      %2017 = vrot.lane.b32.xlu0 %v1962, 117
      %v2018 = vpop.permute.xlu0 %2017
      %2019 = vrot.lane.b32.xlu0 %v1963, 117
      %v2020 = vpop.permute.xlu0 %2019
      %2021 = vrot.lane.b32.xlu0 %v1964, 117
      %v2022 = vpop.permute.xlu0 %2021
      %2023 = vrot.lane.b32.xlu0 %v1965, 117
      %v2024 = vpop.permute.xlu0 %2023
      %2025 = vrot.lane.b32.xlu0 %v1966, 117
      %v2026 = vpop.permute.xlu0 %2025
      %2027 = vrot.lane.b32.xlu0 %v1967, 117
      %v2028 = vpop.permute.xlu0 %2027
      %2029 = vrot.lane.b32.xlu0 %v1968, 117
      %v2030 = vpop.permute.xlu0 %2029
      %2031 = vrot.lane.b32.xlu0 %v1969, 117
      %v2032 = vpop.permute.xlu0 %2031
      %2033 = vrot.lane.b32.xlu0 %v1970, 117
      %v2034 = vpop.permute.xlu0 %2033
      %2035 = vrot.lane.b32.xlu0 %v1971, 117
      %v2036 = vpop.permute.xlu0 %2035
      %2037 = vrot.lane.b32.xlu0 %v1972, 117
      %v2038 = vpop.permute.xlu0 %2037
      %2039 = vrot.lane.b32.xlu0 %v1973, 117
      %v2040 = vpop.permute.xlu0 %2039
      %2041 = vrot.lane.b32.xlu0 %v1974, 117
      %v2042 = vpop.permute.xlu0 %2041
      %2043 = vrot.lane.b32.xlu0 %v1975, 117
      %v2044 = vpop.permute.xlu0 %2043
      %2045 = vrot.lane.b32.xlu0 %v1976, 117
      %v2046 = vpop.permute.xlu0 %2045
      %2047 = vrot.lane.b32.xlu0 %v1977, 117
      %v2048 = vpop.permute.xlu0 %2047
      %2049 = vrot.lane.b32.xlu0 %v1978, 117
      %v2050 = vpop.permute.xlu0 %2049
      %2051 = vrot.lane.b32.xlu0 %v1979, 117
      %v2052 = vpop.permute.xlu0 %2051
      %2053 = vrot.lane.b32.xlu0 %v1980, 117
      %v2054 = vpop.permute.xlu0 %2053
      %2055 = vrot.lane.b32.xlu0 %v1981, 117
      %v2056 = vpop.permute.xlu0 %2055
      %2057 = vrot.lane.b32.xlu0 %v1982, 117
      %v2058 = vpop.permute.xlu0 %2057
      %2059 = vrot.lane.b32.xlu0 %v1983, 117
      %v2060 = vpop.permute.xlu0 %2059
      %2061 = vrot.lane.b32.xlu0 %v1984, 117
      %v2062 = vpop.permute.xlu0 %2061
      %2063 = vrot.lane.b32.xlu0 %v1985, 117
      %v2064 = vpop.permute.xlu0 %2063
      %2065 = vrot.lane.b32.xlu0 %v1986, 117
      %v2066 = vpop.permute.xlu0 %2065
      %2067 = vrot.lane.b32.xlu0 %v1987, 117
      %v2068 = vpop.permute.xlu0 %2067
      %vm2069 = vcmask 957440
      %v2070 = vsel %vm2069, %v2016, %v2018
      %v2071 = vsel %vm2069, %v2018, %v2020
      %v2072 = vsel %vm2069, %v2022, %v2024
      %v2073 = vsel %vm2069, %v2024, %v2026
      %v2074 = vsel %vm2069, %v2028, %v2030
      %v2075 = vsel %vm2069, %v2030, %v2032
      %v2076 = vsel %vm2069, %v2034, %v2036
      %v2077 = vsel %vm2069, %v2036, %v2038
      %v2078 = vsel %vm2069, %v2040, %v2042
      %v2079 = vsel %vm2069, %v2042, %v2044
      %v2080 = vsel %vm2069, %v2046, %v2048
      %v2081 = vsel %vm2069, %v2048, %v2050
      %v2082 = vsel %vm2069, %v2052, %v2054
      %v2083 = vsel %vm2069, %v2054, %v2056
      %v2084 = vsel %vm2069, %v2058, %v2060
      %v2085 = vsel %vm2069, %v2060, %v2062
      %v2086 = vsel %vm2069, %v2064, %v2066
      %v2087 = vsel %vm2069, %v2066, %v2068
      %v2115 = vadd.f32 %v1879, %v2070
      %v2116 = vadd.f32 %v1880, %v2071
      %v2117 = vadd.f32 %v1881, %v2020
      %v2118 = vadd.f32 %v1882, %v2072
      %v2119 = vadd.f32 %v1883, %v2073
      %v2120 = vadd.f32 %v1884, %v2026
      %v2121 = vadd.f32 %v1885, %v2074
      %v2122 = vadd.f32 %v1886, %v2075
      %v2123 = vadd.f32 %v1887, %v2032
      %v2124 = vadd.f32 %v1888, %v2076
      %v2125 = vadd.f32 %v1889, %v2077
      %v2126 = vadd.f32 %v1890, %v2038
      %v2127 = vadd.f32 %v1891, %v2078
      %v2128 = vadd.f32 %v1892, %v2079
      %v2129 = vadd.f32 %v1893, %v2044
      %v2130 = vadd.f32 %v1894, %v2080
      %v2131 = vadd.f32 %v1895, %v2081
      %v2132 = vadd.f32 %v1896, %v2050
      %v2133 = vadd.f32 %v1897, %v2082
      %v2134 = vadd.f32 %v1898, %v2083
      %v2135 = vadd.f32 %v1899, %v2056
      %v2136 = vadd.f32 %v1900, %v2084
      %v2137 = vadd.f32 %v1901, %v2085
      %v2138 = vadd.f32 %v1902, %v2062
      %v2139 = vadd.f32 %v1903, %v2086
      %v2140 = vadd.f32 %v1904, %v2087
      %v2141 = vadd.f32 %v1905, %v2068
      %s2142 = scalar_lea.vmem %s6, 360
      %v2143 = vld [vmem:[%s2142] sm:$0xff]
      %v2144 = vld [vmem:[%s2142 + $0x8] sm:$0xff]
      %v2145 = vld [vmem:[%s2142 + $0x10] sm:$0xff]
      %v2146 = vld [vmem:[%s2142 + $0x18] sm:$0xff]
      %v2147 = vld [vmem:[%s2142 + $0x20] sm:$0xff]
      %v2148 = vld [vmem:[%s2142 + $0x28] sm:$0xff]
      %v2149 = vld [vmem:[%s2142 + $0x30] sm:$0xff]
      %v2150 = vld [vmem:[%s2142 + $0x38] sm:$0xff]
      %v2151 = vld [vmem:[%s2142 + $0x40] sm:$0xff]
      %2153 = vset.pattern.permute.xlu0 0
      %2154 = vperm.xlu0 %2153, %v2143
      %v2155 = vpop.permute.xlu0 %2154
      %2158 = vset.pattern.permute.xlu0 0
      %2159 = vperm.xlu0 %2158, %v2144
      %v2160 = vpop.permute.xlu0 %2159
      %2163 = vset.pattern.permute.xlu0 0
      %2164 = vperm.xlu0 %2163, %v2145
      %v2165 = vpop.permute.xlu0 %2164
      %2168 = vset.pattern.permute.xlu0 0
      %2169 = vperm.xlu0 %2168, %v2146
      %v2170 = vpop.permute.xlu0 %2169
      %2173 = vset.pattern.permute.xlu0 0
      %2174 = vperm.xlu0 %2173, %v2147
      %v2175 = vpop.permute.xlu0 %2174
      %2178 = vset.pattern.permute.xlu0 0
      %2179 = vperm.xlu0 %2178, %v2148
      %v2180 = vpop.permute.xlu0 %2179
      %2183 = vset.pattern.permute.xlu0 0
      %2184 = vperm.xlu0 %2183, %v2149
      %v2185 = vpop.permute.xlu0 %2184
      %2188 = vset.pattern.permute.xlu0 0
      %2189 = vperm.xlu0 %2188, %v2150
      %v2190 = vpop.permute.xlu0 %2189
      %2193 = vset.pattern.permute.xlu0 0
      %2194 = vperm.xlu0 %2193, %v2151
      %v2195 = vpop.permute.xlu0 %2194
      %v2197 = vmul.f32 %v1009, %v2155
      %v2198 = vmul.f32 %v1010, %v2155
      %v2199 = vmul.f32 %v1011, %v2155
      %v2200 = vmul.f32 %v1012, %v2160
      %v2201 = vmul.f32 %v1013, %v2160
      %v2202 = vmul.f32 %v1014, %v2160
      %v2203 = vmul.f32 %v1015, %v2165
      %v2204 = vmul.f32 %v1016, %v2165
      %v2205 = vmul.f32 %v1017, %v2165
      %v2206 = vmul.f32 %v1018, %v2170
      %v2207 = vmul.f32 %v1019, %v2170
      %v2208 = vmul.f32 %v1020, %v2170
      %v2209 = vmul.f32 %v1021, %v2175
      %v2210 = vmul.f32 %v1022, %v2175
      %v2211 = vmul.f32 %v1023, %v2175
      %v2212 = vmul.f32 %v1024, %v2180
      %v2213 = vmul.f32 %v1025, %v2180
      %v2214 = vmul.f32 %v1026, %v2180
      %v2215 = vmul.f32 %v1027, %v2185
      %v2216 = vmul.f32 %v1028, %v2185
      %v2217 = vmul.f32 %v1029, %v2185
      %v2218 = vmul.f32 %v1030, %v2190
      %v2219 = vmul.f32 %v1031, %v2190
      %v2220 = vmul.f32 %v1032, %v2190
      %v2221 = vmul.f32 %v1033, %v2195
      %v2222 = vmul.f32 %v1034, %v2195
      %v2223 = vmul.f32 %v1035, %v2195
      %2251 = vrot.lane.b32.xlu0 %v2197, 116
      %v2252 = vpop.permute.xlu0 %2251
      %2253 = vrot.lane.b32.xlu0 %v2198, 116
      %v2254 = vpop.permute.xlu0 %2253
      %2255 = vrot.lane.b32.xlu0 %v2199, 116
      %v2256 = vpop.permute.xlu0 %2255
      %2257 = vrot.lane.b32.xlu0 %v2200, 116
      %v2258 = vpop.permute.xlu0 %2257
      %2259 = vrot.lane.b32.xlu0 %v2201, 116
      %v2260 = vpop.permute.xlu0 %2259
      %2261 = vrot.lane.b32.xlu0 %v2202, 116
      %v2262 = vpop.permute.xlu0 %2261
      %2263 = vrot.lane.b32.xlu0 %v2203, 116
      %v2264 = vpop.permute.xlu0 %2263
      %2265 = vrot.lane.b32.xlu0 %v2204, 116
      %v2266 = vpop.permute.xlu0 %2265
      %2267 = vrot.lane.b32.xlu0 %v2205, 116
      %v2268 = vpop.permute.xlu0 %2267
      %2269 = vrot.lane.b32.xlu0 %v2206, 116
      %v2270 = vpop.permute.xlu0 %2269
      %2271 = vrot.lane.b32.xlu0 %v2207, 116
      %v2272 = vpop.permute.xlu0 %2271
      %2273 = vrot.lane.b32.xlu0 %v2208, 116
      %v2274 = vpop.permute.xlu0 %2273
      %2275 = vrot.lane.b32.xlu0 %v2209, 116
      %v2276 = vpop.permute.xlu0 %2275
      %2277 = vrot.lane.b32.xlu0 %v2210, 116
      %v2278 = vpop.permute.xlu0 %2277
      %2279 = vrot.lane.b32.xlu0 %v2211, 116
      %v2280 = vpop.permute.xlu0 %2279
      %2281 = vrot.lane.b32.xlu0 %v2212, 116
      %v2282 = vpop.permute.xlu0 %2281
      %2283 = vrot.lane.b32.xlu0 %v2213, 116
      %v2284 = vpop.permute.xlu0 %2283
      %2285 = vrot.lane.b32.xlu0 %v2214, 116
      %v2286 = vpop.permute.xlu0 %2285
      %2287 = vrot.lane.b32.xlu0 %v2215, 116
      %v2288 = vpop.permute.xlu0 %2287
      %2289 = vrot.lane.b32.xlu0 %v2216, 116
      %v2290 = vpop.permute.xlu0 %2289
      %2291 = vrot.lane.b32.xlu0 %v2217, 116
      %v2292 = vpop.permute.xlu0 %2291
      %2293 = vrot.lane.b32.xlu0 %v2218, 116
      %v2294 = vpop.permute.xlu0 %2293
      %2295 = vrot.lane.b32.xlu0 %v2219, 116
      %v2296 = vpop.permute.xlu0 %2295
      %2297 = vrot.lane.b32.xlu0 %v2220, 116
      %v2298 = vpop.permute.xlu0 %2297
      %2299 = vrot.lane.b32.xlu0 %v2221, 116
      %v2300 = vpop.permute.xlu0 %2299
      %2301 = vrot.lane.b32.xlu0 %v2222, 116
      %v2302 = vpop.permute.xlu0 %2301
      %2303 = vrot.lane.b32.xlu0 %v2223, 116
      %v2304 = vpop.permute.xlu0 %2303
      %vm2305 = vcmask 949248
      %v2306 = vsel %vm2305, %v2252, %v2254
      %v2307 = vsel %vm2305, %v2254, %v2256
      %v2308 = vsel %vm2305, %v2258, %v2260
      %v2309 = vsel %vm2305, %v2260, %v2262
      %v2310 = vsel %vm2305, %v2264, %v2266
      %v2311 = vsel %vm2305, %v2266, %v2268
      %v2312 = vsel %vm2305, %v2270, %v2272
      %v2313 = vsel %vm2305, %v2272, %v2274
      %v2314 = vsel %vm2305, %v2276, %v2278
      %v2315 = vsel %vm2305, %v2278, %v2280
      %v2316 = vsel %vm2305, %v2282, %v2284
      %v2317 = vsel %vm2305, %v2284, %v2286
      %v2318 = vsel %vm2305, %v2288, %v2290
      %v2319 = vsel %vm2305, %v2290, %v2292
      %v2320 = vsel %vm2305, %v2294, %v2296
      %v2321 = vsel %vm2305, %v2296, %v2298
      %v2322 = vsel %vm2305, %v2300, %v2302
      %v2323 = vsel %vm2305, %v2302, %v2304
      %v2351 = vadd.f32 %v2115, %v2306
      %v2352 = vadd.f32 %v2116, %v2307
      %v2353 = vadd.f32 %v2117, %v2256
      %v2354 = vadd.f32 %v2118, %v2308
      %v2355 = vadd.f32 %v2119, %v2309
      %v2356 = vadd.f32 %v2120, %v2262
      %v2357 = vadd.f32 %v2121, %v2310
      %v2358 = vadd.f32 %v2122, %v2311
      %v2359 = vadd.f32 %v2123, %v2268
      %v2360 = vadd.f32 %v2124, %v2312
      %v2361 = vadd.f32 %v2125, %v2313
      %v2362 = vadd.f32 %v2126, %v2274
      %v2363 = vadd.f32 %v2127, %v2314
      %v2364 = vadd.f32 %v2128, %v2315
      %v2365 = vadd.f32 %v2129, %v2280
      %v2366 = vadd.f32 %v2130, %v2316
      %v2367 = vadd.f32 %v2131, %v2317
      %v2368 = vadd.f32 %v2132, %v2286
      %v2369 = vadd.f32 %v2133, %v2318
      %v2370 = vadd.f32 %v2134, %v2319
      %v2371 = vadd.f32 %v2135, %v2292
      %v2372 = vadd.f32 %v2136, %v2320
      %v2373 = vadd.f32 %v2137, %v2321
      %v2374 = vadd.f32 %v2138, %v2298
      %v2375 = vadd.f32 %v2139, %v2322
      %v2376 = vadd.f32 %v2140, %v2323
      %v2377 = vadd.f32 %v2141, %v2304
      %s2378 = scalar_lea.vmem %s6, 432
      %v2379 = vld [vmem:[%s2378] sm:$0xff]
      %v2380 = vld [vmem:[%s2378 + $0x8] sm:$0xff]
      %v2381 = vld [vmem:[%s2378 + $0x10] sm:$0xff]
      %v2382 = vld [vmem:[%s2378 + $0x18] sm:$0xff]
      %v2383 = vld [vmem:[%s2378 + $0x20] sm:$0xff]
      %v2384 = vld [vmem:[%s2378 + $0x28] sm:$0xff]
      %v2385 = vld [vmem:[%s2378 + $0x30] sm:$0xff]
      %v2386 = vld [vmem:[%s2378 + $0x38] sm:$0xff]
      %v2387 = vld [vmem:[%s2378 + $0x40] sm:$0xff]
      %2389 = vset.pattern.permute.xlu0 0
      %2390 = vperm.xlu0 %2389, %v2379
      %v2391 = vpop.permute.xlu0 %2390
      %2394 = vset.pattern.permute.xlu0 0
      %2395 = vperm.xlu0 %2394, %v2380
      %v2396 = vpop.permute.xlu0 %2395
      %2399 = vset.pattern.permute.xlu0 0
      %2400 = vperm.xlu0 %2399, %v2381
      %v2401 = vpop.permute.xlu0 %2400
      %2404 = vset.pattern.permute.xlu0 0
      %2405 = vperm.xlu0 %2404, %v2382
      %v2406 = vpop.permute.xlu0 %2405
      %2409 = vset.pattern.permute.xlu0 0
      %2410 = vperm.xlu0 %2409, %v2383
      %v2411 = vpop.permute.xlu0 %2410
      %2414 = vset.pattern.permute.xlu0 0
      %2415 = vperm.xlu0 %2414, %v2384
      %v2416 = vpop.permute.xlu0 %2415
      %2419 = vset.pattern.permute.xlu0 0
      %2420 = vperm.xlu0 %2419, %v2385
      %v2421 = vpop.permute.xlu0 %2420
      %2424 = vset.pattern.permute.xlu0 0
      %2425 = vperm.xlu0 %2424, %v2386
      %v2426 = vpop.permute.xlu0 %2425
      %2429 = vset.pattern.permute.xlu0 0
      %2430 = vperm.xlu0 %2429, %v2387
      %v2431 = vpop.permute.xlu0 %2430
      %v2433 = vmul.f32 %v1009, %v2391
      %v2434 = vmul.f32 %v1010, %v2391
      %v2435 = vmul.f32 %v1011, %v2391
      %v2436 = vmul.f32 %v1012, %v2396
      %v2437 = vmul.f32 %v1013, %v2396
      %v2438 = vmul.f32 %v1014, %v2396
      %v2439 = vmul.f32 %v1015, %v2401
      %v2440 = vmul.f32 %v1016, %v2401
      %v2441 = vmul.f32 %v1017, %v2401
      %v2442 = vmul.f32 %v1018, %v2406
      %v2443 = vmul.f32 %v1019, %v2406
      %v2444 = vmul.f32 %v1020, %v2406
      %v2445 = vmul.f32 %v1021, %v2411
      %v2446 = vmul.f32 %v1022, %v2411
      %v2447 = vmul.f32 %v1023, %v2411
      %v2448 = vmul.f32 %v1024, %v2416
      %v2449 = vmul.f32 %v1025, %v2416
      %v2450 = vmul.f32 %v1026, %v2416
      %v2451 = vmul.f32 %v1027, %v2421
      %v2452 = vmul.f32 %v1028, %v2421
      %v2453 = vmul.f32 %v1029, %v2421
      %v2454 = vmul.f32 %v1030, %v2426
      %v2455 = vmul.f32 %v1031, %v2426
      %v2456 = vmul.f32 %v1032, %v2426
      %v2457 = vmul.f32 %v1033, %v2431
      %v2458 = vmul.f32 %v1034, %v2431
      %v2459 = vmul.f32 %v1035, %v2431
      %2487 = vrot.lane.b32.xlu0 %v2433, 108
      %v2488 = vpop.permute.xlu0 %2487
      %2489 = vrot.lane.b32.xlu0 %v2434, 108
      %v2490 = vpop.permute.xlu0 %2489
      %2491 = vrot.lane.b32.xlu0 %v2435, 108
      %v2492 = vpop.permute.xlu0 %2491
      %2493 = vrot.lane.b32.xlu0 %v2436, 108
      %v2494 = vpop.permute.xlu0 %2493
      %2495 = vrot.lane.b32.xlu0 %v2437, 108
      %v2496 = vpop.permute.xlu0 %2495
      %2497 = vrot.lane.b32.xlu0 %v2438, 108
      %v2498 = vpop.permute.xlu0 %2497
      %2499 = vrot.lane.b32.xlu0 %v2439, 108
      %v2500 = vpop.permute.xlu0 %2499
      %2501 = vrot.lane.b32.xlu0 %v2440, 108
      %v2502 = vpop.permute.xlu0 %2501
      %2503 = vrot.lane.b32.xlu0 %v2441, 108
      %v2504 = vpop.permute.xlu0 %2503
      %2505 = vrot.lane.b32.xlu0 %v2442, 108
      %v2506 = vpop.permute.xlu0 %2505
      %2507 = vrot.lane.b32.xlu0 %v2443, 108
      %v2508 = vpop.permute.xlu0 %2507
      %2509 = vrot.lane.b32.xlu0 %v2444, 108
      %v2510 = vpop.permute.xlu0 %2509
      %2511 = vrot.lane.b32.xlu0 %v2445, 108
      %v2512 = vpop.permute.xlu0 %2511
      %2513 = vrot.lane.b32.xlu0 %v2446, 108
      %v2514 = vpop.permute.xlu0 %2513
      %2515 = vrot.lane.b32.xlu0 %v2447, 108
      %v2516 = vpop.permute.xlu0 %2515
      %2517 = vrot.lane.b32.xlu0 %v2448, 108
      %v2518 = vpop.permute.xlu0 %2517
      %2519 = vrot.lane.b32.xlu0 %v2449, 108
      %v2520 = vpop.permute.xlu0 %2519
      %2521 = vrot.lane.b32.xlu0 %v2450, 108
      %v2522 = vpop.permute.xlu0 %2521
      %2523 = vrot.lane.b32.xlu0 %v2451, 108
      %v2524 = vpop.permute.xlu0 %2523
      %2525 = vrot.lane.b32.xlu0 %v2452, 108
      %v2526 = vpop.permute.xlu0 %2525
      %2527 = vrot.lane.b32.xlu0 %v2453, 108
      %v2528 = vpop.permute.xlu0 %2527
      %2529 = vrot.lane.b32.xlu0 %v2454, 108
      %v2530 = vpop.permute.xlu0 %2529
      %2531 = vrot.lane.b32.xlu0 %v2455, 108
      %v2532 = vpop.permute.xlu0 %2531
      %2533 = vrot.lane.b32.xlu0 %v2456, 108
      %v2534 = vpop.permute.xlu0 %2533
      %2535 = vrot.lane.b32.xlu0 %v2457, 108
      %v2536 = vpop.permute.xlu0 %2535
      %2537 = vrot.lane.b32.xlu0 %v2458, 108
      %v2538 = vpop.permute.xlu0 %2537
      %2539 = vrot.lane.b32.xlu0 %v2459, 108
      %v2540 = vpop.permute.xlu0 %2539
      %vm2541 = vcmask 883712
      %v2542 = vsel %vm2541, %v2488, %v2490
      %v2543 = vsel %vm2541, %v2490, %v2492
      %v2544 = vsel %vm2541, %v2494, %v2496
      %v2545 = vsel %vm2541, %v2496, %v2498
      %v2546 = vsel %vm2541, %v2500, %v2502
      %v2547 = vsel %vm2541, %v2502, %v2504
      %v2548 = vsel %vm2541, %v2506, %v2508
      %v2549 = vsel %vm2541, %v2508, %v2510
      %v2550 = vsel %vm2541, %v2512, %v2514
      %v2551 = vsel %vm2541, %v2514, %v2516
      %v2552 = vsel %vm2541, %v2518, %v2520
      %v2553 = vsel %vm2541, %v2520, %v2522
      %v2554 = vsel %vm2541, %v2524, %v2526
      %v2555 = vsel %vm2541, %v2526, %v2528
      %v2556 = vsel %vm2541, %v2530, %v2532
      %v2557 = vsel %vm2541, %v2532, %v2534
      %v2558 = vsel %vm2541, %v2536, %v2538
      %v2559 = vsel %vm2541, %v2538, %v2540
      %v2587 = vadd.f32 %v2351, %v2542
      %v2588 = vadd.f32 %v2352, %v2543
      %v2589 = vadd.f32 %v2353, %v2492
      %v2590 = vadd.f32 %v2354, %v2544
      %v2591 = vadd.f32 %v2355, %v2545
      %v2592 = vadd.f32 %v2356, %v2498
      %v2593 = vadd.f32 %v2357, %v2546
      %v2594 = vadd.f32 %v2358, %v2547
      %v2595 = vadd.f32 %v2359, %v2504
      %v2596 = vadd.f32 %v2360, %v2548
      %v2597 = vadd.f32 %v2361, %v2549
      %v2598 = vadd.f32 %v2362, %v2510
      %v2599 = vadd.f32 %v2363, %v2550
      %v2600 = vadd.f32 %v2364, %v2551
      %v2601 = vadd.f32 %v2365, %v2516
      %v2602 = vadd.f32 %v2366, %v2552
      %v2603 = vadd.f32 %v2367, %v2553
      %v2604 = vadd.f32 %v2368, %v2522
      %v2605 = vadd.f32 %v2369, %v2554
      %v2606 = vadd.f32 %v2370, %v2555
      %v2607 = vadd.f32 %v2371, %v2528
      %v2608 = vadd.f32 %v2372, %v2556
      %v2609 = vadd.f32 %v2373, %v2557
      %v2610 = vadd.f32 %v2374, %v2534
      %v2611 = vadd.f32 %v2375, %v2558
      %v2612 = vadd.f32 %v2376, %v2559
      %v2613 = vadd.f32 %v2377, %v2540
      %s2614 = scalar_lea.vmem %s6, 504
      %v2615 = vld [vmem:[%s2614] sm:$0xff]
      %v2616 = vld [vmem:[%s2614 + $0x8] sm:$0xff]
      %v2617 = vld [vmem:[%s2614 + $0x10] sm:$0xff]
      %v2618 = vld [vmem:[%s2614 + $0x18] sm:$0xff]
      %v2619 = vld [vmem:[%s2614 + $0x20] sm:$0xff]
      %v2620 = vld [vmem:[%s2614 + $0x28] sm:$0xff]
      %v2621 = vld [vmem:[%s2614 + $0x30] sm:$0xff]
      %v2622 = vld [vmem:[%s2614 + $0x38] sm:$0xff]
      %v2623 = vld [vmem:[%s2614 + $0x40] sm:$0xff]
      %2625 = vset.pattern.permute.xlu0 0
      %2626 = vperm.xlu0 %2625, %v2615
      %v2627 = vpop.permute.xlu0 %2626
      %2630 = vset.pattern.permute.xlu0 0
      %2631 = vperm.xlu0 %2630, %v2616
      %v2632 = vpop.permute.xlu0 %2631
      %2635 = vset.pattern.permute.xlu0 0
      %2636 = vperm.xlu0 %2635, %v2617
      %v2637 = vpop.permute.xlu0 %2636
      %2640 = vset.pattern.permute.xlu0 0
      %2641 = vperm.xlu0 %2640, %v2618
      %v2642 = vpop.permute.xlu0 %2641
      %2645 = vset.pattern.permute.xlu0 0
      %2646 = vperm.xlu0 %2645, %v2619
      %v2647 = vpop.permute.xlu0 %2646
      %2650 = vset.pattern.permute.xlu0 0
      %2651 = vperm.xlu0 %2650, %v2620
      %v2652 = vpop.permute.xlu0 %2651
      %2655 = vset.pattern.permute.xlu0 0
      %2656 = vperm.xlu0 %2655, %v2621
      %v2657 = vpop.permute.xlu0 %2656
      %2660 = vset.pattern.permute.xlu0 0
      %2661 = vperm.xlu0 %2660, %v2622
      %v2662 = vpop.permute.xlu0 %2661
      %2665 = vset.pattern.permute.xlu0 0
      %2666 = vperm.xlu0 %2665, %v2623
      %v2667 = vpop.permute.xlu0 %2666
      %v2669 = vmul.f32 %v1009, %v2627
      %v2670 = vmul.f32 %v1010, %v2627
      %v2671 = vmul.f32 %v1011, %v2627
      %v2672 = vmul.f32 %v1012, %v2632
      %v2673 = vmul.f32 %v1013, %v2632
      %v2674 = vmul.f32 %v1014, %v2632
      %v2675 = vmul.f32 %v1015, %v2637
      %v2676 = vmul.f32 %v1016, %v2637
      %v2677 = vmul.f32 %v1017, %v2637
      %v2678 = vmul.f32 %v1018, %v2642
      %v2679 = vmul.f32 %v1019, %v2642
      %v2680 = vmul.f32 %v1020, %v2642
      %v2681 = vmul.f32 %v1021, %v2647
      %v2682 = vmul.f32 %v1022, %v2647
      %v2683 = vmul.f32 %v1023, %v2647
      %v2684 = vmul.f32 %v1024, %v2652
      %v2685 = vmul.f32 %v1025, %v2652
      %v2686 = vmul.f32 %v1026, %v2652
      %v2687 = vmul.f32 %v1027, %v2657
      %v2688 = vmul.f32 %v1028, %v2657
      %v2689 = vmul.f32 %v1029, %v2657
      %v2690 = vmul.f32 %v1030, %v2662
      %v2691 = vmul.f32 %v1031, %v2662
      %v2692 = vmul.f32 %v1032, %v2662
      %v2693 = vmul.f32 %v1033, %v2667
      %v2694 = vmul.f32 %v1034, %v2667
      %v2695 = vmul.f32 %v1035, %v2667
      %2723 = vrot.lane.b32.xlu0 %v2669, 107
      %v2724 = vpop.permute.xlu0 %2723
      %2725 = vrot.lane.b32.xlu0 %v2670, 107
      %v2726 = vpop.permute.xlu0 %2725
      %2727 = vrot.lane.b32.xlu0 %v2671, 107
      %v2728 = vpop.permute.xlu0 %2727
      %2729 = vrot.lane.b32.xlu0 %v2672, 107
      %v2730 = vpop.permute.xlu0 %2729
      %2731 = vrot.lane.b32.xlu0 %v2673, 107
      %v2732 = vpop.permute.xlu0 %2731
      %2733 = vrot.lane.b32.xlu0 %v2674, 107
      %v2734 = vpop.permute.xlu0 %2733
      %2735 = vrot.lane.b32.xlu0 %v2675, 107
      %v2736 = vpop.permute.xlu0 %2735
      %2737 = vrot.lane.b32.xlu0 %v2676, 107
      %v2738 = vpop.permute.xlu0 %2737
      %2739 = vrot.lane.b32.xlu0 %v2677, 107
      %v2740 = vpop.permute.xlu0 %2739
      %2741 = vrot.lane.b32.xlu0 %v2678, 107
      %v2742 = vpop.permute.xlu0 %2741
      %2743 = vrot.lane.b32.xlu0 %v2679, 107
      %v2744 = vpop.permute.xlu0 %2743
      %2745 = vrot.lane.b32.xlu0 %v2680, 107
      %v2746 = vpop.permute.xlu0 %2745
      %2747 = vrot.lane.b32.xlu0 %v2681, 107
      %v2748 = vpop.permute.xlu0 %2747
      %2749 = vrot.lane.b32.xlu0 %v2682, 107
      %v2750 = vpop.permute.xlu0 %2749
      %2751 = vrot.lane.b32.xlu0 %v2683, 107
      %v2752 = vpop.permute.xlu0 %2751
      %2753 = vrot.lane.b32.xlu0 %v2684, 107
      %v2754 = vpop.permute.xlu0 %2753
      %2755 = vrot.lane.b32.xlu0 %v2685, 107
      %v2756 = vpop.permute.xlu0 %2755
      %2757 = vrot.lane.b32.xlu0 %v2686, 107
      %v2758 = vpop.permute.xlu0 %2757
      %2759 = vrot.lane.b32.xlu0 %v2687, 107
      %v2760 = vpop.permute.xlu0 %2759
      %2761 = vrot.lane.b32.xlu0 %v2688, 107
      %v2762 = vpop.permute.xlu0 %2761
      %2763 = vrot.lane.b32.xlu0 %v2689, 107
      %v2764 = vpop.permute.xlu0 %2763
      %2765 = vrot.lane.b32.xlu0 %v2690, 107
      %v2766 = vpop.permute.xlu0 %2765
      %2767 = vrot.lane.b32.xlu0 %v2691, 107
      %v2768 = vpop.permute.xlu0 %2767
      %2769 = vrot.lane.b32.xlu0 %v2692, 107
      %v2770 = vpop.permute.xlu0 %2769
      %2771 = vrot.lane.b32.xlu0 %v2693, 107
      %v2772 = vpop.permute.xlu0 %2771
      %2773 = vrot.lane.b32.xlu0 %v2694, 107
      %v2774 = vpop.permute.xlu0 %2773
      %2775 = vrot.lane.b32.xlu0 %v2695, 107
      %v2776 = vpop.permute.xlu0 %2775
      %vm2777 = vcmask 875520
      %v2778 = vsel %vm2777, %v2724, %v2726
      %v2779 = vsel %vm2777, %v2726, %v2728
      %v2780 = vsel %vm2777, %v2730, %v2732
      %v2781 = vsel %vm2777, %v2732, %v2734
      %v2782 = vsel %vm2777, %v2736, %v2738
      %v2783 = vsel %vm2777, %v2738, %v2740
      %v2784 = vsel %vm2777, %v2742, %v2744
      %v2785 = vsel %vm2777, %v2744, %v2746
      %v2786 = vsel %vm2777, %v2748, %v2750
      %v2787 = vsel %vm2777, %v2750, %v2752
      %v2788 = vsel %vm2777, %v2754, %v2756
      %v2789 = vsel %vm2777, %v2756, %v2758
      %v2790 = vsel %vm2777, %v2760, %v2762
      %v2791 = vsel %vm2777, %v2762, %v2764
      %v2792 = vsel %vm2777, %v2766, %v2768
      %v2793 = vsel %vm2777, %v2768, %v2770
      %v2794 = vsel %vm2777, %v2772, %v2774
      %v2795 = vsel %vm2777, %v2774, %v2776
      %v2823 = vadd.f32 %v2587, %v2778
      %v2824 = vadd.f32 %v2588, %v2779
      %v2825 = vadd.f32 %v2589, %v2728
      %v2826 = vadd.f32 %v2590, %v2780
      %v2827 = vadd.f32 %v2591, %v2781
      %v2828 = vadd.f32 %v2592, %v2734
      %v2829 = vadd.f32 %v2593, %v2782
      %v2830 = vadd.f32 %v2594, %v2783
      %v2831 = vadd.f32 %v2595, %v2740
      %v2832 = vadd.f32 %v2596, %v2784
      %v2833 = vadd.f32 %v2597, %v2785
      %v2834 = vadd.f32 %v2598, %v2746
      %v2835 = vadd.f32 %v2599, %v2786
      %v2836 = vadd.f32 %v2600, %v2787
      %v2837 = vadd.f32 %v2601, %v2752
      %v2838 = vadd.f32 %v2602, %v2788
      %v2839 = vadd.f32 %v2603, %v2789
      %v2840 = vadd.f32 %v2604, %v2758
      %v2841 = vadd.f32 %v2605, %v2790
      %v2842 = vadd.f32 %v2606, %v2791
      %v2843 = vadd.f32 %v2607, %v2764
      %v2844 = vadd.f32 %v2608, %v2792
      %v2845 = vadd.f32 %v2609, %v2793
      %v2846 = vadd.f32 %v2610, %v2770
      %v2847 = vadd.f32 %v2611, %v2794
      %v2848 = vadd.f32 %v2612, %v2795
      %v2849 = vadd.f32 %v2613, %v2776
      %s2850 = scalar_lea.vmem %s6, 576
      %v2851 = vld [vmem:[%s2850] sm:$0xff]
      %v2852 = vld [vmem:[%s2850 + $0x8] sm:$0xff]
      %v2853 = vld [vmem:[%s2850 + $0x10] sm:$0xff]
      %v2854 = vld [vmem:[%s2850 + $0x18] sm:$0xff]
      %v2855 = vld [vmem:[%s2850 + $0x20] sm:$0xff]
      %v2856 = vld [vmem:[%s2850 + $0x28] sm:$0xff]
      %v2857 = vld [vmem:[%s2850 + $0x30] sm:$0xff]
      %v2858 = vld [vmem:[%s2850 + $0x38] sm:$0xff]
      %v2859 = vld [vmem:[%s2850 + $0x40] sm:$0xff]
      %2861 = vset.pattern.permute.xlu0 0
      %2862 = vperm.xlu0 %2861, %v2851
      %v2863 = vpop.permute.xlu0 %2862
      %2866 = vset.pattern.permute.xlu0 0
      %2867 = vperm.xlu0 %2866, %v2852
      %v2868 = vpop.permute.xlu0 %2867
      %2871 = vset.pattern.permute.xlu0 0
      %2872 = vperm.xlu0 %2871, %v2853
      %v2873 = vpop.permute.xlu0 %2872
      %2876 = vset.pattern.permute.xlu0 0
      %2877 = vperm.xlu0 %2876, %v2854
      %v2878 = vpop.permute.xlu0 %2877
      %2881 = vset.pattern.permute.xlu0 0
      %2882 = vperm.xlu0 %2881, %v2855
      %v2883 = vpop.permute.xlu0 %2882
      %2886 = vset.pattern.permute.xlu0 0
      %2887 = vperm.xlu0 %2886, %v2856
      %v2888 = vpop.permute.xlu0 %2887
      %2891 = vset.pattern.permute.xlu0 0
      %2892 = vperm.xlu0 %2891, %v2857
      %v2893 = vpop.permute.xlu0 %2892
      %2896 = vset.pattern.permute.xlu0 0
      %2897 = vperm.xlu0 %2896, %v2858
      %v2898 = vpop.permute.xlu0 %2897
      %2901 = vset.pattern.permute.xlu0 0
      %2902 = vperm.xlu0 %2901, %v2859
      %v2903 = vpop.permute.xlu0 %2902
      %v2905 = vmul.f32 %v1009, %v2863
      %v2906 = vmul.f32 %v1010, %v2863
      %v2907 = vmul.f32 %v1011, %v2863
      %v2908 = vmul.f32 %v1012, %v2868
      %v2909 = vmul.f32 %v1013, %v2868
      %v2910 = vmul.f32 %v1014, %v2868
      %v2911 = vmul.f32 %v1015, %v2873
      %v2912 = vmul.f32 %v1016, %v2873
      %v2913 = vmul.f32 %v1017, %v2873
      %v2914 = vmul.f32 %v1018, %v2878
      %v2915 = vmul.f32 %v1019, %v2878
      %v2916 = vmul.f32 %v1020, %v2878
      %v2917 = vmul.f32 %v1021, %v2883
      %v2918 = vmul.f32 %v1022, %v2883
      %v2919 = vmul.f32 %v1023, %v2883
      %v2920 = vmul.f32 %v1024, %v2888
      %v2921 = vmul.f32 %v1025, %v2888
      %v2922 = vmul.f32 %v1026, %v2888
      %v2923 = vmul.f32 %v1027, %v2893
      %v2924 = vmul.f32 %v1028, %v2893
      %v2925 = vmul.f32 %v1029, %v2893
      %v2926 = vmul.f32 %v1030, %v2898
      %v2927 = vmul.f32 %v1031, %v2898
      %v2928 = vmul.f32 %v1032, %v2898
      %v2929 = vmul.f32 %v1033, %v2903
      %v2930 = vmul.f32 %v1034, %v2903
      %v2931 = vmul.f32 %v1035, %v2903
      %2959 = vrot.lane.b32.xlu0 %v2905, 106
      %v2960 = vpop.permute.xlu0 %2959
      %2961 = vrot.lane.b32.xlu0 %v2906, 106
      %v2962 = vpop.permute.xlu0 %2961
      %2963 = vrot.lane.b32.xlu0 %v2907, 106
      %v2964 = vpop.permute.xlu0 %2963
      %2965 = vrot.lane.b32.xlu0 %v2908, 106
      %v2966 = vpop.permute.xlu0 %2965
      %2967 = vrot.lane.b32.xlu0 %v2909, 106
      %v2968 = vpop.permute.xlu0 %2967
      %2969 = vrot.lane.b32.xlu0 %v2910, 106
      %v2970 = vpop.permute.xlu0 %2969
      %2971 = vrot.lane.b32.xlu0 %v2911, 106
      %v2972 = vpop.permute.xlu0 %2971
      %2973 = vrot.lane.b32.xlu0 %v2912, 106
      %v2974 = vpop.permute.xlu0 %2973
      %2975 = vrot.lane.b32.xlu0 %v2913, 106
      %v2976 = vpop.permute.xlu0 %2975
      %2977 = vrot.lane.b32.xlu0 %v2914, 106
      %v2978 = vpop.permute.xlu0 %2977
      %2979 = vrot.lane.b32.xlu0 %v2915, 106
      %v2980 = vpop.permute.xlu0 %2979
      %2981 = vrot.lane.b32.xlu0 %v2916, 106
      %v2982 = vpop.permute.xlu0 %2981
      %2983 = vrot.lane.b32.xlu0 %v2917, 106
      %v2984 = vpop.permute.xlu0 %2983
      %2985 = vrot.lane.b32.xlu0 %v2918, 106
      %v2986 = vpop.permute.xlu0 %2985
      %2987 = vrot.lane.b32.xlu0 %v2919, 106
      %v2988 = vpop.permute.xlu0 %2987
      %2989 = vrot.lane.b32.xlu0 %v2920, 106
      %v2990 = vpop.permute.xlu0 %2989
      %2991 = vrot.lane.b32.xlu0 %v2921, 106
      %v2992 = vpop.permute.xlu0 %2991
      %2993 = vrot.lane.b32.xlu0 %v2922, 106
      %v2994 = vpop.permute.xlu0 %2993
      %2995 = vrot.lane.b32.xlu0 %v2923, 106
      %v2996 = vpop.permute.xlu0 %2995
      %2997 = vrot.lane.b32.xlu0 %v2924, 106
      %v2998 = vpop.permute.xlu0 %2997
      %2999 = vrot.lane.b32.xlu0 %v2925, 106
      %v3000 = vpop.permute.xlu0 %2999
      %3001 = vrot.lane.b32.xlu0 %v2926, 106
      %v3002 = vpop.permute.xlu0 %3001
      %3003 = vrot.lane.b32.xlu0 %v2927, 106
      %v3004 = vpop.permute.xlu0 %3003
      %3005 = vrot.lane.b32.xlu0 %v2928, 106
      %v3006 = vpop.permute.xlu0 %3005
      %3007 = vrot.lane.b32.xlu0 %v2929, 106
      %v3008 = vpop.permute.xlu0 %3007
      %3009 = vrot.lane.b32.xlu0 %v2930, 106
      %v3010 = vpop.permute.xlu0 %3009
      %3011 = vrot.lane.b32.xlu0 %v2931, 106
      %v3012 = vpop.permute.xlu0 %3011
      %vm3013 = vcmask 867328
      %v3014 = vsel %vm3013, %v2960, %v2962
      %v3015 = vsel %vm3013, %v2962, %v2964
      %v3016 = vsel %vm3013, %v2966, %v2968
      %v3017 = vsel %vm3013, %v2968, %v2970
      %v3018 = vsel %vm3013, %v2972, %v2974
      %v3019 = vsel %vm3013, %v2974, %v2976
      %v3020 = vsel %vm3013, %v2978, %v2980
      %v3021 = vsel %vm3013, %v2980, %v2982
      %v3022 = vsel %vm3013, %v2984, %v2986
      %v3023 = vsel %vm3013, %v2986, %v2988
      %v3024 = vsel %vm3013, %v2990, %v2992
      %v3025 = vsel %vm3013, %v2992, %v2994
      %v3026 = vsel %vm3013, %v2996, %v2998
      %v3027 = vsel %vm3013, %v2998, %v3000
      %v3028 = vsel %vm3013, %v3002, %v3004
      %v3029 = vsel %vm3013, %v3004, %v3006
      %v3030 = vsel %vm3013, %v3008, %v3010
      %v3031 = vsel %vm3013, %v3010, %v3012
      %v3059 = vadd.f32 %v2823, %v3014
      %v3060 = vadd.f32 %v2824, %v3015
      %v3061 = vadd.f32 %v2825, %v2964
      %v3062 = vadd.f32 %v2826, %v3016
      %v3063 = vadd.f32 %v2827, %v3017
      %v3064 = vadd.f32 %v2828, %v2970
      %v3065 = vadd.f32 %v2829, %v3018
      %v3066 = vadd.f32 %v2830, %v3019
      %v3067 = vadd.f32 %v2831, %v2976
      %v3068 = vadd.f32 %v2832, %v3020
      %v3069 = vadd.f32 %v2833, %v3021
      %v3070 = vadd.f32 %v2834, %v2982
      %v3071 = vadd.f32 %v2835, %v3022
      %v3072 = vadd.f32 %v2836, %v3023
      %v3073 = vadd.f32 %v2837, %v2988
      %v3074 = vadd.f32 %v2838, %v3024
      %v3075 = vadd.f32 %v2839, %v3025
      %v3076 = vadd.f32 %v2840, %v2994
      %v3077 = vadd.f32 %v2841, %v3026
      %v3078 = vadd.f32 %v2842, %v3027
      %v3079 = vadd.f32 %v2843, %v3000
      %v3080 = vadd.f32 %v2844, %v3028
      %v3081 = vadd.f32 %v2845, %v3029
      %v3082 = vadd.f32 %v2846, %v3006
      %v3083 = vadd.f32 %v2847, %v3030
      %v3084 = vadd.f32 %v2848, %v3031
      %v3085 = vadd.f32 %v2849, %v3012
      %v3086 = vmax.f32 %v3059, 0.0
      %v3087 = vmax.f32 %v3060, 0.0
      %v3088 = vmax.f32 %v3061, 0.0
      %v3089 = vmax.f32 %v3062, 0.0
      %v3090 = vmax.f32 %v3063, 0.0
      %v3091 = vmax.f32 %v3064, 0.0
      %v3092 = vmax.f32 %v3065, 0.0
      %v3093 = vmax.f32 %v3066, 0.0
      %v3094 = vmax.f32 %v3067, 0.0
      %v3095 = vmax.f32 %v3068, 0.0
      %v3096 = vmax.f32 %v3069, 0.0
      %v3097 = vmax.f32 %v3070, 0.0
      %v3098 = vmax.f32 %v3071, 0.0
      %v3099 = vmax.f32 %v3072, 0.0
      %v3100 = vmax.f32 %v3073, 0.0
      %v3101 = vmax.f32 %v3074, 0.0
      %v3102 = vmax.f32 %v3075, 0.0
      %v3103 = vmax.f32 %v3076, 0.0
      %v3104 = vmax.f32 %v3077, 0.0
      %v3105 = vmax.f32 %v3078, 0.0
      %v3106 = vmax.f32 %v3079, 0.0
      %v3107 = vmax.f32 %v3080, 0.0
      %v3108 = vmax.f32 %v3081, 0.0
      %v3109 = vmax.f32 %v3082, 0.0
      %v3110 = vmax.f32 %v3083, 0.0
      %v3111 = vmax.f32 %v3084, 0.0
      %v3112 = vmax.f32 %v3085, 0.0
      %3113 = vrot.lane.b32.xlu0 %v847, 5
      %v3114 = vpop.permute.xlu0 %3113
      %3115 = vrot.lane.b32.xlu0 %v851, 5
      %v3116 = vpop.permute.xlu0 %3115
      %vm3117 = vcmask 39936
      %v3118 = vsel %vm3117, %v3114, %v3116
      %v3122 = vmul.f32 %v3086, %v3114
      %v3123 = vmul.f32 %v3087, %v3118
      %v3124 = vmul.f32 %v3088, %v3116
      %v3125 = vmul.f32 %v3089, %v3114
      %v3126 = vmul.f32 %v3090, %v3118
      %v3127 = vmul.f32 %v3091, %v3116
      %v3128 = vmul.f32 %v3092, %v3114
      %v3129 = vmul.f32 %v3093, %v3118
      %v3130 = vmul.f32 %v3094, %v3116
      %v3131 = vmul.f32 %v3095, %v3114
      %v3132 = vmul.f32 %v3096, %v3118
      %v3133 = vmul.f32 %v3097, %v3116
      %v3134 = vmul.f32 %v3098, %v3114
      %v3135 = vmul.f32 %v3099, %v3118
      %v3136 = vmul.f32 %v3100, %v3116
      %v3137 = vmul.f32 %v3101, %v3114
      %v3138 = vmul.f32 %v3102, %v3118
      %v3139 = vmul.f32 %v3103, %v3116
      %v3140 = vmul.f32 %v3104, %v3114
      %v3141 = vmul.f32 %v3105, %v3118
      %v3142 = vmul.f32 %v3106, %v3116
      %v3143 = vmul.f32 %v3107, %v3114
      %v3144 = vmul.f32 %v3108, %v3118
      %v3145 = vmul.f32 %v3109, %v3116
      %v3146 = vmul.f32 %v3110, %v3114
      %v3147 = vmul.f32 %v3111, %v3118
      %v3148 = vmul.f32 %v3112, %v3116
      %3167 = vrot.lane.b32.xlu0 %v3122, 123
      %v3168 = vpop.permute.xlu0 %3167
      %3169 = vrot.lane.b32.xlu0 %v3123, 123
      %v3170 = vpop.permute.xlu0 %3169
      %3171 = vrot.lane.b32.xlu0 %v3125, 123
      %v3172 = vpop.permute.xlu0 %3171
      %3173 = vrot.lane.b32.xlu0 %v3126, 123
      %v3174 = vpop.permute.xlu0 %3173
      %3175 = vrot.lane.b32.xlu0 %v3128, 123
      %v3176 = vpop.permute.xlu0 %3175
      %3177 = vrot.lane.b32.xlu0 %v3129, 123
      %v3178 = vpop.permute.xlu0 %3177
      %3179 = vrot.lane.b32.xlu0 %v3131, 123
      %v3180 = vpop.permute.xlu0 %3179
      %3181 = vrot.lane.b32.xlu0 %v3132, 123
      %v3182 = vpop.permute.xlu0 %3181
      %3183 = vrot.lane.b32.xlu0 %v3134, 123
      %v3184 = vpop.permute.xlu0 %3183
      %3185 = vrot.lane.b32.xlu0 %v3135, 123
      %v3186 = vpop.permute.xlu0 %3185
      %3187 = vrot.lane.b32.xlu0 %v3137, 123
      %v3188 = vpop.permute.xlu0 %3187
      %3189 = vrot.lane.b32.xlu0 %v3138, 123
      %v3190 = vpop.permute.xlu0 %3189
      %3191 = vrot.lane.b32.xlu0 %v3140, 123
      %v3192 = vpop.permute.xlu0 %3191
      %3193 = vrot.lane.b32.xlu0 %v3141, 123
      %v3194 = vpop.permute.xlu0 %3193
      %3195 = vrot.lane.b32.xlu0 %v3143, 123
      %v3196 = vpop.permute.xlu0 %3195
      %3197 = vrot.lane.b32.xlu0 %v3144, 123
      %v3198 = vpop.permute.xlu0 %3197
      %3199 = vrot.lane.b32.xlu0 %v3146, 123
      %v3200 = vpop.permute.xlu0 %3199
      %3201 = vrot.lane.b32.xlu0 %v3147, 123
      %v3202 = vpop.permute.xlu0 %3201
      %vm3203 = vcmask 1006592
      %v3204 = vsel %vm3203, %v3168, %v3170
      %v3205 = vsel %vm3203, %v3172, %v3174
      %v3206 = vsel %vm3203, %v3176, %v3178
      %v3207 = vsel %vm3203, %v3180, %v3182
      %v3208 = vsel %vm3203, %v3184, %v3186
      %v3209 = vsel %vm3203, %v3188, %v3190
      %v3210 = vsel %vm3203, %v3192, %v3194
      %v3211 = vsel %vm3203, %v3196, %v3198
      %v3212 = vsel %vm3203, %v3200, %v3202
      %3222 = vadd.xlane.f32.xlu0 %v3204
      %v3223 = vpop.xlane.xlu0 %3222
      %3224 = vadd.xlane.f32.xlu0 %v3205
      %v3225 = vpop.xlane.xlu0 %3224
      %3226 = vadd.xlane.f32.xlu0 %v3206
      %v3227 = vpop.xlane.xlu0 %3226
      %3228 = vadd.xlane.f32.xlu0 %v3207
      %v3229 = vpop.xlane.xlu0 %3228
      %3230 = vadd.xlane.f32.xlu0 %v3208
      %v3231 = vpop.xlane.xlu0 %3230
      %3232 = vadd.xlane.f32.xlu0 %v3209
      %v3233 = vpop.xlane.xlu0 %3232
      %3234 = vadd.xlane.f32.xlu0 %v3210
      %v3235 = vpop.xlane.xlu0 %3234
      %3236 = vadd.xlane.f32.xlu0 %v3211
      %v3237 = vpop.xlane.xlu0 %3236
      %3238 = vadd.xlane.f32.xlu0 %v3212
      %v3239 = vpop.xlane.xlu0 %3238
      %3249 = vrot.lane.b32.xlu0 %v3124, 123
      %v3250 = vpop.permute.xlu0 %3249
      %3251 = vrot.lane.b32.xlu0 %v3127, 123
      %v3252 = vpop.permute.xlu0 %3251
      %3253 = vrot.lane.b32.xlu0 %v3130, 123
      %v3254 = vpop.permute.xlu0 %3253
      %3255 = vrot.lane.b32.xlu0 %v3133, 123
      %v3256 = vpop.permute.xlu0 %3255
      %3257 = vrot.lane.b32.xlu0 %v3136, 123
      %v3258 = vpop.permute.xlu0 %3257
      %3259 = vrot.lane.b32.xlu0 %v3139, 123
      %v3260 = vpop.permute.xlu0 %3259
      %3261 = vrot.lane.b32.xlu0 %v3142, 123
      %v3262 = vpop.permute.xlu0 %3261
      %3263 = vrot.lane.b32.xlu0 %v3145, 123
      %v3264 = vpop.permute.xlu0 %3263
      %3265 = vrot.lane.b32.xlu0 %v3148, 123
      %v3266 = vpop.permute.xlu0 %3265
      %v3267 = vsel %vm3203, %v3170, %v3250
      %v3268 = vsel %vm3203, %v3174, %v3252
      %v3269 = vsel %vm3203, %v3178, %v3254
      %v3270 = vsel %vm3203, %v3182, %v3256
      %v3271 = vsel %vm3203, %v3186, %v3258
      %v3272 = vsel %vm3203, %v3190, %v3260
      %v3273 = vsel %vm3203, %v3194, %v3262
      %v3274 = vsel %vm3203, %v3198, %v3264
      %v3275 = vsel %vm3203, %v3202, %v3266
      %3285 = vadd.xlane.f32.xlu0 %v3267
      %v3286 = vpop.xlane.xlu0 %3285
      %3287 = vadd.xlane.f32.xlu0 %v3268
      %v3288 = vpop.xlane.xlu0 %3287
      %3289 = vadd.xlane.f32.xlu0 %v3269
      %v3290 = vpop.xlane.xlu0 %3289
      %3291 = vadd.xlane.f32.xlu0 %v3270
      %v3292 = vpop.xlane.xlu0 %3291
      %3293 = vadd.xlane.f32.xlu0 %v3271
      %v3294 = vpop.xlane.xlu0 %3293
      %3295 = vadd.xlane.f32.xlu0 %v3272
      %v3296 = vpop.xlane.xlu0 %3295
      %3297 = vadd.xlane.f32.xlu0 %v3273
      %v3298 = vpop.xlane.xlu0 %3297
      %3299 = vadd.xlane.f32.xlu0 %v3274
      %v3300 = vpop.xlane.xlu0 %3299
      %3301 = vadd.xlane.f32.xlu0 %v3275
      %v3302 = vpop.xlane.xlu0 %3301
      %vm3303 = vcmask 7168
      %v3304 = vsel %vm3303, %v3223, %v3286
      %v3305 = vsel %vm3303, %v3225, %v3288
      %v3306 = vsel %vm3303, %v3227, %v3290
      %v3307 = vsel %vm3303, %v3229, %v3292
      %v3308 = vsel %vm3303, %v3231, %v3294
      %v3309 = vsel %vm3303, %v3233, %v3296
      %v3310 = vsel %vm3303, %v3235, %v3298
      %v3311 = vsel %vm3303, %v3237, %v3300
      %v3312 = vsel %vm3303, %v3239, %v3302
      %v3313 = vmul.f32 %v3304, 0.015625
      %v3314 = vmul.f32 %v3305, 0.015625
      %v3315 = vmul.f32 %v3306, 0.015625
      %v3316 = vmul.f32 %v3307, 0.015625
      %v3317 = vmul.f32 %v3308, 0.015625
      %v3318 = vmul.f32 %v3309, 0.015625
      %v3319 = vmul.f32 %v3310, 0.015625
      %v3320 = vmul.f32 %v3311, 0.015625
      %v3321 = vmul.f32 %v3312, 0.015625
      %v3322 = vld [vmem:[%s8] sm:$0xff]
      %v3323 = vld [vmem:[%s8 + $0x8] sm:$0xff]
      %v3324 = vld [vmem:[%s8 + $0x10] sm:$0xff]
      %v3325 = vld [vmem:[%s9] sm:$0xff]
      %v3326 = vld [vmem:[%s9 + $0x8] sm:$0xff]
      %v3327 = vld [vmem:[%s9 + $0x10] sm:$0xff]
      %3329 = vset.pattern.permute.xlu0 0
      %3330 = vperm.xlu0 %3329, %v3325
      %v3331 = vpop.permute.xlu0 %3330
      %3334 = vset.pattern.permute.xlu0 0
      %3335 = vperm.xlu0 %3334, %v3326
      %v3336 = vpop.permute.xlu0 %3335
      %3339 = vset.pattern.permute.xlu0 0
      %3340 = vperm.xlu0 %3339, %v3327
      %v3341 = vpop.permute.xlu0 %3340
      %vm3343 = vcmask 588800
      %v3345 = vsel %vm3343, %v3322, 0
      %v3348 = vsel %vm3343, %v3323, 0
      %v3351 = vsel %vm3343, %v3324, 0
      %3353 = vmatprep.subr.mxu0 0.0
      %3354 = vmatpush1.msra.mxu0 %v3313
      %3355 = vmatprep.subr.mxu0 0.0
      %3356 = vmatpush1.msra.mxu0 %v3314
      %3357 = vmatprep.subr.mxu0 0.0
      %3358 = vmatpush1.msra.mxu0 %v3315
      %3359 = vmatprep.subr.mxu0 0.0
      %3360 = vmatpush1.msra.mxu0 %v3316
      %3361 = vmatprep.subr.mxu0 0.0
      %3362 = vmatpush1.msra.mxu0 %v3317
      %3363 = vmatprep.subr.mxu0 0.0
      %3364 = vmatpush1.msra.mxu0 %v3318
      %3365 = vmatprep.subr.mxu0 0.0
      %3366 = vmatpush1.msra.mxu0 %v3319
      %3367 = vmatprep.subr.mxu0 0.0
      %3368 = vmatpush1.msra.mxu0 %v3320
      %3369 = vmatprep.subr.mxu0 0.0
      %3370 = vmatpush1.msra.mxu0 %v3321
      %3371 = vmatprep.subr.mxu0 0.0
      %3372 = vmatpush1.msra.mxu0 0.0
      %3373 = vmatprep.subr.mxu0 0.0
      %3374 = vmatpush1.msra.mxu0 0.0
      %3375 = vmatprep.subr.mxu0 0.0
      %3376 = vmatpush1.msra.mxu0 0.0
      %3377 = vmatprep.subr.mxu0 0.0
      %3378 = vmatpush1.msra.mxu0 0.0
      %3379 = vmatprep.subr.mxu0 0.0
      %3380 = vmatpush1.msra.mxu0 0.0
      %3381 = vmatprep.subr.mxu0 0.0
      %3382 = vmatpush1.msra.mxu0 0.0
      %3383 = vmatprep.subr.mxu0 0.0
      %3384 = vmatpush1.msra.mxu0 0.0
      %3385 = vmatprep.subr.mxu0 0.0
      %3386 = vmatpush1.msra.mxu0 0.0
      %3387 = vmatprep.subr.mxu0 0.0
      %3388 = vmatpush1.msra.mxu0 0.0
      %3389 = vmatprep.subr.mxu0 0.0
      %3390 = vmatpush1.msra.mxu0 0.0
      %3391 = vmatprep.subr.mxu0 0.0
      %3392 = vmatpush1.msra.mxu0 0.0
      %3393 = vmatprep.subr.mxu0 0.0
      %3394 = vmatpush1.msra.mxu0 0.0
      %3395 = vmatprep.subr.mxu0 0.0
      %3396 = vmatpush1.msra.mxu0 0.0
      %3397 = vmatprep.subr.mxu0 0.0
      %3398 = vmatpush1.msra.mxu0 0.0
      %3399 = vmatprep.subr.mxu0 0.0
      %3400 = vmatpush1.msra.mxu0 0.0
      %3401 = vmatprep.subr.mxu0 0.0
      %3402 = vmatpush1.msra.mxu0 0.0
      %3403 = vmatprep.subr.mxu0 0.0
      %3404 = vmatpush1.msra.mxu0 0.0
      %3405 = vmatprep.subr.mxu0 0.0
      %3406 = vmatpush1.msra.mxu0 0.0
      %3407 = vmatprep.subr.mxu0 0.0
      %3408 = vmatpush1.msra.mxu0 0.0
      %3409 = vmatprep.subr.mxu0 0.0
      %3410 = vmatpush1.msra.mxu0 0.0
      %3411 = vmatprep.subr.mxu0 0.0
      %3412 = vmatpush1.msra.mxu0 0.0
      %3413 = vmatprep.subr.mxu0 0.0
      %3414 = vmatpush1.msra.mxu0 0.0
      %3415 = vmatprep.subr.mxu0 0.0
      %3416 = vmatpush1.msra.mxu0 0.0
      %3417 = vmatprep.mubr.f32.mxu0 0.0
      %3418 = vmatmul.mubr.f32.gmra.mrb[0].mxu0 %v3345
      %v3419 = vpop.f32.mrb[0].mxu0
      %v3420 = vadd.f32 %v3331, %v3419
      %v3421 = vpop.f32.mrb[0].mxu0
      %3422 = vmatprep.mubr.f32.mxu0 0.0
      %3423 = vmatmul.mubr.f32.gmra.mrb[0].mxu0 %v3348
      %v3424 = vpop.f32.mrb[0].mxu0
      %v3425 = vadd.f32 %v3336, %v3424
      %v3426 = vpop.f32.mrb[0].mxu0
      %3427 = vmatprep.mubr.f32.mxu0 0.0
      %3428 = vmatmul.mubr.f32.gmra.mrb[0].mxu0 %v3351
      %v3429 = vpop.f32.mrb[0].mxu0
      %v3430 = vadd.f32 %v3341, %v3429
      %v3431 = vpop.f32.mrb[0].mxu0
      %3432 = vdwg.mxu0
      %v3433 = vmax.f32 %v3420, 0.0
      %v3434 = vmax.f32 %v3425, 0.0
      %v3435 = vmax.f32 %v3430, 0.0
      %v3436 = vld [vmem:[%s10] sm:$0xff]
      %v3437 = vld [vmem:[%s10 + $0x8] sm:$0xff]
      %v3438 = vld [vmem:[%s10 + $0x10] sm:$0xff]
      %v3439 = vld [vmem:[%s10 + $0x18] sm:$0xff]
      %v3440 = vld [vmem:[%s10 + $0x20] sm:$0xff]
      %v3441 = vld [vmem:[%s10 + $0x28] sm:$0xff]
      %v3442 = vld [vmem:[%s10 + $0x30] sm:$0xff]
      %v3443 = vld [vmem:[%s10 + $0x38] sm:$0xff]
      %v3444 = vld [vmem:[%s10 + $0x40] sm:$0xff]
      %v3445 = vld [vmem:[%s11] sm:$0xff]
      %v3446 = vld [vmem:[%s11 + $0x8] sm:$0xff]
      %v3447 = vld [vmem:[%s11 + $0x10] sm:$0xff]
      %v3448 = vld [vmem:[%s11 + $0x18] sm:$0xff]
      %v3449 = vld [vmem:[%s11 + $0x20] sm:$0xff]
      %v3450 = vld [vmem:[%s11 + $0x28] sm:$0xff]
      %v3451 = vld [vmem:[%s11 + $0x30] sm:$0xff]
      %v3452 = vld [vmem:[%s11 + $0x38] sm:$0xff]
      %v3453 = vld [vmem:[%s11 + $0x40] sm:$0xff]
      %3455 = vset.pattern.permute.xlu0 0
      %3456 = vperm.xlu0 %3455, %v3445
      %v3457 = vpop.permute.xlu0 %3456
      %3460 = vset.pattern.permute.xlu0 0
      %3461 = vperm.xlu0 %3460, %v3446
      %v3462 = vpop.permute.xlu0 %3461
      %3465 = vset.pattern.permute.xlu0 0
      %3466 = vperm.xlu0 %3465, %v3447
      %v3467 = vpop.permute.xlu0 %3466
      %3470 = vset.pattern.permute.xlu0 0
      %3471 = vperm.xlu0 %3470, %v3448
      %v3472 = vpop.permute.xlu0 %3471
      %3475 = vset.pattern.permute.xlu0 0
      %3476 = vperm.xlu0 %3475, %v3449
      %v3477 = vpop.permute.xlu0 %3476
      %3480 = vset.pattern.permute.xlu0 0
      %3481 = vperm.xlu0 %3480, %v3450
      %v3482 = vpop.permute.xlu0 %3481
      %3485 = vset.pattern.permute.xlu0 0
      %3486 = vperm.xlu0 %3485, %v3451
      %v3487 = vpop.permute.xlu0 %3486
      %3490 = vset.pattern.permute.xlu0 0
      %3491 = vperm.xlu0 %3490, %v3452
      %v3492 = vpop.permute.xlu0 %3491
      %3495 = vset.pattern.permute.xlu0 0
      %3496 = vperm.xlu0 %3495, %v3453
      %v3497 = vpop.permute.xlu0 %3496
      %vm3499 = vcmask 195584
      %v3501 = vsel %vm3499, %v3436, 0
      %v3504 = vsel %vm3499, %v3437, 0
      %v3507 = vsel %vm3499, %v3438, 0
      %v3510 = vsel %vm3499, %v3439, 0
      %v3513 = vsel %vm3499, %v3440, 0
      %v3516 = vsel %vm3499, %v3441, 0
      %v3519 = vsel %vm3499, %v3442, 0
      %v3522 = vsel %vm3499, %v3443, 0
      %v3525 = vsel %vm3499, %v3444, 0
      %3527 = vmatprep.subr.mxu0 0.0
      %3528 = vmatpush1.msra.mxu0 %v3433
      %3529 = vmatprep.subr.mxu0 0.0
      %3530 = vmatpush1.msra.mxu0 %v3434
      %3531 = vmatprep.subr.mxu0 0.0
      %3532 = vmatpush1.msra.mxu0 %v3435
      %3533 = vmatprep.subr.mxu0 0.0
      %3534 = vmatpush1.msra.mxu0 0.0
      %3535 = vmatprep.subr.mxu0 0.0
      %3536 = vmatpush1.msra.mxu0 0.0
      %3537 = vmatprep.subr.mxu0 0.0
      %3538 = vmatpush1.msra.mxu0 0.0
      %3539 = vmatprep.subr.mxu0 0.0
      %3540 = vmatpush1.msra.mxu0 0.0
      %3541 = vmatprep.subr.mxu0 0.0
      %3542 = vmatpush1.msra.mxu0 0.0
      %3543 = vmatprep.subr.mxu0 0.0
      %3544 = vmatpush1.msra.mxu0 0.0
      %3545 = vmatprep.subr.mxu0 0.0
      %3546 = vmatpush1.msra.mxu0 0.0
      %3547 = vmatprep.subr.mxu0 0.0
      %3548 = vmatpush1.msra.mxu0 0.0
      %3549 = vmatprep.subr.mxu0 0.0
      %3550 = vmatpush1.msra.mxu0 0.0
      %3551 = vmatprep.subr.mxu0 0.0
      %3552 = vmatpush1.msra.mxu0 0.0
      %3553 = vmatprep.subr.mxu0 0.0
      %3554 = vmatpush1.msra.mxu0 0.0
      %3555 = vmatprep.subr.mxu0 0.0
      %3556 = vmatpush1.msra.mxu0 0.0
      %3557 = vmatprep.subr.mxu0 0.0
      %3558 = vmatpush1.msra.mxu0 0.0
      %3559 = vmatprep.subr.mxu0 0.0
      %3560 = vmatpush1.msra.mxu0 0.0
      %3561 = vmatprep.subr.mxu0 0.0
      %3562 = vmatpush1.msra.mxu0 0.0
      %3563 = vmatprep.subr.mxu0 0.0
      %3564 = vmatpush1.msra.mxu0 0.0
      %3565 = vmatprep.subr.mxu0 0.0
      %3566 = vmatpush1.msra.mxu0 0.0
      %3567 = vmatprep.subr.mxu0 0.0
      %3568 = vmatpush1.msra.mxu0 0.0
      %3569 = vmatprep.subr.mxu0 0.0
      %3570 = vmatpush1.msra.mxu0 0.0
      %3571 = vmatprep.subr.mxu0 0.0
      %3572 = vmatpush1.msra.mxu0 0.0
      %3573 = vmatprep.subr.mxu0 0.0
      %3574 = vmatpush1.msra.mxu0 0.0
      %3575 = vmatprep.subr.mxu0 0.0
      %3576 = vmatpush1.msra.mxu0 0.0
      %3577 = vmatprep.subr.mxu0 0.0
      %3578 = vmatpush1.msra.mxu0 0.0
      %3579 = vmatprep.subr.mxu0 0.0
      %3580 = vmatpush1.msra.mxu0 0.0
      %3581 = vmatprep.subr.mxu0 0.0
      %3582 = vmatpush1.msra.mxu0 0.0
      %3583 = vmatprep.subr.mxu0 0.0
      %3584 = vmatpush1.msra.mxu0 0.0
      %3585 = vmatprep.subr.mxu0 0.0
      %3586 = vmatpush1.msra.mxu0 0.0
      %3587 = vmatprep.subr.mxu0 0.0
      %3588 = vmatpush1.msra.mxu0 0.0
      %3589 = vmatprep.subr.mxu0 0.0
      %3590 = vmatpush1.msra.mxu0 0.0
      %3591 = vmatprep.mubr.f32.mxu0 0.0
      %3592 = vmatmul.mubr.f32.gmra.mrb[0].mxu0 %v3501
      %v3593 = vpop.f32.mrb[0].mxu0
      %v3594 = vadd.f32 %v3457, %v3593
      %v3595 = vpop.f32.mrb[0].mxu0
      %3596 = vmatprep.mubr.f32.mxu0 0.0
      %3597 = vmatmul.mubr.f32.gmra.mrb[0].mxu0 %v3504
      %v3598 = vpop.f32.mrb[0].mxu0
      %v3599 = vadd.f32 %v3462, %v3598
      %v3600 = vpop.f32.mrb[0].mxu0
      %3601 = vmatprep.mubr.f32.mxu0 0.0
      %3602 = vmatmul.mubr.f32.gmra.mrb[0].mxu0 %v3507
      %v3603 = vpop.f32.mrb[0].mxu0
      %v3604 = vadd.f32 %v3467, %v3603
      %v3605 = vpop.f32.mrb[0].mxu0
      %3606 = vmatprep.mubr.f32.mxu0 0.0
      %3607 = vmatmul.mubr.f32.gmra.mrb[0].mxu0 %v3510
      %v3608 = vpop.f32.mrb[0].mxu0
      %v3609 = vadd.f32 %v3472, %v3608
      %v3610 = vpop.f32.mrb[0].mxu0
      %3611 = vmatprep.mubr.f32.mxu0 0.0
      %3612 = vmatmul.mubr.f32.gmra.mrb[0].mxu0 %v3513
      %v3613 = vpop.f32.mrb[0].mxu0
      %v3614 = vadd.f32 %v3477, %v3613
      %v3615 = vpop.f32.mrb[0].mxu0
      %3616 = vmatprep.mubr.f32.mxu0 0.0
      %3617 = vmatmul.mubr.f32.gmra.mrb[0].mxu0 %v3516
      %v3618 = vpop.f32.mrb[0].mxu0
      %v3619 = vadd.f32 %v3482, %v3618
      %v3620 = vpop.f32.mrb[0].mxu0
      %3621 = vmatprep.mubr.f32.mxu0 0.0
      %3622 = vmatmul.mubr.f32.gmra.mrb[0].mxu0 %v3519
      %v3623 = vpop.f32.mrb[0].mxu0
      %v3624 = vadd.f32 %v3487, %v3623
      %v3625 = vpop.f32.mrb[0].mxu0
      %3626 = vmatprep.mubr.f32.mxu0 0.0
      %3627 = vmatmul.mubr.f32.gmra.mrb[0].mxu0 %v3522
      %v3628 = vpop.f32.mrb[0].mxu0
      %v3629 = vadd.f32 %v3492, %v3628
      %v3630 = vpop.f32.mrb[0].mxu0
      %3631 = vmatprep.mubr.f32.mxu0 0.0
      %3632 = vmatmul.mubr.f32.gmra.mrb[0].mxu0 %v3525
      %v3633 = vpop.f32.mrb[0].mxu0
      %v3634 = vadd.f32 %v3497, %v3633
      %v3635 = vpop.f32.mrb[0].mxu0
      %3636 = vdwg.mxu0
      %v3637 = vadd.f32 %v3594, 3.0
      %v3638 = vadd.f32 %v3599, 3.0
      %v3639 = vadd.f32 %v3604, 3.0
      %v3640 = vadd.f32 %v3609, 3.0
      %v3641 = vadd.f32 %v3614, 3.0
      %v3642 = vadd.f32 %v3619, 3.0
      %v3643 = vadd.f32 %v3624, 3.0
      %v3644 = vadd.f32 %v3629, 3.0
      %v3645 = vadd.f32 %v3634, 3.0
      %v3646 = vmax.f32 %v3637, 0.0
      %v3647 = vmax.f32 %v3638, 0.0
      %v3648 = vmax.f32 %v3639, 0.0
      %v3649 = vmax.f32 %v3640, 0.0
      %v3650 = vmax.f32 %v3641, 0.0
      %v3651 = vmax.f32 %v3642, 0.0
      %v3652 = vmax.f32 %v3643, 0.0
      %v3653 = vmax.f32 %v3644, 0.0
      %v3654 = vmax.f32 %v3645, 0.0
      %v3655 = vmin.f32 %v3646, 6.0
      %v3656 = vmin.f32 %v3647, 6.0
      %v3657 = vmin.f32 %v3648, 6.0
      %v3658 = vmin.f32 %v3649, 6.0
      %v3659 = vmin.f32 %v3650, 6.0
      %v3660 = vmin.f32 %v3651, 6.0
      %v3661 = vmin.f32 %v3652, 6.0
      %v3662 = vmin.f32 %v3653, 6.0
      %v3663 = vmin.f32 %v3654, 6.0
      %v3664 = vmul.f32 %v3655, 0.16666667
      %v3665 = vmul.f32 %v3656, 0.16666667
      %v3666 = vmul.f32 %v3657, 0.16666667
      %v3667 = vmul.f32 %v3658, 0.16666667
      %v3668 = vmul.f32 %v3659, 0.16666667
      %v3669 = vmul.f32 %v3660, 0.16666667
      %v3670 = vmul.f32 %v3661, 0.16666667
      %v3671 = vmul.f32 %v3662, 0.16666667
      %v3672 = vmul.f32 %v3663, 0.16666667
      %v3673 = vld [vmem:[%s12] sm:$0xff]
      %v3674 = vld [vmem:[%s12 + $0x8] sm:$0xff]
      %v3675 = vld [vmem:[%s12 + $0x10] sm:$0xff]
      %v3676 = vld [vmem:[%s12 + $0x18] sm:$0xff]
      %v3677 = vld [vmem:[%s12 + $0x20] sm:$0xff]
      %v3678 = vld [vmem:[%s12 + $0x28] sm:$0xff]
      %v3679 = vld [vmem:[%s12 + $0x30] sm:$0xff]
      %v3680 = vld [vmem:[%s12 + $0x38] sm:$0xff]
      %v3681 = vld [vmem:[%s12 + $0x40] sm:$0xff]
      %v3682 = vmul.f32 %v3313, %v3664
      %v3683 = vmul.f32 %v3314, %v3665
      %v3684 = vmul.f32 %v3315, %v3666
      %v3685 = vmul.f32 %v3316, %v3667
      %v3686 = vmul.f32 %v3317, %v3668
      %v3687 = vmul.f32 %v3318, %v3669
      %v3688 = vmul.f32 %v3319, %v3670
      %v3689 = vmul.f32 %v3320, %v3671
      %v3690 = vmul.f32 %v3321, %v3672
      %v3691 = vld [vmem:[%s13] sm:$0xff]
      %v3692 = vld [vmem:[%s13 + $0x8] sm:$0xff]
      %v3693 = vld [vmem:[%s13 + $0x10] sm:$0xff]
      %v3694 = vld [vmem:[%s13 + $0x18] sm:$0xff]
      %v3695 = vld [vmem:[%s13 + $0x20] sm:$0xff]
      %v3696 = vld [vmem:[%s13 + $0x28] sm:$0xff]
      %v3697 = vld [vmem:[%s13 + $0x30] sm:$0xff]
      %v3698 = vld [vmem:[%s13 + $0x38] sm:$0xff]
      %v3699 = vld [vmem:[%s13 + $0x40] sm:$0xff]
      %3701 = vset.pattern.permute.xlu0 0
      %3702 = vperm.xlu0 %3701, %v3691
      %v3703 = vpop.permute.xlu0 %3702
      %3706 = vset.pattern.permute.xlu0 0
      %3707 = vperm.xlu0 %3706, %v3692
      %v3708 = vpop.permute.xlu0 %3707
      %3711 = vset.pattern.permute.xlu0 0
      %3712 = vperm.xlu0 %3711, %v3693
      %v3713 = vpop.permute.xlu0 %3712
      %3716 = vset.pattern.permute.xlu0 0
      %3717 = vperm.xlu0 %3716, %v3694
      %v3718 = vpop.permute.xlu0 %3717
      %3721 = vset.pattern.permute.xlu0 0
      %3722 = vperm.xlu0 %3721, %v3695
      %v3723 = vpop.permute.xlu0 %3722
      %3726 = vset.pattern.permute.xlu0 0
      %3727 = vperm.xlu0 %3726, %v3696
      %v3728 = vpop.permute.xlu0 %3727
      %3731 = vset.pattern.permute.xlu0 0
      %3732 = vperm.xlu0 %3731, %v3697
      %v3733 = vpop.permute.xlu0 %3732
      %3736 = vset.pattern.permute.xlu0 0
      %3737 = vperm.xlu0 %3736, %v3698
      %v3738 = vpop.permute.xlu0 %3737
      %3741 = vset.pattern.permute.xlu0 0
      %3742 = vperm.xlu0 %3741, %v3699
      %v3743 = vpop.permute.xlu0 %3742
      %v3746 = vsel %vm3343, %v3673, 0
      %v3749 = vsel %vm3343, %v3674, 0
      %v3752 = vsel %vm3343, %v3675, 0
      %v3755 = vsel %vm3343, %v3676, 0
      %v3758 = vsel %vm3343, %v3677, 0
      %v3761 = vsel %vm3343, %v3678, 0
      %v3764 = vsel %vm3343, %v3679, 0
      %v3767 = vsel %vm3343, %v3680, 0
      %v3770 = vsel %vm3343, %v3681, 0
      %3772 = vmatprep.subr.mxu0 0.0
      %3773 = vmatpush1.msra.mxu0 %v3682
      %3774 = vmatprep.subr.mxu0 0.0
      %3775 = vmatpush1.msra.mxu0 %v3683
      %3776 = vmatprep.subr.mxu0 0.0
      %3777 = vmatpush1.msra.mxu0 %v3684
      %3778 = vmatprep.subr.mxu0 0.0
      %3779 = vmatpush1.msra.mxu0 %v3685
      %3780 = vmatprep.subr.mxu0 0.0
      %3781 = vmatpush1.msra.mxu0 %v3686
      %3782 = vmatprep.subr.mxu0 0.0
      %3783 = vmatpush1.msra.mxu0 %v3687
      %3784 = vmatprep.subr.mxu0 0.0
      %3785 = vmatpush1.msra.mxu0 %v3688
      %3786 = vmatprep.subr.mxu0 0.0
      %3787 = vmatpush1.msra.mxu0 %v3689
      %3788 = vmatprep.subr.mxu0 0.0
      %3789 = vmatpush1.msra.mxu0 %v3690
      %3790 = vmatprep.subr.mxu0 0.0
      %3791 = vmatpush1.msra.mxu0 0.0
      %3792 = vmatprep.subr.mxu0 0.0
      %3793 = vmatpush1.msra.mxu0 0.0
      %3794 = vmatprep.subr.mxu0 0.0
      %3795 = vmatpush1.msra.mxu0 0.0
      %3796 = vmatprep.subr.mxu0 0.0
      %3797 = vmatpush1.msra.mxu0 0.0
      %3798 = vmatprep.subr.mxu0 0.0
      %3799 = vmatpush1.msra.mxu0 0.0
      %3800 = vmatprep.subr.mxu0 0.0
      %3801 = vmatpush1.msra.mxu0 0.0
      %3802 = vmatprep.subr.mxu0 0.0
      %3803 = vmatpush1.msra.mxu0 0.0
      %3804 = vmatprep.subr.mxu0 0.0
      %3805 = vmatpush1.msra.mxu0 0.0
      %3806 = vmatprep.subr.mxu0 0.0
      %3807 = vmatpush1.msra.mxu0 0.0
      %3808 = vmatprep.subr.mxu0 0.0
      %3809 = vmatpush1.msra.mxu0 0.0
      %3810 = vmatprep.subr.mxu0 0.0
      %3811 = vmatpush1.msra.mxu0 0.0
      %3812 = vmatprep.subr.mxu0 0.0
      %3813 = vmatpush1.msra.mxu0 0.0
      %3814 = vmatprep.subr.mxu0 0.0
      %3815 = vmatpush1.msra.mxu0 0.0
      %3816 = vmatprep.subr.mxu0 0.0
      %3817 = vmatpush1.msra.mxu0 0.0
      %3818 = vmatprep.subr.mxu0 0.0
      %3819 = vmatpush1.msra.mxu0 0.0
      %3820 = vmatprep.subr.mxu0 0.0
      %3821 = vmatpush1.msra.mxu0 0.0
      %3822 = vmatprep.subr.mxu0 0.0
      %3823 = vmatpush1.msra.mxu0 0.0
      %3824 = vmatprep.subr.mxu0 0.0
      %3825 = vmatpush1.msra.mxu0 0.0
      %3826 = vmatprep.subr.mxu0 0.0
      %3827 = vmatpush1.msra.mxu0 0.0
      %3828 = vmatprep.subr.mxu0 0.0
      %3829 = vmatpush1.msra.mxu0 0.0
      %3830 = vmatprep.subr.mxu0 0.0
      %3831 = vmatpush1.msra.mxu0 0.0
      %3832 = vmatprep.subr.mxu0 0.0
      %3833 = vmatpush1.msra.mxu0 0.0
      %3834 = vmatprep.subr.mxu0 0.0
      %3835 = vmatpush1.msra.mxu0 0.0
      %3836 = vmatprep.mubr.f32.mxu0 0.0
      %3837 = vmatmul.mubr.f32.gmra.mrb[0].mxu0 %v3746
      %v3838 = vpop.f32.mrb[0].mxu0
      %v3839 = vadd.f32 %v3703, %v3838
      %v3840 = vpop.f32.mrb[0].mxu0
      %3841 = vmatprep.mubr.f32.mxu0 0.0
      %3842 = vmatmul.mubr.f32.gmra.mrb[0].mxu0 %v3749
      %v3843 = vpop.f32.mrb[0].mxu0
      %v3844 = vadd.f32 %v3708, %v3843
      %v3845 = vpop.f32.mrb[0].mxu0
      %3846 = vmatprep.mubr.f32.mxu0 0.0
      %3847 = vmatmul.mubr.f32.gmra.mrb[0].mxu0 %v3752
      %v3848 = vpop.f32.mrb[0].mxu0
      %v3849 = vadd.f32 %v3713, %v3848
      %v3850 = vpop.f32.mrb[0].mxu0
      %3851 = vmatprep.mubr.f32.mxu0 0.0
      %3852 = vmatmul.mubr.f32.gmra.mrb[0].mxu0 %v3755
      %v3853 = vpop.f32.mrb[0].mxu0
      %v3854 = vadd.f32 %v3718, %v3853
      %v3855 = vpop.f32.mrb[0].mxu0
      %3856 = vmatprep.mubr.f32.mxu0 0.0
      %3857 = vmatmul.mubr.f32.gmra.mrb[0].mxu0 %v3758
      %v3858 = vpop.f32.mrb[0].mxu0
      %v3859 = vadd.f32 %v3723, %v3858
      %v3860 = vpop.f32.mrb[0].mxu0
      %3861 = vmatprep.mubr.f32.mxu0 0.0
      %3862 = vmatmul.mubr.f32.gmra.mrb[0].mxu0 %v3761
      %v3863 = vpop.f32.mrb[0].mxu0
      %v3864 = vadd.f32 %v3728, %v3863
      %v3865 = vpop.f32.mrb[0].mxu0
      %3866 = vmatprep.mubr.f32.mxu0 0.0
      %3867 = vmatmul.mubr.f32.gmra.mrb[0].mxu0 %v3764
      %v3868 = vpop.f32.mrb[0].mxu0
      %v3869 = vadd.f32 %v3733, %v3868
      %v3870 = vpop.f32.mrb[0].mxu0
      %3871 = vmatprep.mubr.f32.mxu0 0.0
      %3872 = vmatmul.mubr.f32.gmra.mrb[0].mxu0 %v3767
      %v3873 = vpop.f32.mrb[0].mxu0
      %v3874 = vadd.f32 %v3738, %v3873
      %v3875 = vpop.f32.mrb[0].mxu0
      %3876 = vmatprep.mubr.f32.mxu0 0.0
      %3877 = vmatmul.mubr.f32.gmra.mrb[0].mxu0 %v3770
      %v3878 = vpop.f32.mrb[0].mxu0
      %v3879 = vadd.f32 %v3743, %v3878
      %v3880 = vpop.f32.mrb[0].mxu0
      %3881 = vdwg.mxu0
      %v3882 = vld [vmem:[%s14] sm:$0x3]
      %v3883 = vld [vmem:[%s15] sm:$0x3]
      %3885 = vset.pattern.permute.xlu0 0
      %3886 = vperm.xlu0 %3885, %v3883
      %v3887 = vpop.permute.xlu0 %3886
      %v3890 = vsel %vm3343, %v3882, 0
      %3892 = vmatprep.subr.mxu0 0.0
      %3893 = vmatpush1.msra.mxu0 %v3839
      %3894 = vmatprep.subr.mxu0 0.0
      %3895 = vmatpush1.msra.mxu0 %v3844
      %3896 = vmatprep.subr.mxu0 0.0
      %3897 = vmatpush1.msra.mxu0 %v3849
      %3898 = vmatprep.subr.mxu0 0.0
      %3899 = vmatpush1.msra.mxu0 %v3854
      %3900 = vmatprep.subr.mxu0 0.0
      %3901 = vmatpush1.msra.mxu0 %v3859
      %3902 = vmatprep.subr.mxu0 0.0
      %3903 = vmatpush1.msra.mxu0 %v3864
      %3904 = vmatprep.subr.mxu0 0.0
      %3905 = vmatpush1.msra.mxu0 %v3869
      %3906 = vmatprep.subr.mxu0 0.0
      %3907 = vmatpush1.msra.mxu0 %v3874
      %3908 = vmatprep.subr.mxu0 0.0
      %3909 = vmatpush1.msra.mxu0 %v3879
      %3910 = vmatprep.subr.mxu0 0.0
      %3911 = vmatpush1.msra.mxu0 0.0
      %3912 = vmatprep.subr.mxu0 0.0
      %3913 = vmatpush1.msra.mxu0 0.0
      %3914 = vmatprep.subr.mxu0 0.0
      %3915 = vmatpush1.msra.mxu0 0.0
      %3916 = vmatprep.subr.mxu0 0.0
      %3917 = vmatpush1.msra.mxu0 0.0
      %3918 = vmatprep.subr.mxu0 0.0
      %3919 = vmatpush1.msra.mxu0 0.0
      %3920 = vmatprep.subr.mxu0 0.0
      %3921 = vmatpush1.msra.mxu0 0.0
      %3922 = vmatprep.subr.mxu0 0.0
      %3923 = vmatpush1.msra.mxu0 0.0
      %3924 = vmatprep.subr.mxu0 0.0
      %3925 = vmatpush1.msra.mxu0 0.0
      %3926 = vmatprep.subr.mxu0 0.0
      %3927 = vmatpush1.msra.mxu0 0.0
      %3928 = vmatprep.subr.mxu0 0.0
      %3929 = vmatpush1.msra.mxu0 0.0
      %3930 = vmatprep.subr.mxu0 0.0
      %3931 = vmatpush1.msra.mxu0 0.0
      %3932 = vmatprep.subr.mxu0 0.0
      %3933 = vmatpush1.msra.mxu0 0.0
      %3934 = vmatprep.subr.mxu0 0.0
      %3935 = vmatpush1.msra.mxu0 0.0
      %3936 = vmatprep.subr.mxu0 0.0
      %3937 = vmatpush1.msra.mxu0 0.0
      %3938 = vmatprep.subr.mxu0 0.0
      %3939 = vmatpush1.msra.mxu0 0.0
      %3940 = vmatprep.subr.mxu0 0.0
      %3941 = vmatpush1.msra.mxu0 0.0
      %3942 = vmatprep.subr.mxu0 0.0
      %3943 = vmatpush1.msra.mxu0 0.0
      %3944 = vmatprep.subr.mxu0 0.0
      %3945 = vmatpush1.msra.mxu0 0.0
      %3946 = vmatprep.subr.mxu0 0.0
      %3947 = vmatpush1.msra.mxu0 0.0
      %3948 = vmatprep.subr.mxu0 0.0
      %3949 = vmatpush1.msra.mxu0 0.0
      %3950 = vmatprep.subr.mxu0 0.0
      %3951 = vmatpush1.msra.mxu0 0.0
      %3952 = vmatprep.subr.mxu0 0.0
      %3953 = vmatpush1.msra.mxu0 0.0
      %3954 = vmatprep.subr.mxu0 0.0
      %3955 = vmatpush1.msra.mxu0 0.0
      %3956 = vmatprep.mubr.f32.mxu0 0.0
      %3957 = vmatmul.mubr.f32.gmra.mrb[0].mxu0 %v3890
      %v3958 = vpop.f32.mrb[0].mxu0
      %v3959 = vadd.f32 %v3887, %v3958
      %v3960 = vpop.f32.mrb[0].mxu0
      %3961 = vdwg.mxu0
      %vm3962 = vcmask 9216
      %3963 = vst.msk [vmem:[%s519] sm:$0x3] %vm3962, %v3959
      %p3964 = scmp.lt.s32.totalorder %s27, 1
      %s3965 = scalar_select %p3964, %s27, 1
      %s3966 = smul.addr %s3965, 2
      %s3967 = scalar_lea.vmem %s16, %s3966
      // Predicated region
      $region85: #{a_call__.1} parent=83 // pred_check
        %p3968 = pneg %p386
      $region86: #{a_call__.1} parent=83 // pred_check_branch
        %3970 = sbr.rel (%p3968) target = $region88
      $region87: #{a_call__.1} parent=83 // pred_region
        _
      $region88: #{a_call__.1} parent=83 // pred_fallthru
        _
    $region84: #{a_call__.1} parent=5 // pred_fallthru
      _
    %p3971 = scmp.le.s32.totalorder 2, %s22
    // Predicated region
    $region89: #{a_call__.1} parent=5 // pred_check
      %p3972 = pneg %p3971
    $region90: #{a_call__.1} parent=5 // pred_check_branch
      %3974 = sbr.rel (%p3972) target = $region92
    $region91: #{a_call__.1} parent=5 // pred_region
      %s3975 = ssub.s32 %s22, 2
      // Predicated region
      $region93: #{a_call__.1} parent=91 // pred_check
        %p3976 = pneg %p392
      $region94: #{a_call__.1} parent=91 // pred_check_branch
        %3978 = sbr.rel (%p3976) target = $region96
      $region95: #{a_call__.1} parent=91 // pred_region
        %p3979 = scmp.lt.s32.totalorder %s28, 1
        %s3980 = scalar_select %p3979, %s28, 1
        %s3981 = smul.addr %s3980, 2
        %s3982 = scalar_lea.vmem %s16, %s3981
      $region96: #{a_call__.1} parent=91 // pred_fallthru
        _
    $region92: #{a_call__.1} parent=5 // pred_fallthru
      _
  $region6: #{a_call__.1} parent=0 // loop_footer
    %s26 = sadd.s32 1, %s22
  $region7: #{a_call__.1} parent=0 // loop_footer_branch
    %21 = sbr.rel target = $region3
  $region8: #{a_call__.1} parent=0 // loop_exit
    _

</llo_original>
